<compile_context>
chip_gen: v6e
topology: v6e:2x2x1
jax: 0.10.0
libtpu: 0.0.40
codegen_flags: <defaults>
</compile_context>

<pallas_src>
import functools

import jax
import jax.numpy as jnp
import numpy as np
from jax import lax
from jax.experimental import pallas as pl
from jax.experimental.pallas import tpu as pltpu

# ------------- config (mirrors cfg.MODEL.ROI_HEADS / cfg.MODEL.ROI_PVNET_HEAD) ----
NUM_CLASSES = 4           # cfg.MODEL.ROI_HEADS.NUM_CLASSES
NUM_KEYPOINTS = 8         # -> vertex channels = 2 * 8 = 16
CONV_HEAD_DIM = 32        # conv_dims
NUM_STACKED_CONVS = 2     # num_conv
NORM = ""                 # no norm -> conv bias=True
UP_SCALE = 2              # bilinear scale factor
DECONV_KERNEL = 4         # transpose-conv kernel (stride 2, pad 1)
CLS_AGNOSTIC_MASK = False # -> mask channels = NUM_CLASSES
INPUT_CHANNELS = 4

N, H, W = 2, 16, 16       # small example shapes

CFP = 32                  # fused mask+vertex head width padded 20 -> 32
                          # (4 phases * 32 = 128 lanes = one vreg)

# ConvTranspose2d(k=4, s=2, p=1) tap table.  For output-row parity rh (resp.
# col parity rw), the contributing (kernel index, offset into the 1-px
# zero-padded feature map) pairs:  P[rh][i] = sum_{(k, off)} xp[i + off] @ W[k].
_TAPS = {0: ((1, 1), (3, 0)), 1: ((0, 2), (2, 1))}


# ----------------------------------------------------------------------------------
# Pallas kernel: one image per grid step.  Output lane layout (512 lanes):
#   out[0, i, j, b*128 + a*32 + c] = bilinear(deconv(conv(x)))[4*i + a, 4*j + b, c]
# with c < 20 the fused (mask | vertex) channel; c >= 20 is zero padding.
# ----------------------------------------------------------------------------------
def _head_kernel(p1_ref, *refs, num_conv, cfp):
    conv_refs = refs[:2 * num_conv]
    wd_ref, bd_ref, out_ref = refs[2 * num_conv:]
    h, w = out_ref.shape[1], out_ref.shape[2]

    def im2col3x3(t):
        # t: [h, w, c] (bf16) -> [h*w, 9c] (bf16), zero-padded 3x3 taps.
        hh, ww, c = t.shape
        zr = jnp.zeros((1, ww, c), t.dtype)
        tp = jnp.concatenate([zr, t, zr], axis=0)             # [h+2, w, c]
        zc = jnp.zeros((hh + 2, 1, c), t.dtype)
        tp = jnp.concatenate([zc, tp, zc], axis=1)            # [h+2, w+2, c]
        return jnp.concatenate(
            [tp[kh:kh + hh, kw:kw + ww, :] for kh in range(3) for kw in range(3)],
            axis=-1).reshape(hh * ww, 9 * c)

    # -------- stacked 3x3 conv + bias + ReLU: one MXU matmul per layer --------
    # Activations are carried in bf16 between layers (f32 accumulation + f32
    # bias/ReLU), so all pad/slice/concat traffic is half width.
    x = None
    patch = p1_ref[0]                                          # [H*W, 9*Cin] bf16
    for k in range(num_conv):
        w_ref, b_ref = conv_refs[2 * k], conv_refs[2 * k + 1]
        if k > 0:
            patch = im2col3x3(x)
        acc = jnp.dot(patch, w_ref[...], preferred_element_type=jnp.float32)
        cout = w_ref.shape[-1]
        x = jnp.maximum(acc + b_ref[...], 0.0).astype(jnp.bfloat16).reshape(h, w, cout)

    # -------- fused mask+vertex deconv: ONE matmul over the full 3x3 im2col ---
    # Lane blocks of d (each cfp=32 wide): [P00 | P01 | P10 | P11]  (rh*2+rw).
    c2, c4 = 2 * cfp, 4 * cfp
    d = (jnp.dot(im2col3x3(x), wd_ref[...], preferred_element_type=jnp.float32)
         + bd_ref[...]).reshape(h, w, c4)                      # [H, W, 128] f32

    # -------- 2x bilinear (align_corners=False): dense 0.75/0.25 blends -------
    d0 = d[:, :, :c2]                                          # [P00 | P01]  (rh=0)
    d1 = d[:, :, c2:]                                          # [P10 | P11]  (rh=1)

    # rows a=1,2: ONE dense 128-lane blend; the P0<->P1 partner swap is a
    # 64-lane rotation on the (otherwise idle) XLU.
    m12 = 0.75 * d + 0.25 * pltpu.roll(d, shift=c2, axis=2)    # [Q1rw0|Q1rw1|Q2rw0|Q2rw1]
    # rows a=0,3: edge-clamped +/-1 row shifts (outer-dim concats, no lane work).
    q0 = 0.75 * d0 + 0.25 * jnp.concatenate([d0[0:1], d1[:h - 1]], axis=0)
    q3 = 0.75 * d1 + 0.25 * jnp.concatenate([d0[1:], d1[h - 1:]], axis=0)

    # repack rw-major (32-aligned lane concat):
    #   r0 = [Q0|Q1|Q2|Q3] @ rw=0 ,  r1 = [Q0|Q1|Q2|Q3] @ rw=1
    r0 = jnp.concatenate([q0[..., :cfp], m12[..., :cfp],
                          m12[..., c2:c2 + cfp], q3[..., :cfp]], axis=-1)
    r1 = jnp.concatenate([q0[..., cfp:], m12[..., cfp:c2],
                          m12[..., c2 + cfp:], q3[..., cfp:]], axis=-1)

    # column pass: four fully dense 128-lane blends (+ edge-clamped col shifts).
    r1_dn = jnp.concatenate([r0[:, 0:1], r1[:, :w - 1]], axis=1)
    r0_up = jnp.concatenate([r0[:, 1:], r1[:, w - 1:]], axis=1)

    # single lane-dense 512-lane store (4 x 128, vreg-aligned concat).
    out_ref[0] = jnp.concatenate(
        [0.75 * r0 + 0.25 * r1_dn,     # b = 0
         0.75 * r0 + 0.25 * r1,        # b = 1
         0.25 * r0 + 0.75 * r1,        # b = 2
         0.75 * r1 + 0.25 * r0_up],    # b = 3
        axis=-1).astype(out_ref.dtype)


# ----------------------------------------------------------------------------------
# Wrapper: parameter re-layout, conv1 im2col, pallas_call, output interleave glue.
# ----------------------------------------------------------------------------------
def pvnet_head_forward(x_nchw, params):
    num_conv = len(params["convs"])
    assert num_conv >= 1, "num_conv == 0 variant not supported by this kernel"
    n, c_in, h, w = x_nchw.shape
    x = jnp.transpose(x_nchw, (0, 2, 3, 1)).astype(jnp.float32)          # NHWC

    # conv1 im2col precomputed in XLA (Cin=4 would be ~3% lane utilization
    # inside the kernel); fed to the kernel in bf16 to halve DMA bytes.
    xp = jnp.pad(x, ((0, 0), (1, 1), (1, 1), (0, 0)))
    p1 = jnp.concatenate(
        [xp[:, kh:kh + h, kw:kw + w, :] for kh in range(3) for kw in range(3)],
        axis=-1).reshape(n, h * w, 9 * c_in).astype(jnp.bfloat16)

    kernel_args = [p1]
    in_specs = [pl.BlockSpec((1, h * w, 9 * c_in), lambda i: (i, 0, 0))]

    cin = c_in
    for cw, cb in params["convs"]:                                       # cw: [Cout,Cin,3,3]
        cout = cw.shape[0]
        wmat = jnp.transpose(cw, (2, 3, 1, 0)).reshape(9 * cin, cout)
        kernel_args.append(wmat.astype(jnp.bfloat16))
        kernel_args.append(cb.reshape(1, cout).astype(jnp.float32))
        in_specs.append(pl.BlockSpec((9 * cin, cout), lambda i: (0, 0)))
        in_specs.append(pl.BlockSpec((1, cout), lambda i: (0, 0)))
        cin = cout
    cd = cin

    # ---- fuse mask + vertex deconv heads (pad 20 -> 32 channels) AND fuse the
    # four output phases into one [9*Cd, 4*CFP] weight matrix: the row block of
    # im2col tap (ro, co) in the column block of phase (rh, rw) is wk[kr, kc]
    # when (kr, ro) in _TAPS[rh] and (kc, co) in _TAPS[rw], else zero.
    dwm, dbm = params["mask"]                                            # [Cd, cm, 4, 4]
    dwv, dbv = params["vertex"]                                          # [Cd, cv, 4, 4]
    cm, cv = dwm.shape[1], dwv.shape[1]
    cf = cm + cv
    assert cf <= CFP
    wk = jnp.transpose(jnp.concatenate([dwm, dwv], axis=1), (2, 3, 0, 1))  # [4,4,Cd,Cf]
    bvec = jnp.concatenate([dbm, dbv], axis=0)                             # [Cf]
    wd = jnp.zeros((9 * cd, 4 * CFP), jnp.float32)
    bd = jnp.zeros((4 * CFP,), jnp.float32)
    for rh in (0, 1):
        for rw in (0, 1):
            p = rh * 2 + rw
            for (kr, ro) in _TAPS[rh]:
                for (kc, co) in _TAPS[rw]:
                    t = ro * 3 + co
                    wd = wd.at[t * cd:(t + 1) * cd, p * CFP:p * CFP + cf].set(wk[kr, kc])
            bd = bd.at[p * CFP:p * CFP + cf].set(bvec)
    kernel_args += [wd.astype(jnp.bfloat16), bd.reshape(1, 4 * CFP).astype(jnp.float32)]
    in_specs += [pl.BlockSpec((9 * cd, 4 * CFP), lambda i: (0, 0)),
                 pl.BlockSpec((1, 4 * CFP), lambda i: (0, 0))]

    c_out = 16 * CFP                                                     # 512 lanes
    grid_spec = pltpu.PrefetchScalarGridSpec(
        num_scalar_prefetch=0,
        grid=(n,),
        in_specs=in_specs,
        out_specs=pl.BlockSpec((1, h, w, c_out), lambda i: (i, 0, 0, 0)),
    )

    ph = pl.pallas_call(
        functools.partial(_head_kernel, num_conv=num_conv, cfp=CFP),
        out_shape=jax.ShapeDtypeStruct((n, h, w, c_out), jnp.float32),
        grid_spec=grid_spec,
        compiler_params=pltpu.CompilerParams(
            dimension_semantics=("parallel",)),   # batch shards across v7x's 2 TCs
    )(*kernel_args)

    # interleave the 4x4 output phases (lanes are b-major, a-minor, 32ch) and
    # split the fused heads — plain-XLA layout glue.
    y = ph.reshape(n, h, w, 4, 4, CFP)                        # [n,i,j,b,a,c]
    y = jnp.transpose(y, (0, 1, 4, 2, 3, 5)).reshape(n, 4 * h, 4 * w, CFP)
    y = jnp.transpose(y, (0, 3, 1, 2))                        # NCHW
    return {"mask": y[:, :cm], "vertex": y[:, cm:cf]}


# ----------------------------------------------------------------------------------
# Deterministic parameter init (mirrors kaiming_normal_(fan_out, relu) + zero bias)
# ----------------------------------------------------------------------------------
def init_params(key):
    params = {"convs": []}
    cin = INPUT_CHANNELS
    keys = jax.random.split(key, NUM_STACKED_CONVS + 2)
    for k in range(NUM_STACKED_CONVS):
        fan_out = CONV_HEAD_DIM * 3 * 3
        std = (2.0 / fan_out) ** 0.5
        wk = std * jax.random.normal(keys[k], (CONV_HEAD_DIM, cin, 3, 3), jnp.float32)
        bk = jnp.zeros((CONV_HEAD_DIM,), jnp.float32)
        params["convs"].append((wk, bk))
        cin = CONV_HEAD_DIM
    num_mask = 1 if CLS_AGNOSTIC_MASK else NUM_CLASSES
    heads = (("mask", num_mask, keys[-2]), ("vertex", 2 * NUM_KEYPOINTS, keys[-1]))
    for name, cout, hk in heads:
        # ConvTranspose2d weight: [in_channels, out_channels, k, k];
        # PyTorch fan_out for this layout is in_channels * k * k.
        fan_out = cin * DECONV_KERNEL * DECONV_KERNEL
        std = (2.0 / fan_out) ** 0.5
        dw = std * jax.random.normal(hk, (cin, cout, DECONV_KERNEL, DECONV_KERNEL),
                                     jnp.float32)
        db = jnp.zeros((cout,), jnp.float32)
        params[name] = (dw, db)
    return params


# ----------------------------------------------------------------------------------
# Pure-JAX reference (XLA convs + explicit PyTorch-style bilinear) for verification
# ----------------------------------------------------------------------------------
def reference_forward(x_nchw, params):
    y = x_nchw
    for cw, cb in params["convs"]:
        y = lax.conv_general_dilated(
            y, cw, window_strides=(1, 1), padding=((1, 1), (1, 1)),
            dimension_numbers=("NCHW", "OIHW", "NCHW"),
            precision=lax.Precision.HIGHEST)
        y = jax.nn.relu(y + cb[None, :, None, None])

    def deconv(z, dw, db):
        out = lax.conv_general_dilated(
            z, jnp.flip(dw, (2, 3)), window_strides=(1, 1),
            padding=((2, 2), (2, 2)), lhs_dilation=(2, 2),
            dimension_numbers=("NCHW", "IOHW", "NCHW"),
            precision=lax.Precision.HIGHEST)
        return out + db[None, :, None, None]

    def bilinear_x2(z):
        def src_idx(size):
            dst = jnp.arange(2 * size, dtype=jnp.float32)
            src = jnp.maximum((dst + 0.5) / 2.0 - 0.5, 0.0)
            i0 = jnp.floor(src).astype(jnp.int32)
            i1 = jnp.minimum(i0 + 1, size - 1)
            w1 = src - i0.astype(jnp.float32)
            return i0, i1, w1
        _, _, hh, ww = z.shape
        i0, i1, w1 = src_idx(hh)
        z = (z[:, :, i0, :] * (1.0 - w1)[None, None, :, None]
             + z[:, :, i1, :] * w1[None, None, :, None])
        j0, j1, v1 = src_idx(ww)
        z = (z[:, :, :, j0] * (1.0 - v1)[None, None, None, :]
             + z[:, :, :, j1] * v1[None, None, None, :])
        return z

    return {k: bilinear_x2(deconv(y, *params[k])) for k in ("mask", "vertex")}


if __name__ == "__main__":
    key = jax.random.PRNGKey(0)
    pkey, xkey = jax.random.split(key)
    params = init_params(pkey)
    x = jax.random.normal(xkey, (N, INPUT_CHANNELS, H, W), jnp.float32)

    out = jax.jit(pvnet_head_forward)(x, params)
    jax.block_until_ready(out)

    ref = reference_forward(x, params)
    # Tolerance sized for the bf16 MXU inputs (f32 accumulation); measured error
    # is a few 1e-3 at these magnitudes.
    for k in ("mask", "vertex"):
        assert out[k].shape == ref[k].shape, (k, out[k].shape, ref[k].shape)
        np.testing.assert_allclose(np.asarray(out[k]), np.asarray(ref[k]),
                                   rtol=2e-2, atol=2e-2)

    print("KERNEL_OK")
</pallas_src>

<mosaic_0001>
module attributes {stable_mosaic.version = 11 : i64} {
  func.func @_head_kernel(%arg0: i32, %arg1: memref<1x256x36xbf16, #tpu.memory_space<vmem>>, %arg2: memref<36x32xbf16, #tpu.memory_space<vmem>>, %arg3: memref<1x32xf32, #tpu.memory_space<vmem>>, %arg4: memref<288x32xbf16, #tpu.memory_space<vmem>>, %arg5: memref<1x32xf32, #tpu.memory_space<vmem>>, %arg6: memref<288x128xbf16, #tpu.memory_space<vmem>>, %arg7: memref<1x128xf32, #tpu.memory_space<vmem>>, %arg8: memref<1x16x16x512xf32, #tpu.memory_space<vmem>>) attributes {dimension_semantics = [#tpu.dimension_semantics<parallel>], iteration_bounds = array<i64: 2>, scalar_prefetch = 0 : i64, scratch_operands = 0 : i64, tpu.core_type = #tpu.core_type<tc>, window_params = [{transform_indices = @transform_0, window_bounds = array<i64: 1, 256, 36>}, {pipeline_mode = #tpu.pipeline_mode<synchronous>, transform_indices = @transform_1, window_bounds = array<i64: 36, 32>}, {pipeline_mode = #tpu.pipeline_mode<synchronous>, transform_indices = @transform_2, window_bounds = array<i64: 1, 32>}, {pipeline_mode = #tpu.pipeline_mode<synchronous>, transform_indices = @transform_3, window_bounds = array<i64: 288, 32>}, {pipeline_mode = #tpu.pipeline_mode<synchronous>, transform_indices = @transform_4, window_bounds = array<i64: 1, 32>}, {pipeline_mode = #tpu.pipeline_mode<synchronous>, transform_indices = @transform_5, window_bounds = array<i64: 288, 128>}, {pipeline_mode = #tpu.pipeline_mode<synchronous>, transform_indices = @transform_6, window_bounds = array<i64: 1, 128>}, {transform_indices = @transform_7, window_bounds = array<i64: 1, 16, 16, 512>}]} {
    %c0 = arith.constant 0 : index
    %c0_0 = arith.constant 0 : index
    %c0_1 = arith.constant 0 : index
    %0 = vector.load %arg1[%c0, %c0_0, %c0_1] : memref<1x256x36xbf16, #tpu.memory_space<vmem>>, vector<1x256x36xbf16>
    %1 = vector.shape_cast %0 : vector<1x256x36xbf16> to vector<256x36xbf16>
    %c0_2 = arith.constant 0 : index
    %c0_3 = arith.constant 0 : index
    %2 = vector.load %arg2[%c0_2, %c0_3] : memref<36x32xbf16, #tpu.memory_space<vmem>>, vector<36x32xbf16>
    %cst = arith.constant dense<0.000000e+00> : vector<256x32xf32>
    %3 = tpu.matmul %1, %2, %cst {dimension_numbers = #tpu.dot_dimension_numbers<[1], [0], [0], [1], [0, 0, 1, 1], [], []>} : vector<256x36xbf16>, vector<36x32xbf16>, vector<256x32xf32> -> vector<256x32xf32>
    %c0_4 = arith.constant 0 : index
    %c0_5 = arith.constant 0 : index
    %4 = vector.load %arg3[%c0_4, %c0_5] : memref<1x32xf32, #tpu.memory_space<vmem>>, vector<1x32xf32>
    %5 = vector.broadcast %4 : vector<1x32xf32> to vector<256x32xf32>
    %6 = arith.addf %3, %5 : vector<256x32xf32>
    %cst_6 = arith.constant 0.000000e+00 : f32
    %7 = vector.broadcast %cst_6 : f32 to vector<256x32xf32>
    %8 = arith.maximumf %6, %7 : vector<256x32xf32>
    %9 = arith.truncf %8 : vector<256x32xf32> to vector<256x32xbf16>
    %10 = vector.shape_cast %9 : vector<256x32xbf16> to vector<16x16x32xbf16>
    %cst_7 = arith.constant 0.000000e+00 : bf16
    %11 = vector.broadcast %cst_7 : bf16 to vector<1x16x32xbf16>
    %12 = tpu.concatenate %11, %10, %11 in 0 : vector<1x16x32xbf16>, vector<16x16x32xbf16>, vector<1x16x32xbf16> -> vector<18x16x32xbf16>
    %cst_8 = arith.constant 0.000000e+00 : bf16
    %13 = vector.broadcast %cst_8 : bf16 to vector<18x1x32xbf16>
    %14 = tpu.concatenate %13, %12, %13 in 1 : vector<18x1x32xbf16>, vector<18x16x32xbf16>, vector<18x1x32xbf16> -> vector<18x18x32xbf16>
    %15 = vector.extract_strided_slice %14 {offsets = [0, 0, 0], sizes = [16, 16, 32], strides = [1, 1, 1]} : vector<18x18x32xbf16> to vector<16x16x32xbf16>
    %16 = vector.extract_strided_slice %14 {offsets = [0, 1, 0], sizes = [16, 16, 32], strides = [1, 1, 1]} : vector<18x18x32xbf16> to vector<16x16x32xbf16>
    %17 = vector.extract_strided_slice %14 {offsets = [0, 2, 0], sizes = [16, 16, 32], strides = [1, 1, 1]} : vector<18x18x32xbf16> to vector<16x16x32xbf16>
    %18 = vector.extract_strided_slice %14 {offsets = [1, 0, 0], sizes = [16, 16, 32], strides = [1, 1, 1]} : vector<18x18x32xbf16> to vector<16x16x32xbf16>
    %19 = vector.extract_strided_slice %14 {offsets = [1, 1, 0], sizes = [16, 16, 32], strides = [1, 1, 1]} : vector<18x18x32xbf16> to vector<16x16x32xbf16>
    %20 = vector.extract_strided_slice %14 {offsets = [1, 2, 0], sizes = [16, 16, 32], strides = [1, 1, 1]} : vector<18x18x32xbf16> to vector<16x16x32xbf16>
    %21 = vector.extract_strided_slice %14 {offsets = [2, 0, 0], sizes = [16, 16, 32], strides = [1, 1, 1]} : vector<18x18x32xbf16> to vector<16x16x32xbf16>
    %22 = vector.extract_strided_slice %14 {offsets = [2, 1, 0], sizes = [16, 16, 32], strides = [1, 1, 1]} : vector<18x18x32xbf16> to vector<16x16x32xbf16>
    %23 = vector.extract_strided_slice %14 {offsets = [2, 2, 0], sizes = [16, 16, 32], strides = [1, 1, 1]} : vector<18x18x32xbf16> to vector<16x16x32xbf16>
    %24 = tpu.concatenate %15, %16, %17, %18, %19, %20, %21, %22, %23 in 2 : vector<16x16x32xbf16>, vector<16x16x32xbf16>, vector<16x16x32xbf16>, vector<16x16x32xbf16>, vector<16x16x32xbf16>, vector<16x16x32xbf16>, vector<16x16x32xbf16>, vector<16x16x32xbf16>, vector<16x16x32xbf16> -> vector<16x16x288xbf16>
    %25 = vector.shape_cast %24 : vector<16x16x288xbf16> to vector<256x288xbf16>
    %c0_9 = arith.constant 0 : index
    %c0_10 = arith.constant 0 : index
    %26 = vector.load %arg4[%c0_9, %c0_10] : memref<288x32xbf16, #tpu.memory_space<vmem>>, vector<288x32xbf16>
    %cst_11 = arith.constant dense<0.000000e+00> : vector<256x32xf32>
    %27 = tpu.matmul %25, %26, %cst_11 {dimension_numbers = #tpu.dot_dimension_numbers<[1], [0], [0], [1], [0, 0, 1, 1], [], []>} : vector<256x288xbf16>, vector<288x32xbf16>, vector<256x32xf32> -> vector<256x32xf32>
    %c0_12 = arith.constant 0 : index
    %c0_13 = arith.constant 0 : index
    %28 = vector.load %arg5[%c0_12, %c0_13] : memref<1x32xf32, #tpu.memory_space<vmem>>, vector<1x32xf32>
    %29 = vector.broadcast %28 : vector<1x32xf32> to vector<256x32xf32>
    %30 = arith.addf %27, %29 : vector<256x32xf32>
    %cst_14 = arith.constant 0.000000e+00 : f32
    %31 = vector.broadcast %cst_14 : f32 to vector<256x32xf32>
    %32 = arith.maximumf %30, %31 : vector<256x32xf32>
    %33 = arith.truncf %32 : vector<256x32xf32> to vector<256x32xbf16>
    %34 = vector.shape_cast %33 : vector<256x32xbf16> to vector<16x16x32xbf16>
    %cst_15 = arith.constant 0.000000e+00 : bf16
    %35 = vector.broadcast %cst_15 : bf16 to vector<1x16x32xbf16>
    %36 = tpu.concatenate %35, %34, %35 in 0 : vector<1x16x32xbf16>, vector<16x16x32xbf16>, vector<1x16x32xbf16> -> vector<18x16x32xbf16>
    %cst_16 = arith.constant 0.000000e+00 : bf16
    %37 = vector.broadcast %cst_16 : bf16 to vector<18x1x32xbf16>
    %38 = tpu.concatenate %37, %36, %37 in 1 : vector<18x1x32xbf16>, vector<18x16x32xbf16>, vector<18x1x32xbf16> -> vector<18x18x32xbf16>
    %39 = vector.extract_strided_slice %38 {offsets = [0, 0, 0], sizes = [16, 16, 32], strides = [1, 1, 1]} : vector<18x18x32xbf16> to vector<16x16x32xbf16>
    %40 = vector.extract_strided_slice %38 {offsets = [0, 1, 0], sizes = [16, 16, 32], strides = [1, 1, 1]} : vector<18x18x32xbf16> to vector<16x16x32xbf16>
    %41 = vector.extract_strided_slice %38 {offsets = [0, 2, 0], sizes = [16, 16, 32], strides = [1, 1, 1]} : vector<18x18x32xbf16> to vector<16x16x32xbf16>
    %42 = vector.extract_strided_slice %38 {offsets = [1, 0, 0], sizes = [16, 16, 32], strides = [1, 1, 1]} : vector<18x18x32xbf16> to vector<16x16x32xbf16>
    %43 = vector.extract_strided_slice %38 {offsets = [1, 1, 0], sizes = [16, 16, 32], strides = [1, 1, 1]} : vector<18x18x32xbf16> to vector<16x16x32xbf16>
    %44 = vector.extract_strided_slice %38 {offsets = [1, 2, 0], sizes = [16, 16, 32], strides = [1, 1, 1]} : vector<18x18x32xbf16> to vector<16x16x32xbf16>
    %45 = vector.extract_strided_slice %38 {offsets = [2, 0, 0], sizes = [16, 16, 32], strides = [1, 1, 1]} : vector<18x18x32xbf16> to vector<16x16x32xbf16>
    %46 = vector.extract_strided_slice %38 {offsets = [2, 1, 0], sizes = [16, 16, 32], strides = [1, 1, 1]} : vector<18x18x32xbf16> to vector<16x16x32xbf16>
    %47 = vector.extract_strided_slice %38 {offsets = [2, 2, 0], sizes = [16, 16, 32], strides = [1, 1, 1]} : vector<18x18x32xbf16> to vector<16x16x32xbf16>
    %48 = tpu.concatenate %39, %40, %41, %42, %43, %44, %45, %46, %47 in 2 : vector<16x16x32xbf16>, vector<16x16x32xbf16>, vector<16x16x32xbf16>, vector<16x16x32xbf16>, vector<16x16x32xbf16>, vector<16x16x32xbf16>, vector<16x16x32xbf16>, vector<16x16x32xbf16>, vector<16x16x32xbf16> -> vector<16x16x288xbf16>
    %49 = vector.shape_cast %48 : vector<16x16x288xbf16> to vector<256x288xbf16>
    %c0_17 = arith.constant 0 : index
    %c0_18 = arith.constant 0 : index
    %50 = vector.load %arg6[%c0_17, %c0_18] : memref<288x128xbf16, #tpu.memory_space<vmem>>, vector<288x128xbf16>
    %cst_19 = arith.constant dense<0.000000e+00> : vector<256x128xf32>
    %51 = tpu.matmul %49, %50, %cst_19 {dimension_numbers = #tpu.dot_dimension_numbers<[1], [0], [0], [1], [0, 0, 1, 1], [], []>} : vector<256x288xbf16>, vector<288x128xbf16>, vector<256x128xf32> -> vector<256x128xf32>
    %c0_20 = arith.constant 0 : index
    %c0_21 = arith.constant 0 : index
    %52 = vector.load %arg7[%c0_20, %c0_21] : memref<1x128xf32, #tpu.memory_space<vmem>>, vector<1x128xf32>
    %53 = vector.broadcast %52 : vector<1x128xf32> to vector<256x128xf32>
    %54 = arith.addf %51, %53 : vector<256x128xf32>
    %55 = vector.shape_cast %54 : vector<256x128xf32> to vector<16x16x128xf32>
    %56 = vector.extract_strided_slice %55 {offsets = [0, 0, 0], sizes = [16, 16, 64], strides = [1, 1, 1]} : vector<16x16x128xf32> to vector<16x16x64xf32>
    %57 = vector.extract_strided_slice %55 {offsets = [0, 0, 64], sizes = [16, 16, 64], strides = [1, 1, 1]} : vector<16x16x128xf32> to vector<16x16x64xf32>
    %cst_22 = arith.constant 7.500000e-01 : f32
    %58 = vector.broadcast %cst_22 : f32 to vector<16x16x128xf32>
    %59 = arith.mulf %58, %55 : vector<16x16x128xf32>
    %c64_i32 = arith.constant 64 : i32
    %60 = tpu.dynamic_rotate %55 by %c64_i32 dim 2 : vector<16x16x128xf32>, i32 -> vector<16x16x128xf32>
    %cst_23 = arith.constant 2.500000e-01 : f32
    %61 = vector.broadcast %cst_23 : f32 to vector<16x16x128xf32>
    %62 = arith.mulf %61, %60 : vector<16x16x128xf32>
    %63 = arith.addf %59, %62 : vector<16x16x128xf32>
    %cst_24 = arith.constant 7.500000e-01 : f32
    %64 = vector.broadcast %cst_24 : f32 to vector<16x16x64xf32>
    %65 = arith.mulf %64, %56 : vector<16x16x64xf32>
    %66 = vector.extract_strided_slice %56 {offsets = [0, 0, 0], sizes = [1, 16, 64], strides = [1, 1, 1]} : vector<16x16x64xf32> to vector<1x16x64xf32>
    %67 = vector.extract_strided_slice %57 {offsets = [0, 0, 0], sizes = [15, 16, 64], strides = [1, 1, 1]} : vector<16x16x64xf32> to vector<15x16x64xf32>
    %68 = tpu.concatenate %66, %67 in 0 : vector<1x16x64xf32>, vector<15x16x64xf32> -> vector<16x16x64xf32>
    %cst_25 = arith.constant 2.500000e-01 : f32
    %69 = vector.broadcast %cst_25 : f32 to vector<16x16x64xf32>
    %70 = arith.mulf %69, %68 : vector<16x16x64xf32>
    %71 = arith.addf %65, %70 : vector<16x16x64xf32>
    %cst_26 = arith.constant 7.500000e-01 : f32
    %72 = vector.broadcast %cst_26 : f32 to vector<16x16x64xf32>
    %73 = arith.mulf %72, %57 : vector<16x16x64xf32>
    %74 = vector.extract_strided_slice %56 {offsets = [1, 0, 0], sizes = [15, 16, 64], strides = [1, 1, 1]} : vector<16x16x64xf32> to vector<15x16x64xf32>
    %75 = vector.extract_strided_slice %57 {offsets = [15, 0, 0], sizes = [1, 16, 64], strides = [1, 1, 1]} : vector<16x16x64xf32> to vector<1x16x64xf32>
    %76 = tpu.concatenate %74, %75 in 0 : vector<15x16x64xf32>, vector<1x16x64xf32> -> vector<16x16x64xf32>
    %cst_27 = arith.constant 2.500000e-01 : f32
    %77 = vector.broadcast %cst_27 : f32 to vector<16x16x64xf32>
    %78 = arith.mulf %77, %76 : vector<16x16x64xf32>
    %79 = arith.addf %73, %78 : vector<16x16x64xf32>
    %80 = vector.extract_strided_slice %71 {offsets = [0, 0, 0], sizes = [16, 16, 32], strides = [1, 1, 1]} : vector<16x16x64xf32> to vector<16x16x32xf32>
    %81 = vector.extract_strided_slice %63 {offsets = [0, 0, 0], sizes = [16, 16, 32], strides = [1, 1, 1]} : vector<16x16x128xf32> to vector<16x16x32xf32>
    %82 = vector.extract_strided_slice %63 {offsets = [0, 0, 64], sizes = [16, 16, 32], strides = [1, 1, 1]} : vector<16x16x128xf32> to vector<16x16x32xf32>
    %83 = vector.extract_strided_slice %79 {offsets = [0, 0, 0], sizes = [16, 16, 32], strides = [1, 1, 1]} : vector<16x16x64xf32> to vector<16x16x32xf32>
    %84 = tpu.concatenate %80, %81, %82, %83 in 2 : vector<16x16x32xf32>, vector<16x16x32xf32>, vector<16x16x32xf32>, vector<16x16x32xf32> -> vector<16x16x128xf32>
    %85 = vector.extract_strided_slice %71 {offsets = [0, 0, 32], sizes = [16, 16, 32], strides = [1, 1, 1]} : vector<16x16x64xf32> to vector<16x16x32xf32>
    %86 = vector.extract_strided_slice %63 {offsets = [0, 0, 32], sizes = [16, 16, 32], strides = [1, 1, 1]} : vector<16x16x128xf32> to vector<16x16x32xf32>
    %87 = vector.extract_strided_slice %63 {offsets = [0, 0, 96], sizes = [16, 16, 32], strides = [1, 1, 1]} : vector<16x16x128xf32> to vector<16x16x32xf32>
    %88 = vector.extract_strided_slice %79 {offsets = [0, 0, 32], sizes = [16, 16, 32], strides = [1, 1, 1]} : vector<16x16x64xf32> to vector<16x16x32xf32>
    %89 = tpu.concatenate %85, %86, %87, %88 in 2 : vector<16x16x32xf32>, vector<16x16x32xf32>, vector<16x16x32xf32>, vector<16x16x32xf32> -> vector<16x16x128xf32>
    %90 = vector.extract_strided_slice %84 {offsets = [0, 0, 0], sizes = [16, 1, 128], strides = [1, 1, 1]} : vector<16x16x128xf32> to vector<16x1x128xf32>
    %91 = vector.extract_strided_slice %89 {offsets = [0, 0, 0], sizes = [16, 15, 128], strides = [1, 1, 1]} : vector<16x16x128xf32> to vector<16x15x128xf32>
    %92 = tpu.concatenate %90, %91 in 1 : vector<16x1x128xf32>, vector<16x15x128xf32> -> vector<16x16x128xf32>
    %93 = vector.extract_strided_slice %84 {offsets = [0, 1, 0], sizes = [16, 15, 128], strides = [1, 1, 1]} : vector<16x16x128xf32> to vector<16x15x128xf32>
    %94 = vector.extract_strided_slice %89 {offsets = [0, 15, 0], sizes = [16, 1, 128], strides = [1, 1, 1]} : vector<16x16x128xf32> to vector<16x1x128xf32>
    %95 = tpu.concatenate %93, %94 in 1 : vector<16x15x128xf32>, vector<16x1x128xf32> -> vector<16x16x128xf32>
    %cst_28 = arith.constant 7.500000e-01 : f32
    %96 = vector.broadcast %cst_28 : f32 to vector<16x16x128xf32>
    %97 = arith.mulf %96, %84 : vector<16x16x128xf32>
    %cst_29 = arith.constant 2.500000e-01 : f32
    %98 = vector.broadcast %cst_29 : f32 to vector<16x16x128xf32>
    %99 = arith.mulf %98, %92 : vector<16x16x128xf32>
    %100 = arith.addf %97, %99 : vector<16x16x128xf32>
    %cst_30 = arith.constant 7.500000e-01 : f32
    %101 = vector.broadcast %cst_30 : f32 to vector<16x16x128xf32>
    %102 = arith.mulf %101, %84 : vector<16x16x128xf32>
    %cst_31 = arith.constant 2.500000e-01 : f32
    %103 = vector.broadcast %cst_31 : f32 to vector<16x16x128xf32>
    %104 = arith.mulf %103, %89 : vector<16x16x128xf32>
    %105 = arith.addf %102, %104 : vector<16x16x128xf32>
    %cst_32 = arith.constant 2.500000e-01 : f32
    %106 = vector.broadcast %cst_32 : f32 to vector<16x16x128xf32>
    %107 = arith.mulf %106, %84 : vector<16x16x128xf32>
    %cst_33 = arith.constant 7.500000e-01 : f32
    %108 = vector.broadcast %cst_33 : f32 to vector<16x16x128xf32>
    %109 = arith.mulf %108, %89 : vector<16x16x128xf32>
    %110 = arith.addf %107, %109 : vector<16x16x128xf32>
    %cst_34 = arith.constant 7.500000e-01 : f32
    %111 = vector.broadcast %cst_34 : f32 to vector<16x16x128xf32>
    %112 = arith.mulf %111, %89 : vector<16x16x128xf32>
    %cst_35 = arith.constant 2.500000e-01 : f32
    %113 = vector.broadcast %cst_35 : f32 to vector<16x16x128xf32>
    %114 = arith.mulf %113, %95 : vector<16x16x128xf32>
    %115 = arith.addf %112, %114 : vector<16x16x128xf32>
    %116 = tpu.concatenate %100, %105, %110, %115 in 2 : vector<16x16x128xf32>, vector<16x16x128xf32>, vector<16x16x128xf32>, vector<16x16x128xf32> -> vector<16x16x512xf32>
    %c0_36 = arith.constant 0 : index
    %c0_37 = arith.constant 0 : index
    %c0_38 = arith.constant 0 : index
    %c0_39 = arith.constant 0 : index
    %117 = vector.load %arg8[%c0_36, %c0_37, %c0_38, %c0_39] : memref<1x16x16x512xf32, #tpu.memory_space<vmem>>, vector<1x16x16x512xf32>
    %118 = vector.shape_cast %117 : vector<1x16x16x512xf32> to vector<16x16x512xf32>
    %119 = vector.shape_cast %116 : vector<16x16x512xf32> to vector<1x16x16x512xf32>
    tpu.vector_store %arg8[%c0_36, %c0_37, %c0_38, %c0_39], %119 {strides = array<i32>} : memref<1x16x16x512xf32, #tpu.memory_space<vmem>>, vector<1x16x16x512xf32>,
    return
  }
  func.func @transform_0(%arg0: i32) -> (i32, i32, i32) {
    %c0_i32 = arith.constant 0 : i32
    %c0_i32_0 = arith.constant 0 : i32
    %c0_i32_1 = arith.constant 0 : i32
    return %arg0, %c0_i32, %c0_i32_0 : i32, i32, i32
  }
  func.func @transform_1(%arg0: i32) -> (i32, i32) {
    %c0_i32 = arith.constant 0 : i32
    %c0_i32_0 = arith.constant 0 : i32
    %c0_i32_1 = arith.constant 0 : i32
    return %c0_i32, %c0_i32_0 : i32, i32
  }
  func.func @transform_2(%arg0: i32) -> (i32, i32) {
    %c0_i32 = arith.constant 0 : i32
    %c0_i32_0 = arith.constant 0 : i32
    %c0_i32_1 = arith.constant 0 : i32
    return %c0_i32, %c0_i32_0 : i32, i32
  }
  func.func @transform_3(%arg0: i32) -> (i32, i32) {
    %c0_i32 = arith.constant 0 : i32
    %c0_i32_0 = arith.constant 0 : i32
    %c0_i32_1 = arith.constant 0 : i32
    return %c0_i32, %c0_i32_0 : i32, i32
  }
  func.func @transform_4(%arg0: i32) -> (i32, i32) {
    %c0_i32 = arith.constant 0 : i32
    %c0_i32_0 = arith.constant 0 : i32
    %c0_i32_1 = arith.constant 0 : i32
    return %c0_i32, %c0_i32_0 : i32, i32
  }
  func.func @transform_5(%arg0: i32) -> (i32, i32) {
    %c0_i32 = arith.constant 0 : i32
    %c0_i32_0 = arith.constant 0 : i32
    %c0_i32_1 = arith.constant 0 : i32
    return %c0_i32, %c0_i32_0 : i32, i32
  }
  func.func @transform_6(%arg0: i32) -> (i32, i32) {
    %c0_i32 = arith.constant 0 : i32
    %c0_i32_0 = arith.constant 0 : i32
    %c0_i32_1 = arith.constant 0 : i32
    return %c0_i32, %c0_i32_0 : i32, i32
  }
  func.func @transform_7(%arg0: i32) -> (i32, i32, i32, i32) {
    %c0_i32 = arith.constant 0 : i32
    %c0_i32_0 = arith.constant 0 : i32
    %c0_i32_1 = arith.constant 0 : i32
    %c0_i32_2 = arith.constant 0 : i32
    return %arg0, %c0_i32, %c0_i32_0, %c0_i32_1 : i32, i32, i32, i32
  }
}

</mosaic_0001>

<llo_original>
// kernel: pvnet_head_forward.1
$region0: #{pvnet_head_forward.1}
  #allocation0 [shape = 'u32[]', space=smem, size = 0x4, offset = 0x4, fixed_abs, tag = 'smem constant byte address 0x4 - core index']
  #allocation1 [shape = 'u32[144,128]{1,0:T(1,128)}', space=vmem, size = 0x12000, scoped, tag = 'internal scratch']
  %s0 = inlined_call_operand.vmem [shape: bf16[2,256,36], index: 0, kind: input, shape index: {}]
  %s1 = inlined_call_operand.vmem [shape: bf16[36,32], index: 1, kind: input, shape index: {}]
  %s2 = inlined_call_operand.vmem [shape: f32[1,32], index: 2, kind: input, shape index: {}]
  %s3 = inlined_call_operand.vmem [shape: bf16[288,32], index: 3, kind: input, shape index: {}]
  %s4 = inlined_call_operand.vmem [shape: f32[1,32], index: 4, kind: input, shape index: {}]
  %s5 = inlined_call_operand.vmem [shape: bf16[288,128], index: 5, kind: input, shape index: {}]
  %s6 = inlined_call_operand.vmem [shape: f32[1,128], index: 6, kind: input, shape index: {}]
  %s7 = inlined_call_operand.vmem [shape: f32[2,16,16,512], index: 7, kind: output, shape index: {}]
  %s8 = sld [smem:[#allocation0]]
  $region61: #{pvnet_head_forward.1} parent=0
    _
  %s10 = ssub.s32 1, %s8
  %s11 = scalar_select 0, %s10, %s8
  loop: start=0, step=1, limit=4
  $region2: #{pvnet_head_forward.1} parent=0 // loop_pre_header
    _
  $region3: #{pvnet_head_forward.1} parent=0 // loop_header
    %s13 = sphi 0, %s17
    %p14 = scmp.ge.s32.totalorder %s13, 4
    %s23 = sphi 0, %s25
    %s26 = sphi 0, %s23
    %s27 = sphi 0, %s26
    %s43 = sphi 0, %s27
    %s47 = sphi 0, %s47
    %s49 = sphi 0, %s47
    %s50 = sphi 0, %s49
    %s64 = sphi 0, %s50
    %s68 = sphi 0, %s68
    %s70 = sphi 0, %s68
    %s71 = sphi 0, %s70
    %s85 = sphi 0, %s71
    %s89 = sphi 0, %s89
    %s91 = sphi 0, %s89
    %s92 = sphi 0, %s91
    %s106 = sphi 0, %s92
    %s110 = sphi 0, %s110
    %s112 = sphi 0, %s110
    %s113 = sphi 0, %s112
    %s127 = sphi 0, %s113
    %s131 = sphi 0, %s131
    %s133 = sphi 0, %s131
    %s134 = sphi 0, %s133
    %s148 = sphi 0, %s134
    %s152 = sphi 0, %s152
    %s154 = sphi 0, %s152
    %s155 = sphi 0, %s154
    %s169 = sphi 0, %s155
    %s175 = sphi 0, %s177
    %s178 = sphi 0, %s175
    %s179 = sphi 0, %s178
    %s195 = sphi 0, %s179
  $region4: #{pvnet_head_forward.1} parent=0 // loop_header_branch
    %16 = sbr.rel (%p14) target = $region8
  $region5: #{pvnet_head_forward.1} parent=0 // loop_body
    %s18 = ssub.s32 %s13, 1
    %s19 = ssub.s32 %s13, 2
    %s20 = sadd.s32 %s13, 1
    %s21 = ssub.s32 %s13, %s20
    %p22 = scmp.eq.s32.totalorder %s21, 0
    %s24 = sadd.s32 %s23, 1
    %s25 = scalar_select %p22, %s23, %s24
    %p28 = pneg %p22
    %p29 = scmp.eq.s32.totalorder %s13, 1
    %p30 = por %p28, %p29
    %p31 = scmp.ne.s32.totalorder %s23, %s26
    %p32 = scmp.eq.s32.totalorder %s13, 0
    %p33 = por %p31, %p32
    %p34 = scmp.ne.s32.totalorder %s23, %s26
    %p35 = scmp.eq.s32.totalorder %s18, 1
    %p36 = por %p34, %p35
    %p37 = scmp.ne.s32.totalorder %s26, %s27
    %p38 = scmp.eq.s32.totalorder %s18, 0
    %p39 = por %p37, %p38
    %p40 = scmp.ne.s32.totalorder %s26, %s27
    %p41 = scmp.eq.s32.totalorder %s19, 1
    %p42 = por %p40, %p41
    %p44 = scmp.ne.s32.totalorder %s27, %s43
    %p45 = scmp.eq.s32.totalorder %s19, 0
    %p46 = por %p44, %p45
    %s48 = sadd.s32 %s47, 1
    %p51 = scmp.eq.s32.totalorder %s13, 1
    %p52 = scmp.ne.s32.totalorder %s47, %s49
    %p53 = scmp.eq.s32.totalorder %s13, 0
    %p54 = por %p52, %p53
    %p55 = scmp.ne.s32.totalorder %s47, %s49
    %p56 = scmp.eq.s32.totalorder %s18, 1
    %p57 = por %p55, %p56
    %p58 = scmp.ne.s32.totalorder %s49, %s50
    %p59 = scmp.eq.s32.totalorder %s18, 0
    %p60 = por %p58, %p59
    %p61 = scmp.ne.s32.totalorder %s49, %s50
    %p62 = scmp.eq.s32.totalorder %s19, 1
    %p63 = por %p61, %p62
    %p65 = scmp.ne.s32.totalorder %s50, %s64
    %p66 = scmp.eq.s32.totalorder %s19, 0
    %p67 = por %p65, %p66
    %s69 = sadd.s32 %s68, 1
    %p72 = scmp.eq.s32.totalorder %s13, 1
    %p73 = scmp.ne.s32.totalorder %s68, %s70
    %p74 = scmp.eq.s32.totalorder %s13, 0
    %p75 = por %p73, %p74
    %p76 = scmp.ne.s32.totalorder %s68, %s70
    %p77 = scmp.eq.s32.totalorder %s18, 1
    %p78 = por %p76, %p77
    %p79 = scmp.ne.s32.totalorder %s70, %s71
    %p80 = scmp.eq.s32.totalorder %s18, 0
    %p81 = por %p79, %p80
    %p82 = scmp.ne.s32.totalorder %s70, %s71
    %p83 = scmp.eq.s32.totalorder %s19, 1
    %p84 = por %p82, %p83
    %p86 = scmp.ne.s32.totalorder %s71, %s85
    %p87 = scmp.eq.s32.totalorder %s19, 0
    %p88 = por %p86, %p87
    %s90 = sadd.s32 %s89, 1
    %p93 = scmp.eq.s32.totalorder %s13, 1
    %p94 = scmp.ne.s32.totalorder %s89, %s91
    %p95 = scmp.eq.s32.totalorder %s13, 0
    %p96 = por %p94, %p95
    %p97 = scmp.ne.s32.totalorder %s89, %s91
    %p98 = scmp.eq.s32.totalorder %s18, 1
    %p99 = por %p97, %p98
    %p100 = scmp.ne.s32.totalorder %s91, %s92
    %p101 = scmp.eq.s32.totalorder %s18, 0
    %p102 = por %p100, %p101
    %p103 = scmp.ne.s32.totalorder %s91, %s92
    %p104 = scmp.eq.s32.totalorder %s19, 1
    %p105 = por %p103, %p104
    %p107 = scmp.ne.s32.totalorder %s92, %s106
    %p108 = scmp.eq.s32.totalorder %s19, 0
    %p109 = por %p107, %p108
    %s111 = sadd.s32 %s110, 1
    %p114 = scmp.eq.s32.totalorder %s13, 1
    %p115 = scmp.ne.s32.totalorder %s110, %s112
    %p116 = scmp.eq.s32.totalorder %s13, 0
    %p117 = por %p115, %p116
    %p118 = scmp.ne.s32.totalorder %s110, %s112
    %p119 = scmp.eq.s32.totalorder %s18, 1
    %p120 = por %p118, %p119
    %p121 = scmp.ne.s32.totalorder %s112, %s113
    %p122 = scmp.eq.s32.totalorder %s18, 0
    %p123 = por %p121, %p122
    %p124 = scmp.ne.s32.totalorder %s112, %s113
    %p125 = scmp.eq.s32.totalorder %s19, 1
    %p126 = por %p124, %p125
    %p128 = scmp.ne.s32.totalorder %s113, %s127
    %p129 = scmp.eq.s32.totalorder %s19, 0
    %p130 = por %p128, %p129
    %s132 = sadd.s32 %s131, 1
    %p135 = scmp.eq.s32.totalorder %s13, 1
    %p136 = scmp.ne.s32.totalorder %s131, %s133
    %p137 = scmp.eq.s32.totalorder %s13, 0
    %p138 = por %p136, %p137
    %p139 = scmp.ne.s32.totalorder %s131, %s133
    %p140 = scmp.eq.s32.totalorder %s18, 1
    %p141 = por %p139, %p140
    %p142 = scmp.ne.s32.totalorder %s133, %s134
    %p143 = scmp.eq.s32.totalorder %s18, 0
    %p144 = por %p142, %p143
    %p145 = scmp.ne.s32.totalorder %s133, %s134
    %p146 = scmp.eq.s32.totalorder %s19, 1
    %p147 = por %p145, %p146
    %p149 = scmp.ne.s32.totalorder %s134, %s148
    %p150 = scmp.eq.s32.totalorder %s19, 0
    %p151 = por %p149, %p150
    %s153 = sadd.s32 %s152, 1
    %p156 = scmp.eq.s32.totalorder %s13, 1
    %p157 = scmp.ne.s32.totalorder %s152, %s154
    %p158 = scmp.eq.s32.totalorder %s13, 0
    %p159 = por %p157, %p158
    %p160 = scmp.ne.s32.totalorder %s152, %s154
    %p161 = scmp.eq.s32.totalorder %s18, 1
    %p162 = por %p160, %p161
    %p163 = scmp.ne.s32.totalorder %s154, %s155
    %p164 = scmp.eq.s32.totalorder %s18, 0
    %p165 = por %p163, %p164
    %p166 = scmp.ne.s32.totalorder %s154, %s155
    %p167 = scmp.eq.s32.totalorder %s19, 1
    %p168 = por %p166, %p167
    %p170 = scmp.ne.s32.totalorder %s155, %s169
    %p171 = scmp.eq.s32.totalorder %s19, 0
    %p172 = por %p170, %p171
    %s173 = ssub.s32 %s13, %s20
    %p174 = scmp.eq.s32.totalorder %s173, 0
    %s176 = sadd.s32 %s175, 1
    %s177 = scalar_select %p174, %s175, %s176
    %p180 = pneg %p174
    %p181 = scmp.eq.s32.totalorder %s13, 1
    %p182 = por %p180, %p181
    %p183 = scmp.ne.s32.totalorder %s175, %s178
    %p184 = scmp.eq.s32.totalorder %s13, 0
    %p185 = por %p183, %p184
    %p186 = scmp.ne.s32.totalorder %s175, %s178
    %p187 = scmp.eq.s32.totalorder %s18, 1
    %p188 = por %p186, %p187
    %p189 = scmp.ne.s32.totalorder %s178, %s179
    %p190 = scmp.eq.s32.totalorder %s18, 0
    %p191 = por %p189, %p190
    %p192 = scmp.ne.s32.totalorder %s178, %s179
    %p193 = scmp.eq.s32.totalorder %s19, 1
    %p194 = por %p192, %p193
    %p196 = scmp.ne.s32.totalorder %s179, %s195
    %p197 = scmp.eq.s32.totalorder %s19, 0
    %p198 = por %p196, %p197
    %p199 = scmp.le.s32.totalorder 1, %s13
    %p200 = scmp.lt.s32.totalorder %s13, 3
    %p201 = pnand %p199, %p200
    %p202 = pneg %p201
    // Predicated region
    $region9: #{pvnet_head_forward.1} parent=5 // pred_check
      _
    $region10: #{pvnet_head_forward.1} parent=5 // pred_check_branch
      %204 = sbr.rel (%p201) target = $region12
    $region11: #{pvnet_head_forward.1} parent=5 // pred_region
      %s205 = ssub.s32 %s13, 1
      // Predicated region
      $region13: #{pvnet_head_forward.1} parent=11 // pred_check
        %p206 = pneg %p60
      $region14: #{pvnet_head_forward.1} parent=11 // pred_check_branch
        %208 = sbr.rel (%p206) target = $region16
      $region15: #{pvnet_head_forward.1} parent=11 // pred_region
        _
      $region16: #{pvnet_head_forward.1} parent=11 // pred_fallthru
        _
      // Predicated region
      $region17: #{pvnet_head_forward.1} parent=11 // pred_check
        %p209 = pneg %p81
      $region18: #{pvnet_head_forward.1} parent=11 // pred_check_branch
        %211 = sbr.rel (%p209) target = $region20
      $region19: #{pvnet_head_forward.1} parent=11 // pred_region
        _
      $region20: #{pvnet_head_forward.1} parent=11 // pred_fallthru
        _
      // Predicated region
      $region21: #{pvnet_head_forward.1} parent=11 // pred_check
        %p212 = pneg %p102
      $region22: #{pvnet_head_forward.1} parent=11 // pred_check_branch
        %214 = sbr.rel (%p212) target = $region24
      $region23: #{pvnet_head_forward.1} parent=11 // pred_region
        _
      $region24: #{pvnet_head_forward.1} parent=11 // pred_fallthru
        _
      // Predicated region
      $region25: #{pvnet_head_forward.1} parent=11 // pred_check
        %p215 = pneg %p123
      $region26: #{pvnet_head_forward.1} parent=11 // pred_check_branch
        %217 = sbr.rel (%p215) target = $region28
      $region27: #{pvnet_head_forward.1} parent=11 // pred_region
        _
      $region28: #{pvnet_head_forward.1} parent=11 // pred_fallthru
        _
      // Predicated region
      $region29: #{pvnet_head_forward.1} parent=11 // pred_check
        %p218 = pneg %p144
      $region30: #{pvnet_head_forward.1} parent=11 // pred_check_branch
        %220 = sbr.rel (%p218) target = $region32
      $region31: #{pvnet_head_forward.1} parent=11 // pred_region
        _
      $region32: #{pvnet_head_forward.1} parent=11 // pred_fallthru
        _
      // Predicated region
      $region33: #{pvnet_head_forward.1} parent=11 // pred_check
        %p221 = pneg %p165
      $region34: #{pvnet_head_forward.1} parent=11 // pred_check_branch
        %223 = sbr.rel (%p221) target = $region36
      $region35: #{pvnet_head_forward.1} parent=11 // pred_region
        _
      $region36: #{pvnet_head_forward.1} parent=11 // pred_fallthru
        _
    $region12: #{pvnet_head_forward.1} parent=5 // pred_fallthru
      _
    %p224 = scmp.lt.s32.totalorder %s13, 2
    // Predicated region
    $region37: #{pvnet_head_forward.1} parent=5 // pred_check
      %p225 = pneg %p224
    $region38: #{pvnet_head_forward.1} parent=5 // pred_check_branch
      %227 = sbr.rel (%p225) target = $region40
    $region39: #{pvnet_head_forward.1} parent=5 // pred_region
      // Predicated region
      $region41: #{pvnet_head_forward.1} parent=39 // pred_check
        %p228 = pneg %p33
      $region42: #{pvnet_head_forward.1} parent=39 // pred_check_branch
        %230 = sbr.rel (%p228) target = $region44
      $region43: #{pvnet_head_forward.1} parent=39 // pred_region
        %p231 = scmp.lt.s32.totalorder %s13, 1
        %s232 = scalar_select %p231, %s13, 1
        %s233 = smul.addr %s232, 32
        %s234 = smul.addr %s233, 4
        %s235 = scalar_lea.vmem %s0, %s234
      $region44: #{pvnet_head_forward.1} parent=39 // pred_fallthru
        _
    $region40: #{pvnet_head_forward.1} parent=5 // pred_fallthru
      _
    %p236 = scmp.le.s32.totalorder 1, %s13
    %p237 = scmp.lt.s32.totalorder %s13, 3
    %p238 = pnand %p236, %p237
    %p239 = pneg %p238
    // Predicated region
    $region45: #{pvnet_head_forward.1} parent=5 // pred_check
      _
    $region46: #{pvnet_head_forward.1} parent=5 // pred_check_branch
      %241 = sbr.rel (%p238) target = $region48
    $region47: #{pvnet_head_forward.1} parent=5 // pred_region
      %s242 = ssub.s32 %s13, 1
      %p243 = scmp.lt.s32.totalorder %s18, 1
      %s244 = scalar_select %p243, %s18, 1
      %s245 = smul.addr %s244, 32
      %s246 = smul.addr %s245, 4
      %s247 = scalar_lea.vmem %s0, %s246
      %p248 = pneg %p39
      %p249 = pneg %p36
      %p250 = pneg %p60
      %p251 = pneg %p57
      %p252 = pneg %p81
      %p253 = pneg %p78
      %p254 = pneg %p102
      %p255 = pneg %p99
      %p256 = pneg %p123
      %p257 = pneg %p120
      %p258 = pneg %p144
      %p259 = pneg %p141
      %p260 = pneg %p165
      %p261 = pneg %p162
      %p262 = pneg %p191
      %p263 = pneg %p188
      %p264 = scmp.lt.s32.totalorder %s18, 1
      %s265 = scalar_select %p264, %s18, 1
      %s266 = smul.addr %s265, 128
      %s267 = smul.addr %s266, 8
      %s268 = scalar_lea.vmem %s7, %s267
      %p269 = scmp.lt.s32.totalorder %s18, 1
      %s270 = scalar_select %p269, %s18, 1
      %s271 = smul.addr %s270, 32
      %s272 = smul.addr %s271, 4
      %s273 = scalar_lea.vmem %s0, %s272
      %p274 = scmp.lt.s32.totalorder %s18, 1
      %s275 = scalar_select %p274, %s18, 1
      %s276 = smul.addr %s275, 128
      %s277 = smul.addr %s276, 8
      %s278 = scalar_lea.vmem %s7, %s277
      %v280 = vld [vmem:[%s273] sm:$0xf]
      %v281 = vld [vmem:[%s273 + $0x4] sm:$0xf]
      %v282 = vld [vmem:[%s273 + $0x8] sm:$0xf]
      %v283 = vld [vmem:[%s273 + $0xc] sm:$0xf]
      %v284 = vld [vmem:[%s273 + $0x10] sm:$0xf]
      %v285 = vld [vmem:[%s273 + $0x14] sm:$0xf]
      %v286 = vld [vmem:[%s273 + $0x18] sm:$0xf]
      %v287 = vld [vmem:[%s273 + $0x1c] sm:$0xf]
      %v288 = vld [vmem:[%s273 + $0x20] sm:$0xf]
      %v289 = vld [vmem:[%s273 + $0x24] sm:$0xf]
      %v290 = vld [vmem:[%s273 + $0x28] sm:$0xf]
      %v291 = vld [vmem:[%s273 + $0x2c] sm:$0xf]
      %v292 = vld [vmem:[%s273 + $0x30] sm:$0xf]
      %v293 = vld [vmem:[%s273 + $0x34] sm:$0xf]
      %v294 = vld [vmem:[%s273 + $0x38] sm:$0xf]
      %v295 = vld [vmem:[%s273 + $0x3c] sm:$0xf]
      %v296 = vld [vmem:[%s273 + $0x40] sm:$0xf]
      %v297 = vld [vmem:[%s273 + $0x44] sm:$0xf]
      %v298 = vld [vmem:[%s273 + $0x48] sm:$0xf]
      %v299 = vld [vmem:[%s273 + $0x4c] sm:$0xf]
      %v300 = vld [vmem:[%s273 + $0x50] sm:$0xf]
      %v301 = vld [vmem:[%s273 + $0x54] sm:$0xf]
      %v302 = vld [vmem:[%s273 + $0x58] sm:$0xf]
      %v303 = vld [vmem:[%s273 + $0x5c] sm:$0xf]
      %v304 = vld [vmem:[%s273 + $0x60] sm:$0xf]
      %v305 = vld [vmem:[%s273 + $0x64] sm:$0xf]
      %v306 = vld [vmem:[%s273 + $0x68] sm:$0xf]
      %v307 = vld [vmem:[%s273 + $0x6c] sm:$0xf]
      %v308 = vld [vmem:[%s273 + $0x70] sm:$0xf]
      %v309 = vld [vmem:[%s273 + $0x74] sm:$0xf]
      %v310 = vld [vmem:[%s273 + $0x78] sm:$0xf]
      %v311 = vld [vmem:[%s273 + $0x7c] sm:$0xf]
      %v312 = vld [vmem:[%s1] sm:$0xf]
      %v313 = vld [vmem:[%s1 + $0x4] sm:$0xf]
      %v314 = vld [vmem:[%s1 + $0x8] sm:$0xf]
      %v315 = vld [vmem:[%s1 + $0xc] sm:$0xf]
      %v316 = vld [vmem:[%s1 + $0x10] sm:$0x3]
      %v317 = vld [vmem:[%s2] sm:$0x1]
      %v319 = vlaneseq
      %v320 = vshrl.u32 %v319, 7
      %v321 = vsub.s32 0, %v320
      %v322 = vrot.slane %v317, %v321
      %v356 = vunpack.c.l.b16 %v280
      %v357 = vunpack.c.l.b16 %v281
      %v358 = vunpack.c.l.b16 %v282
      %v359 = vunpack.c.l.b16 %v283
      %v360 = vunpack.c.l.b16 %v284
      %v361 = vunpack.c.l.b16 %v285
      %v362 = vunpack.c.l.b16 %v286
      %v363 = vunpack.c.l.b16 %v287
      %v364 = vunpack.c.l.b16 %v288
      %v365 = vunpack.c.l.b16 %v289
      %v366 = vunpack.c.l.b16 %v290
      %v367 = vunpack.c.l.b16 %v291
      %v368 = vunpack.c.l.b16 %v292
      %v369 = vunpack.c.l.b16 %v293
      %v370 = vunpack.c.l.b16 %v294
      %v371 = vunpack.c.l.b16 %v295
      %v372 = vunpack.c.l.b16 %v296
      %v373 = vunpack.c.l.b16 %v297
      %v374 = vunpack.c.l.b16 %v298
      %v375 = vunpack.c.l.b16 %v299
      %v376 = vunpack.c.l.b16 %v300
      %v377 = vunpack.c.l.b16 %v301
      %v378 = vunpack.c.l.b16 %v302
      %v379 = vunpack.c.l.b16 %v303
      %v380 = vunpack.c.l.b16 %v304
      %v381 = vunpack.c.l.b16 %v305
      %v382 = vunpack.c.l.b16 %v306
      %v383 = vunpack.c.l.b16 %v307
      %v384 = vunpack.c.l.b16 %v308
      %v385 = vunpack.c.l.b16 %v309
      %v386 = vunpack.c.l.b16 %v310
      %v387 = vunpack.c.l.b16 %v311
      %v388 = vpack.c.b16 %v357, %v356
      %v389 = vpack.c.b16 %v359, %v358
      %v390 = vpack.c.b16 %v361, %v360
      %v391 = vpack.c.b16 %v363, %v362
      %v392 = vpack.c.b16 %v365, %v364
      %v393 = vpack.c.b16 %v367, %v366
      %v394 = vpack.c.b16 %v369, %v368
      %v395 = vpack.c.b16 %v371, %v370
      %v396 = vpack.c.b16 %v373, %v372
      %v397 = vpack.c.b16 %v375, %v374
      %v398 = vpack.c.b16 %v377, %v376
      %v399 = vpack.c.b16 %v379, %v378
      %v400 = vpack.c.b16 %v381, %v380
      %v401 = vpack.c.b16 %v383, %v382
      %v402 = vpack.c.b16 %v385, %v384
      %v403 = vpack.c.b16 %v387, %v386
      %v409 = vunpack.c.l.b16 %v312
      %v410 = vunpack.c.l.b16 %v313
      %v411 = vunpack.c.l.b16 %v314
      %v412 = vunpack.c.l.b16 %v315
      %v413 = vunpack.c.l.b16 %v316
      %v414 = vpack.c.b16 %v410, %v409
      %v415 = vpack.c.b16 %v412, %v411
      %v416 = vpack.c.b16 %v413, %v413
      %vm419 = vcmask 293888
      %v421 = vsel %vm419, %v388, 0
      %v424 = vsel %vm419, %v389, 0
      %v427 = vsel %vm419, %v390, 0
      %v430 = vsel %vm419, %v391, 0
      %v433 = vsel %vm419, %v392, 0
      %v436 = vsel %vm419, %v393, 0
      %v439 = vsel %vm419, %v394, 0
      %v442 = vsel %vm419, %v395, 0
      %v445 = vsel %vm419, %v396, 0
      %v448 = vsel %vm419, %v397, 0
      %v451 = vsel %vm419, %v398, 0
      %v454 = vsel %vm419, %v399, 0
      %v457 = vsel %vm419, %v400, 0
      %v460 = vsel %vm419, %v401, 0
      %v463 = vsel %vm419, %v402, 0
      %v466 = vsel %vm419, %v403, 0
      %vm468 = vcmask 1041408
      %v470 = vsel %vm468, %v416, 0
      %472 = vmatprep.subr.bf16.mxu0 0
      %473 = vmatpush1.bf16.msra.mxu0 0
      %474 = vmatprep.subr.bf16.mxu0 0
      %475 = vmatpush1.bf16.msra.mxu0 0
      %476 = vmatprep.subr.bf16.mxu0 0
      %477 = vmatpush1.bf16.msra.mxu0 0
      %478 = vmatprep.subr.bf16.mxu0 0
      %479 = vmatpush1.bf16.msra.mxu0 0
      %480 = vmatprep.subr.bf16.mxu0 0
      %481 = vmatpush1.bf16.msra.mxu0 0
      %482 = vmatprep.subr.bf16.mxu0 0
      %483 = vmatpush1.bf16.msra.mxu0 %v470
      %484 = vmatprep.subr.bf16.mxu0 0
      %485 = vmatpush1.bf16.msra.mxu0 %v415
      %486 = vmatprep.subr.bf16.mxu0 0
      %487 = vmatpush1.bf16.msra.mxu0 %v414
      %488 = vmatprep.subr.bf16.mxu0 0
      %489 = vmatpush2.bf16.msra.mxu0 0
      %490 = vmatprep.subr.bf16.mxu0 0
      %491 = vmatpush2.bf16.msra.mxu0 0
      %492 = vmatprep.subr.bf16.mxu0 0
      %493 = vmatpush2.bf16.msra.mxu0 0
      %494 = vmatprep.subr.bf16.mxu0 0
      %495 = vmatpush2.bf16.msra.mxu0 0
      %496 = vmatprep.subr.bf16.mxu0 0
      %497 = vmatpush2.bf16.msra.mxu0 0
      %498 = vmatprep.subr.bf16.mxu0 0
      %499 = vmatpush2.bf16.msra.mxu0 0
      %500 = vmatprep.subr.bf16.mxu0 0
      %501 = vmatpush2.bf16.msra.mxu0 0
      %502 = vmatprep.subr.bf16.mxu0 0
      %503 = vmatpush2.bf16.msra.mxu0 0
      %504 = vmatprep.mubr.bf16.mxu0 0
      %505 = vmatmul.mubr.bf16.gmra.mxu0 %v421
      %v506 = vpop.f32.mrf.mxu0
      %v507 = vadd.f32 %v322, %v506
      %v508 = vpop.f32.mrf.mxu0
      %v509 = vpop.f32.mrf.mxu0
      %v510 = vadd.f32 %v322, %v509
      %v511 = vpop.f32.mrf.mxu0
      %512 = vmatprep.mubr.bf16.mxu0 0
      %513 = vmatmul.mubr.bf16.gmra.mxu0 %v424
      %v514 = vpop.f32.mrf.mxu0
      %v515 = vadd.f32 %v322, %v514
      %v516 = vpop.f32.mrf.mxu0
      %v517 = vpop.f32.mrf.mxu0
      %v518 = vadd.f32 %v322, %v517
      %v519 = vpop.f32.mrf.mxu0
      %520 = vmatprep.mubr.bf16.mxu0 0
      %521 = vmatmul.mubr.bf16.gmra.mxu0 %v427
      %v522 = vpop.f32.mrf.mxu0
      %v523 = vadd.f32 %v322, %v522
      %v524 = vpop.f32.mrf.mxu0
      %v525 = vpop.f32.mrf.mxu0
      %v526 = vadd.f32 %v322, %v525
      %v527 = vpop.f32.mrf.mxu0
      %528 = vmatprep.mubr.bf16.mxu0 0
      %529 = vmatmul.mubr.bf16.gmra.mxu0 %v430
      %v530 = vpop.f32.mrf.mxu0
      %v531 = vadd.f32 %v322, %v530
      %v532 = vpop.f32.mrf.mxu0
      %v533 = vpop.f32.mrf.mxu0
      %v534 = vadd.f32 %v322, %v533
      %v535 = vpop.f32.mrf.mxu0
      %536 = vmatprep.mubr.bf16.mxu0 0
      %537 = vmatmul.mubr.bf16.gmra.mxu0 %v433
      %v538 = vpop.f32.mrf.mxu0
      %v539 = vadd.f32 %v322, %v538
      %v540 = vpop.f32.mrf.mxu0
      %v541 = vpop.f32.mrf.mxu0
      %v542 = vadd.f32 %v322, %v541
      %v543 = vpop.f32.mrf.mxu0
      %544 = vmatprep.mubr.bf16.mxu0 0
      %545 = vmatmul.mubr.bf16.gmra.mxu0 %v436
      %v546 = vpop.f32.mrf.mxu0
      %v547 = vadd.f32 %v322, %v546
      %v548 = vpop.f32.mrf.mxu0
      %v549 = vpop.f32.mrf.mxu0
      %v550 = vadd.f32 %v322, %v549
      %v551 = vpop.f32.mrf.mxu0
      %552 = vmatprep.mubr.bf16.mxu0 0
      %553 = vmatmul.mubr.bf16.gmra.mxu0 %v439
      %v554 = vpop.f32.mrf.mxu0
      %v555 = vadd.f32 %v322, %v554
      %v556 = vpop.f32.mrf.mxu0
      %v557 = vpop.f32.mrf.mxu0
      %v558 = vadd.f32 %v322, %v557
      %v559 = vpop.f32.mrf.mxu0
      %560 = vmatprep.mubr.bf16.mxu0 0
      %561 = vmatmul.mubr.bf16.gmra.mxu0 %v442
      %v562 = vpop.f32.mrf.mxu0
      %v563 = vadd.f32 %v322, %v562
      %v564 = vpop.f32.mrf.mxu0
      %v565 = vpop.f32.mrf.mxu0
      %v566 = vadd.f32 %v322, %v565
      %v567 = vpop.f32.mrf.mxu0
      %568 = vmatprep.mubr.bf16.mxu0 0
      %569 = vmatmul.mubr.bf16.gmra.mxu0 %v445
      %v570 = vpop.f32.mrf.mxu0
      %v571 = vadd.f32 %v322, %v570
      %v572 = vpop.f32.mrf.mxu0
      %v573 = vpop.f32.mrf.mxu0
      %v574 = vadd.f32 %v322, %v573
      %v575 = vpop.f32.mrf.mxu0
      %576 = vmatprep.mubr.bf16.mxu0 0
      %577 = vmatmul.mubr.bf16.gmra.mxu0 %v448
      %v578 = vpop.f32.mrf.mxu0
      %v579 = vadd.f32 %v322, %v578
      %v580 = vpop.f32.mrf.mxu0
      %v581 = vpop.f32.mrf.mxu0
      %v582 = vadd.f32 %v322, %v581
      %v583 = vpop.f32.mrf.mxu0
      %584 = vmatprep.mubr.bf16.mxu0 0
      %585 = vmatmul.mubr.bf16.gmra.mxu0 %v451
      %v586 = vpop.f32.mrf.mxu0
      %v587 = vadd.f32 %v322, %v586
      %v588 = vpop.f32.mrf.mxu0
      %v589 = vpop.f32.mrf.mxu0
      %v590 = vadd.f32 %v322, %v589
      %v591 = vpop.f32.mrf.mxu0
      %592 = vmatprep.mubr.bf16.mxu0 0
      %593 = vmatmul.mubr.bf16.gmra.mxu0 %v454
      %v594 = vpop.f32.mrf.mxu0
      %v595 = vadd.f32 %v322, %v594
      %v596 = vpop.f32.mrf.mxu0
      %v597 = vpop.f32.mrf.mxu0
      %v598 = vadd.f32 %v322, %v597
      %v599 = vpop.f32.mrf.mxu0
      %600 = vmatprep.mubr.bf16.mxu0 0
      %601 = vmatmul.mubr.bf16.gmra.mxu0 %v457
      %v602 = vpop.f32.mrf.mxu0
      %v603 = vadd.f32 %v322, %v602
      %v604 = vpop.f32.mrf.mxu0
      %v605 = vpop.f32.mrf.mxu0
      %v606 = vadd.f32 %v322, %v605
      %v607 = vpop.f32.mrf.mxu0
      %608 = vmatprep.mubr.bf16.mxu0 0
      %609 = vmatmul.mubr.bf16.gmra.mxu0 %v460
      %v610 = vpop.f32.mrf.mxu0
      %v611 = vadd.f32 %v322, %v610
      %v612 = vpop.f32.mrf.mxu0
      %v613 = vpop.f32.mrf.mxu0
      %v614 = vadd.f32 %v322, %v613
      %v615 = vpop.f32.mrf.mxu0
      %616 = vmatprep.mubr.bf16.mxu0 0
      %617 = vmatmul.mubr.bf16.gmra.mxu0 %v463
      %v618 = vpop.f32.mrf.mxu0
      %v619 = vadd.f32 %v322, %v618
      %v620 = vpop.f32.mrf.mxu0
      %v621 = vpop.f32.mrf.mxu0
      %v622 = vadd.f32 %v322, %v621
      %v623 = vpop.f32.mrf.mxu0
      %624 = vmatprep.mubr.bf16.mxu0 0
      %625 = vmatmul.mubr.bf16.gmra.mxu0 %v466
      %v626 = vpop.f32.mrf.mxu0
      %v627 = vadd.f32 %v322, %v626
      %v628 = vpop.f32.mrf.mxu0
      %v629 = vpop.f32.mrf.mxu0
      %v630 = vadd.f32 %v322, %v629
      %v631 = vpop.f32.mrf.mxu0
      %632 = vdwg.mxu0
      %v633 = vmax.f32 %v507, 0.0
      %v634 = vmax.f32 %v510, 0.0
      %v635 = vmax.f32 %v515, 0.0
      %v636 = vmax.f32 %v518, 0.0
      %v637 = vmax.f32 %v523, 0.0
      %v638 = vmax.f32 %v526, 0.0
      %v639 = vmax.f32 %v531, 0.0
      %v640 = vmax.f32 %v534, 0.0
      %v641 = vmax.f32 %v539, 0.0
      %v642 = vmax.f32 %v542, 0.0
      %v643 = vmax.f32 %v547, 0.0
      %v644 = vmax.f32 %v550, 0.0
      %v645 = vmax.f32 %v555, 0.0
      %v646 = vmax.f32 %v558, 0.0
      %v647 = vmax.f32 %v563, 0.0
      %v648 = vmax.f32 %v566, 0.0
      %v649 = vmax.f32 %v571, 0.0
      %v650 = vmax.f32 %v574, 0.0
      %v651 = vmax.f32 %v579, 0.0
      %v652 = vmax.f32 %v582, 0.0
      %v653 = vmax.f32 %v587, 0.0
      %v654 = vmax.f32 %v590, 0.0
      %v655 = vmax.f32 %v595, 0.0
      %v656 = vmax.f32 %v598, 0.0
      %v657 = vmax.f32 %v603, 0.0
      %v658 = vmax.f32 %v606, 0.0
      %v659 = vmax.f32 %v611, 0.0
      %v660 = vmax.f32 %v614, 0.0
      %v661 = vmax.f32 %v619, 0.0
      %v662 = vmax.f32 %v622, 0.0
      %v663 = vmax.f32 %v627, 0.0
      %v664 = vmax.f32 %v630, 0.0
      %v665 = vpack.c.bf16 %v634, %v633
      %v666 = vpack.c.bf16 %v636, %v635
      %v667 = vpack.c.bf16 %v638, %v637
      %v668 = vpack.c.bf16 %v640, %v639
      %v669 = vpack.c.bf16 %v642, %v641
      %v670 = vpack.c.bf16 %v644, %v643
      %v671 = vpack.c.bf16 %v646, %v645
      %v672 = vpack.c.bf16 %v648, %v647
      %v673 = vpack.c.bf16 %v650, %v649
      %v674 = vpack.c.bf16 %v652, %v651
      %v675 = vpack.c.bf16 %v654, %v653
      %v676 = vpack.c.bf16 %v656, %v655
      %v677 = vpack.c.bf16 %v658, %v657
      %v678 = vpack.c.bf16 %v660, %v659
      %v679 = vpack.c.bf16 %v662, %v661
      %v680 = vpack.c.bf16 %v664, %v663
      %v682 = vshrl.u32 0, 16
      %v684 = vrot.slane %v682, 7
      %v685 = vshll.u32 0, 16
      %v687 = vor.u32 %v684, %v685
      %v689 = vshrl.u32 %v665, 16
      %v691 = vrot.slane %v689, 7
      %v692 = vshll.u32 %v665, 16
      %v694 = vor.u32 %v691, %v692
      %v696 = vshrl.u32 %v666, 16
      %v698 = vrot.slane %v696, 7
      %v699 = vshll.u32 %v666, 16
      %v701 = vor.u32 %v698, %v699
      %v703 = vshrl.u32 %v667, 16
      %v705 = vrot.slane %v703, 7
      %v706 = vshll.u32 %v667, 16
      %v708 = vor.u32 %v705, %v706
      %v710 = vshrl.u32 %v668, 16
      %v712 = vrot.slane %v710, 7
      %v713 = vshll.u32 %v668, 16
      %v715 = vor.u32 %v712, %v713
      %v717 = vshrl.u32 %v669, 16
      %v719 = vrot.slane %v717, 7
      %v720 = vshll.u32 %v669, 16
      %v722 = vor.u32 %v719, %v720
      %v724 = vshrl.u32 %v670, 16
      %v726 = vrot.slane %v724, 7
      %v727 = vshll.u32 %v670, 16
      %v729 = vor.u32 %v726, %v727
      %v731 = vshrl.u32 %v671, 16
      %v733 = vrot.slane %v731, 7
      %v734 = vshll.u32 %v671, 16
      %v736 = vor.u32 %v733, %v734
      %v738 = vshrl.u32 %v672, 16
      %v740 = vrot.slane %v738, 7
      %v741 = vshll.u32 %v672, 16
      %v743 = vor.u32 %v740, %v741
      %v745 = vshrl.u32 %v673, 16
      %v747 = vrot.slane %v745, 7
      %v748 = vshll.u32 %v673, 16
      %v750 = vor.u32 %v747, %v748
      %v752 = vshrl.u32 %v674, 16
      %v754 = vrot.slane %v752, 7
      %v755 = vshll.u32 %v674, 16
      %v757 = vor.u32 %v754, %v755
      %v759 = vshrl.u32 %v675, 16
      %v761 = vrot.slane %v759, 7
      %v762 = vshll.u32 %v675, 16
      %v764 = vor.u32 %v761, %v762
      %v766 = vshrl.u32 %v676, 16
      %v768 = vrot.slane %v766, 7
      %v769 = vshll.u32 %v676, 16
      %v771 = vor.u32 %v768, %v769
      %v773 = vshrl.u32 %v677, 16
      %v775 = vrot.slane %v773, 7
      %v776 = vshll.u32 %v677, 16
      %v778 = vor.u32 %v775, %v776
      %v780 = vshrl.u32 %v678, 16
      %v782 = vrot.slane %v780, 7
      %v783 = vshll.u32 %v678, 16
      %v785 = vor.u32 %v782, %v783
      %v787 = vshrl.u32 %v679, 16
      %v789 = vrot.slane %v787, 7
      %v790 = vshll.u32 %v679, 16
      %v792 = vor.u32 %v789, %v790
      %v794 = vshrl.u32 %v680, 16
      %v796 = vrot.slane %v794, 7
      %v797 = vshll.u32 %v680, 16
      %v799 = vor.u32 %v796, %v797
      %vm834 = vcmask 1040384
      %vm835 = vsmask.f32 256
      %vm836 = vmand %vm834, %vm835
      %v837 = vsel %vm836, 0, %v687
      %v838 = vsel %vm836, 0, %v694
      %v839 = vsel %vm836, 0, %v701
      %v840 = vsel %vm836, 0, %v708
      %v841 = vsel %vm836, 0, %v715
      %v842 = vsel %vm836, 0, %v722
      %v843 = vsel %vm836, 0, %v729
      %v844 = vsel %vm836, 0, %v736
      %v845 = vsel %vm836, 0, %v743
      %v846 = vsel %vm836, 0, %v750
      %v847 = vsel %vm836, 0, %v757
      %v848 = vsel %vm836, 0, %v764
      %v849 = vsel %vm836, 0, %v771
      %v850 = vsel %vm836, 0, %v778
      %v851 = vsel %vm836, 0, %v785
      %v852 = vsel %vm836, 0, %v792
      %v853 = vsel %vm836, 0, %v799
      %v854 = vsel %vm836, %v684, 0
      %v855 = vsel %vm836, %v691, 0
      %v856 = vsel %vm836, %v698, 0
      %v857 = vsel %vm836, %v705, 0
      %v858 = vsel %vm836, %v712, 0
      %v859 = vsel %vm836, %v719, 0
      %v860 = vsel %vm836, %v726, 0
      %v861 = vsel %vm836, %v733, 0
      %v862 = vsel %vm836, %v740, 0
      %v863 = vsel %vm836, %v747, 0
      %v864 = vsel %vm836, %v754, 0
      %v865 = vsel %vm836, %v761, 0
      %v866 = vsel %vm836, %v768, 0
      %v867 = vsel %vm836, %v775, 0
      %v868 = vsel %vm836, %v782, 0
      %v869 = vsel %vm836, %v789, 0
      %v870 = vsel %vm836, %v796, 0
      %vm871 = vsmask.f32 7424
      %v873 = vshrl.u32 %v837, 16
      %v875 = vshll.u32 %v837, 16
      %v877 = vrot.slane %v875, 1
      %v878 = vor.u32 %v873, %v877
      %v880 = vshll.u32 %v854, 16
      %v882 = vrot.slane %v880, 1
      %v883 = vsel %vm871, %v878, %v882
      %v885 = vshrl.u32 %v838, 16
      %v887 = vshll.u32 %v838, 16
      %v889 = vrot.slane %v887, 1
      %v890 = vor.u32 %v885, %v889
      %v892 = vshll.u32 %v855, 16
      %v894 = vrot.slane %v892, 1
      %v895 = vsel %vm871, %v890, %v894
      %v897 = vshrl.u32 %v839, 16
      %v899 = vshll.u32 %v839, 16
      %v901 = vrot.slane %v899, 1
      %v902 = vor.u32 %v897, %v901
      %v904 = vshll.u32 %v856, 16
      %v906 = vrot.slane %v904, 1
      %v907 = vsel %vm871, %v902, %v906
      %v909 = vshrl.u32 %v840, 16
      %v911 = vshll.u32 %v840, 16
      %v913 = vrot.slane %v911, 1
      %v914 = vor.u32 %v909, %v913
      %v916 = vshll.u32 %v857, 16
      %v918 = vrot.slane %v916, 1
      %v919 = vsel %vm871, %v914, %v918
      %v921 = vshrl.u32 %v841, 16
      %v923 = vshll.u32 %v841, 16
      %v925 = vrot.slane %v923, 1
      %v926 = vor.u32 %v921, %v925
      %v928 = vshll.u32 %v858, 16
      %v930 = vrot.slane %v928, 1
      %v931 = vsel %vm871, %v926, %v930
      %v933 = vshrl.u32 %v842, 16
      %v935 = vshll.u32 %v842, 16
      %v937 = vrot.slane %v935, 1
      %v938 = vor.u32 %v933, %v937
      %v940 = vshll.u32 %v859, 16
      %v942 = vrot.slane %v940, 1
      %v943 = vsel %vm871, %v938, %v942
      %v945 = vshrl.u32 %v843, 16
      %v947 = vshll.u32 %v843, 16
      %v949 = vrot.slane %v947, 1
      %v950 = vor.u32 %v945, %v949
      %v952 = vshll.u32 %v860, 16
      %v954 = vrot.slane %v952, 1
      %v955 = vsel %vm871, %v950, %v954
      %v957 = vshrl.u32 %v844, 16
      %v959 = vshll.u32 %v844, 16
      %v961 = vrot.slane %v959, 1
      %v962 = vor.u32 %v957, %v961
      %v964 = vshll.u32 %v861, 16
      %v966 = vrot.slane %v964, 1
      %v967 = vsel %vm871, %v962, %v966
      %v969 = vshrl.u32 %v845, 16
      %v971 = vshll.u32 %v845, 16
      %v973 = vrot.slane %v971, 1
      %v974 = vor.u32 %v969, %v973
      %v976 = vshll.u32 %v862, 16
      %v978 = vrot.slane %v976, 1
      %v979 = vsel %vm871, %v974, %v978
      %v981 = vshrl.u32 %v846, 16
      %v983 = vshll.u32 %v846, 16
      %v985 = vrot.slane %v983, 1
      %v986 = vor.u32 %v981, %v985
      %v988 = vshll.u32 %v863, 16
      %v990 = vrot.slane %v988, 1
      %v991 = vsel %vm871, %v986, %v990
      %v993 = vshrl.u32 %v847, 16
      %v995 = vshll.u32 %v847, 16
      %v997 = vrot.slane %v995, 1
      %v998 = vor.u32 %v993, %v997
      %v1000 = vshll.u32 %v864, 16
      %v1002 = vrot.slane %v1000, 1
      %v1003 = vsel %vm871, %v998, %v1002
      %v1005 = vshrl.u32 %v848, 16
      %v1007 = vshll.u32 %v848, 16
      %v1009 = vrot.slane %v1007, 1
      %v1010 = vor.u32 %v1005, %v1009
      %v1012 = vshll.u32 %v865, 16
      %v1014 = vrot.slane %v1012, 1
      %v1015 = vsel %vm871, %v1010, %v1014
      %v1017 = vshrl.u32 %v849, 16
      %v1019 = vshll.u32 %v849, 16
      %v1021 = vrot.slane %v1019, 1
      %v1022 = vor.u32 %v1017, %v1021
      %v1024 = vshll.u32 %v866, 16
      %v1026 = vrot.slane %v1024, 1
      %v1027 = vsel %vm871, %v1022, %v1026
      %v1029 = vshrl.u32 %v850, 16
      %v1031 = vshll.u32 %v850, 16
      %v1033 = vrot.slane %v1031, 1
      %v1034 = vor.u32 %v1029, %v1033
      %v1036 = vshll.u32 %v867, 16
      %v1038 = vrot.slane %v1036, 1
      %v1039 = vsel %vm871, %v1034, %v1038
      %v1041 = vshrl.u32 %v851, 16
      %v1043 = vshll.u32 %v851, 16
      %v1045 = vrot.slane %v1043, 1
      %v1046 = vor.u32 %v1041, %v1045
      %v1048 = vshll.u32 %v868, 16
      %v1050 = vrot.slane %v1048, 1
      %v1051 = vsel %vm871, %v1046, %v1050
      %v1053 = vshrl.u32 %v852, 16
      %v1055 = vshll.u32 %v852, 16
      %v1057 = vrot.slane %v1055, 1
      %v1058 = vor.u32 %v1053, %v1057
      %v1060 = vshll.u32 %v869, 16
      %v1062 = vrot.slane %v1060, 1
      %v1063 = vsel %vm871, %v1058, %v1062
      %1064 = vrot.lane.b32.xlu0 %v883, 32
      %v1065 = vpop.permute.xlu0 %1064
      %1066 = vrot.lane.b32.xlu0 %v895, 32
      %v1067 = vpop.permute.xlu0 %1066
      %1068 = vrot.lane.b32.xlu0 %v907, 32
      %v1069 = vpop.permute.xlu0 %1068
      %1070 = vrot.lane.b32.xlu0 %v919, 32
      %v1071 = vpop.permute.xlu0 %1070
      %1072 = vrot.lane.b32.xlu0 %v931, 32
      %v1073 = vpop.permute.xlu0 %1072
      %1074 = vrot.lane.b32.xlu0 %v943, 32
      %v1075 = vpop.permute.xlu0 %1074
      %1076 = vrot.lane.b32.xlu0 %v955, 32
      %v1077 = vpop.permute.xlu0 %1076
      %1078 = vrot.lane.b32.xlu0 %v967, 32
      %v1079 = vpop.permute.xlu0 %1078
      %1080 = vrot.lane.b32.xlu0 %v979, 32
      %v1081 = vpop.permute.xlu0 %1080
      %1082 = vrot.lane.b32.xlu0 %v991, 32
      %v1083 = vpop.permute.xlu0 %1082
      %1084 = vrot.lane.b32.xlu0 %v1003, 32
      %v1085 = vpop.permute.xlu0 %1084
      %1086 = vrot.lane.b32.xlu0 %v1015, 32
      %v1087 = vpop.permute.xlu0 %1086
      %1088 = vrot.lane.b32.xlu0 %v1027, 32
      %v1089 = vpop.permute.xlu0 %1088
      %1090 = vrot.lane.b32.xlu0 %v1039, 32
      %v1091 = vpop.permute.xlu0 %1090
      %1092 = vrot.lane.b32.xlu0 %v1051, 32
      %v1093 = vpop.permute.xlu0 %1092
      %1094 = vrot.lane.b32.xlu0 %v1063, 32
      %v1095 = vpop.permute.xlu0 %1094
      %vm1128 = vcmask 1046528
      %v1129 = vrot.slane %v837, 1
      %v1130 = vrot.slane %v854, 1
      %v1131 = vsel %vm1128, %v1129, %v1130
      %v1132 = vrot.slane %v838, 1
      %v1133 = vrot.slane %v855, 1
      %v1134 = vsel %vm1128, %v1132, %v1133
      %v1135 = vrot.slane %v839, 1
      %v1136 = vrot.slane %v856, 1
      %v1137 = vsel %vm1128, %v1135, %v1136
      %v1138 = vrot.slane %v840, 1
      %v1139 = vrot.slane %v857, 1
      %v1140 = vsel %vm1128, %v1138, %v1139
      %v1141 = vrot.slane %v841, 1
      %v1142 = vrot.slane %v858, 1
      %v1143 = vsel %vm1128, %v1141, %v1142
      %v1144 = vrot.slane %v842, 1
      %v1145 = vrot.slane %v859, 1
      %v1146 = vsel %vm1128, %v1144, %v1145
      %v1147 = vrot.slane %v843, 1
      %v1148 = vrot.slane %v860, 1
      %v1149 = vsel %vm1128, %v1147, %v1148
      %v1150 = vrot.slane %v844, 1
      %v1151 = vrot.slane %v861, 1
      %v1152 = vsel %vm1128, %v1150, %v1151
      %v1153 = vrot.slane %v845, 1
      %v1154 = vrot.slane %v862, 1
      %v1155 = vsel %vm1128, %v1153, %v1154
      %v1156 = vrot.slane %v846, 1
      %v1157 = vrot.slane %v863, 1
      %v1158 = vsel %vm1128, %v1156, %v1157
      %v1159 = vrot.slane %v847, 1
      %v1160 = vrot.slane %v864, 1
      %v1161 = vsel %vm1128, %v1159, %v1160
      %v1162 = vrot.slane %v848, 1
      %v1163 = vrot.slane %v865, 1
      %v1164 = vsel %vm1128, %v1162, %v1163
      %v1165 = vrot.slane %v849, 1
      %v1166 = vrot.slane %v866, 1
      %v1167 = vsel %vm1128, %v1165, %v1166
      %v1168 = vrot.slane %v850, 1
      %v1169 = vrot.slane %v867, 1
      %v1170 = vsel %vm1128, %v1168, %v1169
      %v1171 = vrot.slane %v851, 1
      %v1172 = vrot.slane %v868, 1
      %v1173 = vsel %vm1128, %v1171, %v1172
      %v1174 = vrot.slane %v852, 1
      %v1175 = vrot.slane %v869, 1
      %v1176 = vsel %vm1128, %v1174, %v1175
      %1177 = vrot.lane.b32.xlu0 %v1131, 64
      %v1178 = vpop.permute.xlu0 %1177
      %1179 = vrot.lane.b32.xlu0 %v1134, 64
      %v1180 = vpop.permute.xlu0 %1179
      %1181 = vrot.lane.b32.xlu0 %v1137, 64
      %v1182 = vpop.permute.xlu0 %1181
      %1183 = vrot.lane.b32.xlu0 %v1140, 64
      %v1184 = vpop.permute.xlu0 %1183
      %1185 = vrot.lane.b32.xlu0 %v1143, 64
      %v1186 = vpop.permute.xlu0 %1185
      %1187 = vrot.lane.b32.xlu0 %v1146, 64
      %v1188 = vpop.permute.xlu0 %1187
      %1189 = vrot.lane.b32.xlu0 %v1149, 64
      %v1190 = vpop.permute.xlu0 %1189
      %1191 = vrot.lane.b32.xlu0 %v1152, 64
      %v1192 = vpop.permute.xlu0 %1191
      %1193 = vrot.lane.b32.xlu0 %v1155, 64
      %v1194 = vpop.permute.xlu0 %1193
      %1195 = vrot.lane.b32.xlu0 %v1158, 64
      %v1196 = vpop.permute.xlu0 %1195
      %1197 = vrot.lane.b32.xlu0 %v1161, 64
      %v1198 = vpop.permute.xlu0 %1197
      %1199 = vrot.lane.b32.xlu0 %v1164, 64
      %v1200 = vpop.permute.xlu0 %1199
      %1201 = vrot.lane.b32.xlu0 %v1167, 64
      %v1202 = vpop.permute.xlu0 %1201
      %1203 = vrot.lane.b32.xlu0 %v1170, 64
      %v1204 = vpop.permute.xlu0 %1203
      %1205 = vrot.lane.b32.xlu0 %v1173, 64
      %v1206 = vpop.permute.xlu0 %1205
      %1207 = vrot.lane.b32.xlu0 %v1176, 64
      %v1208 = vpop.permute.xlu0 %1207
      %1210 = vrot.lane.b32.xlu0 %v838, 96
      %v1211 = vpop.permute.xlu0 %1210
      %1212 = vrot.lane.b32.xlu0 %v839, 96
      %v1213 = vpop.permute.xlu0 %1212
      %1214 = vrot.lane.b32.xlu0 %v840, 96
      %v1215 = vpop.permute.xlu0 %1214
      %1216 = vrot.lane.b32.xlu0 %v841, 96
      %v1217 = vpop.permute.xlu0 %1216
      %1218 = vrot.lane.b32.xlu0 %v842, 96
      %v1219 = vpop.permute.xlu0 %1218
      %1220 = vrot.lane.b32.xlu0 %v843, 96
      %v1221 = vpop.permute.xlu0 %1220
      %1222 = vrot.lane.b32.xlu0 %v844, 96
      %v1223 = vpop.permute.xlu0 %1222
      %1224 = vrot.lane.b32.xlu0 %v845, 96
      %v1225 = vpop.permute.xlu0 %1224
      %1226 = vrot.lane.b32.xlu0 %v846, 96
      %v1227 = vpop.permute.xlu0 %1226
      %1228 = vrot.lane.b32.xlu0 %v847, 96
      %v1229 = vpop.permute.xlu0 %1228
      %1230 = vrot.lane.b32.xlu0 %v848, 96
      %v1231 = vpop.permute.xlu0 %1230
      %1232 = vrot.lane.b32.xlu0 %v849, 96
      %v1233 = vpop.permute.xlu0 %1232
      %1234 = vrot.lane.b32.xlu0 %v850, 96
      %v1235 = vpop.permute.xlu0 %1234
      %1236 = vrot.lane.b32.xlu0 %v851, 96
      %v1237 = vpop.permute.xlu0 %1236
      %1238 = vrot.lane.b32.xlu0 %v852, 96
      %v1239 = vpop.permute.xlu0 %1238
      %1240 = vrot.lane.b32.xlu0 %v853, 96
      %v1241 = vpop.permute.xlu0 %1240
      %v1243 = vshrl.u32 %v853, 16
      %v1245 = vshll.u32 %v853, 16
      %v1247 = vrot.slane %v1245, 1
      %v1248 = vor.u32 %v1243, %v1247
      %v1250 = vshll.u32 %v870, 16
      %v1252 = vrot.slane %v1250, 1
      %v1253 = vsel %vm871, %v1248, %v1252
      %v1255 = vrot.slane %v853, 1
      %v1256 = vrot.slane %v870, 1
      %v1257 = vsel %vm1128, %v1255, %v1256
      %1258 = vrot.lane.b32.xlu0 %v1134, 32
      %v1259 = vpop.permute.xlu0 %1258
      %1260 = vrot.lane.b32.xlu0 %v1137, 32
      %v1261 = vpop.permute.xlu0 %1260
      %1262 = vrot.lane.b32.xlu0 %v1140, 32
      %v1263 = vpop.permute.xlu0 %1262
      %1264 = vrot.lane.b32.xlu0 %v1143, 32
      %v1265 = vpop.permute.xlu0 %1264
      %1266 = vrot.lane.b32.xlu0 %v1146, 32
      %v1267 = vpop.permute.xlu0 %1266
      %1268 = vrot.lane.b32.xlu0 %v1149, 32
      %v1269 = vpop.permute.xlu0 %1268
      %1270 = vrot.lane.b32.xlu0 %v1152, 32
      %v1271 = vpop.permute.xlu0 %1270
      %1272 = vrot.lane.b32.xlu0 %v1155, 32
      %v1273 = vpop.permute.xlu0 %1272
      %1274 = vrot.lane.b32.xlu0 %v1158, 32
      %v1275 = vpop.permute.xlu0 %1274
      %1276 = vrot.lane.b32.xlu0 %v1161, 32
      %v1277 = vpop.permute.xlu0 %1276
      %1278 = vrot.lane.b32.xlu0 %v1164, 32
      %v1279 = vpop.permute.xlu0 %1278
      %1280 = vrot.lane.b32.xlu0 %v1167, 32
      %v1281 = vpop.permute.xlu0 %1280
      %1282 = vrot.lane.b32.xlu0 %v1170, 32
      %v1283 = vpop.permute.xlu0 %1282
      %1284 = vrot.lane.b32.xlu0 %v1173, 32
      %v1285 = vpop.permute.xlu0 %1284
      %1286 = vrot.lane.b32.xlu0 %v1176, 32
      %v1287 = vpop.permute.xlu0 %1286
      %1288 = vrot.lane.b32.xlu0 %v1257, 32
      %v1289 = vpop.permute.xlu0 %1288
      %1290 = vrot.lane.b32.xlu0 %v839, 64
      %v1291 = vpop.permute.xlu0 %1290
      %1292 = vrot.lane.b32.xlu0 %v840, 64
      %v1293 = vpop.permute.xlu0 %1292
      %1294 = vrot.lane.b32.xlu0 %v841, 64
      %v1295 = vpop.permute.xlu0 %1294
      %1296 = vrot.lane.b32.xlu0 %v842, 64
      %v1297 = vpop.permute.xlu0 %1296
      %1298 = vrot.lane.b32.xlu0 %v843, 64
      %v1299 = vpop.permute.xlu0 %1298
      %1300 = vrot.lane.b32.xlu0 %v844, 64
      %v1301 = vpop.permute.xlu0 %1300
      %1302 = vrot.lane.b32.xlu0 %v845, 64
      %v1303 = vpop.permute.xlu0 %1302
      %1304 = vrot.lane.b32.xlu0 %v846, 64
      %v1305 = vpop.permute.xlu0 %1304
      %1306 = vrot.lane.b32.xlu0 %v847, 64
      %v1307 = vpop.permute.xlu0 %1306
      %1308 = vrot.lane.b32.xlu0 %v848, 64
      %v1309 = vpop.permute.xlu0 %1308
      %1310 = vrot.lane.b32.xlu0 %v849, 64
      %v1311 = vpop.permute.xlu0 %1310
      %1312 = vrot.lane.b32.xlu0 %v850, 64
      %v1313 = vpop.permute.xlu0 %1312
      %1314 = vrot.lane.b32.xlu0 %v851, 64
      %v1315 = vpop.permute.xlu0 %1314
      %1316 = vrot.lane.b32.xlu0 %v852, 64
      %v1317 = vpop.permute.xlu0 %1316
      %1318 = vrot.lane.b32.xlu0 %v853, 64
      %v1319 = vpop.permute.xlu0 %1318
      %1320 = vrot.lane.b32.xlu0 %v837, 64
      %v1321 = vpop.permute.xlu0 %1320
      %1322 = vrot.lane.b32.xlu0 %v907, 96
      %v1323 = vpop.permute.xlu0 %1322
      %1324 = vrot.lane.b32.xlu0 %v919, 96
      %v1325 = vpop.permute.xlu0 %1324
      %1326 = vrot.lane.b32.xlu0 %v931, 96
      %v1327 = vpop.permute.xlu0 %1326
      %1328 = vrot.lane.b32.xlu0 %v943, 96
      %v1329 = vpop.permute.xlu0 %1328
      %1330 = vrot.lane.b32.xlu0 %v955, 96
      %v1331 = vpop.permute.xlu0 %1330
      %1332 = vrot.lane.b32.xlu0 %v967, 96
      %v1333 = vpop.permute.xlu0 %1332
      %1334 = vrot.lane.b32.xlu0 %v979, 96
      %v1335 = vpop.permute.xlu0 %1334
      %1336 = vrot.lane.b32.xlu0 %v991, 96
      %v1337 = vpop.permute.xlu0 %1336
      %1338 = vrot.lane.b32.xlu0 %v1003, 96
      %v1339 = vpop.permute.xlu0 %1338
      %1340 = vrot.lane.b32.xlu0 %v1015, 96
      %v1341 = vpop.permute.xlu0 %1340
      %1342 = vrot.lane.b32.xlu0 %v1027, 96
      %v1343 = vpop.permute.xlu0 %1342
      %1344 = vrot.lane.b32.xlu0 %v1039, 96
      %v1345 = vpop.permute.xlu0 %1344
      %1346 = vrot.lane.b32.xlu0 %v1051, 96
      %v1347 = vpop.permute.xlu0 %1346
      %1348 = vrot.lane.b32.xlu0 %v1063, 96
      %v1349 = vpop.permute.xlu0 %1348
      %1350 = vrot.lane.b32.xlu0 %v1253, 96
      %v1351 = vpop.permute.xlu0 %1350
      %1352 = vrot.lane.b32.xlu0 %v883, 96
      %v1353 = vpop.permute.xlu0 %1352
      %vm1354 = vcmask 261120
      %v1356 = vsel %vm1354, %v837, %v1065
      %v1358 = vsel %vm1354, %v838, %v1067
      %v1360 = vsel %vm1354, %v839, %v1069
      %v1362 = vsel %vm1354, %v840, %v1071
      %v1364 = vsel %vm1354, %v841, %v1073
      %v1366 = vsel %vm1354, %v842, %v1075
      %v1368 = vsel %vm1354, %v843, %v1077
      %v1370 = vsel %vm1354, %v844, %v1079
      %v1372 = vsel %vm1354, %v845, %v1081
      %v1374 = vsel %vm1354, %v846, %v1083
      %v1376 = vsel %vm1354, %v847, %v1085
      %v1378 = vsel %vm1354, %v848, %v1087
      %v1380 = vsel %vm1354, %v849, %v1089
      %v1382 = vsel %vm1354, %v850, %v1091
      %v1384 = vsel %vm1354, %v851, %v1093
      %v1386 = vsel %vm1354, %v852, %v1095
      %vm1387 = vcmask 523264
      %v1389 = vsel %vm1387, %v1356, %v1178
      %v1391 = vsel %vm1387, %v1358, %v1180
      %v1393 = vsel %vm1387, %v1360, %v1182
      %v1395 = vsel %vm1387, %v1362, %v1184
      %v1397 = vsel %vm1387, %v1364, %v1186
      %v1399 = vsel %vm1387, %v1366, %v1188
      %v1401 = vsel %vm1387, %v1368, %v1190
      %v1403 = vsel %vm1387, %v1370, %v1192
      %v1405 = vsel %vm1387, %v1372, %v1194
      %v1407 = vsel %vm1387, %v1374, %v1196
      %v1409 = vsel %vm1387, %v1376, %v1198
      %v1411 = vsel %vm1387, %v1378, %v1200
      %v1413 = vsel %vm1387, %v1380, %v1202
      %v1415 = vsel %vm1387, %v1382, %v1204
      %v1417 = vsel %vm1387, %v1384, %v1206
      %v1419 = vsel %vm1387, %v1386, %v1208
      %vm1420 = vcmask 785408
      %v1422 = vsel %vm1420, %v1389, %v1211
      %v1425 = vsel %vm1420, %v1391, %v1213
      %v1428 = vsel %vm1420, %v1393, %v1215
      %v1431 = vsel %vm1420, %v1395, %v1217
      %v1434 = vsel %vm1420, %v1397, %v1219
      %v1437 = vsel %vm1420, %v1399, %v1221
      %v1440 = vsel %vm1420, %v1401, %v1223
      %v1443 = vsel %vm1420, %v1403, %v1225
      %v1446 = vsel %vm1420, %v1405, %v1227
      %v1449 = vsel %vm1420, %v1407, %v1229
      %v1452 = vsel %vm1420, %v1409, %v1231
      %v1455 = vsel %vm1420, %v1411, %v1233
      %v1458 = vsel %vm1420, %v1413, %v1235
      %v1461 = vsel %vm1420, %v1415, %v1237
      %v1464 = vsel %vm1420, %v1417, %v1239
      %v1467 = vsel %vm1420, %v1419, %v1241
      %v1471 = vsel %vm1354, %v895, %v1259
      %v1474 = vsel %vm1354, %v907, %v1261
      %v1477 = vsel %vm1354, %v919, %v1263
      %v1480 = vsel %vm1354, %v931, %v1265
      %v1483 = vsel %vm1354, %v943, %v1267
      %v1486 = vsel %vm1354, %v955, %v1269
      %v1489 = vsel %vm1354, %v967, %v1271
      %v1492 = vsel %vm1354, %v979, %v1273
      %v1495 = vsel %vm1354, %v991, %v1275
      %v1498 = vsel %vm1354, %v1003, %v1277
      %v1501 = vsel %vm1354, %v1015, %v1279
      %v1504 = vsel %vm1354, %v1027, %v1281
      %v1507 = vsel %vm1354, %v1039, %v1283
      %v1510 = vsel %vm1354, %v1051, %v1285
      %v1513 = vsel %vm1354, %v1063, %v1287
      %v1516 = vsel %vm1354, %v1253, %v1289
      %v1518 = vsel %vm1387, %v1471, %v1291
      %v1520 = vsel %vm1387, %v1474, %v1293
      %v1522 = vsel %vm1387, %v1477, %v1295
      %v1524 = vsel %vm1387, %v1480, %v1297
      %v1526 = vsel %vm1387, %v1483, %v1299
      %v1528 = vsel %vm1387, %v1486, %v1301
      %v1530 = vsel %vm1387, %v1489, %v1303
      %v1532 = vsel %vm1387, %v1492, %v1305
      %v1534 = vsel %vm1387, %v1495, %v1307
      %v1536 = vsel %vm1387, %v1498, %v1309
      %v1538 = vsel %vm1387, %v1501, %v1311
      %v1540 = vsel %vm1387, %v1504, %v1313
      %v1542 = vsel %vm1387, %v1507, %v1315
      %v1544 = vsel %vm1387, %v1510, %v1317
      %v1546 = vsel %vm1387, %v1513, %v1319
      %v1548 = vsel %vm1387, %v1516, %v1321
      %v1550 = vsel %vm1420, %v1518, %v1323
      %v1553 = vsel %vm1420, %v1520, %v1325
      %v1556 = vsel %vm1420, %v1522, %v1327
      %v1559 = vsel %vm1420, %v1524, %v1329
      %v1562 = vsel %vm1420, %v1526, %v1331
      %v1565 = vsel %vm1420, %v1528, %v1333
      %v1568 = vsel %vm1420, %v1530, %v1335
      %v1571 = vsel %vm1420, %v1532, %v1337
      %v1574 = vsel %vm1420, %v1534, %v1339
      %v1577 = vsel %vm1420, %v1536, %v1341
      %v1580 = vsel %vm1420, %v1538, %v1343
      %v1583 = vsel %vm1420, %v1540, %v1345
      %v1586 = vsel %vm1420, %v1542, %v1347
      %v1589 = vsel %vm1420, %v1544, %v1349
      %v1592 = vsel %vm1420, %v1546, %v1351
      %v1595 = vsel %vm1420, %v1548, %v1353
      %v1597 = vld [vmem:[%s3] sm:$0xf]
      %v1598 = vld [vmem:[%s3 + $0x4] sm:$0xf]
      %v1599 = vld [vmem:[%s3 + $0x8] sm:$0xf]
      %v1600 = vld [vmem:[%s3 + $0xc] sm:$0xf]
      %v1601 = vld [vmem:[%s3 + $0x10] sm:$0xf]
      %v1602 = vld [vmem:[%s3 + $0x14] sm:$0xf]
      %v1603 = vld [vmem:[%s3 + $0x18] sm:$0xf]
      %v1604 = vld [vmem:[%s3 + $0x1c] sm:$0xf]
      %v1605 = vld [vmem:[%s3 + $0x20] sm:$0xf]
      %v1606 = vld [vmem:[%s3 + $0x24] sm:$0xf]
      %v1607 = vld [vmem:[%s3 + $0x28] sm:$0xf]
      %v1608 = vld [vmem:[%s3 + $0x2c] sm:$0xf]
      %v1609 = vld [vmem:[%s3 + $0x30] sm:$0xf]
      %v1610 = vld [vmem:[%s3 + $0x34] sm:$0xf]
      %v1611 = vld [vmem:[%s3 + $0x38] sm:$0xf]
      %v1612 = vld [vmem:[%s3 + $0x3c] sm:$0xf]
      %v1613 = vld [vmem:[%s3 + $0x40] sm:$0xf]
      %v1614 = vld [vmem:[%s3 + $0x44] sm:$0xf]
      %v1615 = vld [vmem:[%s3 + $0x48] sm:$0xf]
      %v1616 = vld [vmem:[%s3 + $0x4c] sm:$0xf]
      %v1617 = vld [vmem:[%s3 + $0x50] sm:$0xf]
      %v1618 = vld [vmem:[%s3 + $0x54] sm:$0xf]
      %v1619 = vld [vmem:[%s3 + $0x58] sm:$0xf]
      %v1620 = vld [vmem:[%s3 + $0x5c] sm:$0xf]
      %v1621 = vld [vmem:[%s3 + $0x60] sm:$0xf]
      %v1622 = vld [vmem:[%s3 + $0x64] sm:$0xf]
      %v1623 = vld [vmem:[%s3 + $0x68] sm:$0xf]
      %v1624 = vld [vmem:[%s3 + $0x6c] sm:$0xf]
      %v1625 = vld [vmem:[%s3 + $0x70] sm:$0xf]
      %v1626 = vld [vmem:[%s3 + $0x74] sm:$0xf]
      %v1627 = vld [vmem:[%s3 + $0x78] sm:$0xf]
      %v1628 = vld [vmem:[%s3 + $0x7c] sm:$0xf]
      %v1629 = vld [vmem:[%s3 + $0x80] sm:$0xf]
      %v1630 = vld [vmem:[%s3 + $0x84] sm:$0xf]
      %v1631 = vld [vmem:[%s3 + $0x88] sm:$0xf]
      %v1632 = vld [vmem:[%s3 + $0x8c] sm:$0xf]
      %v1633 = vld [vmem:[%s4] sm:$0x1]
      %v1635 = vlaneseq
      %v1636 = vshrl.u32 %v1635, 7
      %v1637 = vsub.s32 0, %v1636
      %v1638 = vrot.slane %v1633, %v1637
      %v1676 = vunpack.c.l.b16 %v1597
      %v1677 = vunpack.c.l.b16 %v1598
      %v1678 = vunpack.c.l.b16 %v1599
      %v1679 = vunpack.c.l.b16 %v1600
      %v1680 = vunpack.c.l.b16 %v1601
      %v1681 = vunpack.c.l.b16 %v1602
      %v1682 = vunpack.c.l.b16 %v1603
      %v1683 = vunpack.c.l.b16 %v1604
      %v1684 = vunpack.c.l.b16 %v1605
      %v1685 = vunpack.c.l.b16 %v1606
      %v1686 = vunpack.c.l.b16 %v1607
      %v1687 = vunpack.c.l.b16 %v1608
      %v1688 = vunpack.c.l.b16 %v1609
      %v1689 = vunpack.c.l.b16 %v1610
      %v1690 = vunpack.c.l.b16 %v1611
      %v1691 = vunpack.c.l.b16 %v1612
      %v1692 = vunpack.c.l.b16 %v1613
      %v1693 = vunpack.c.l.b16 %v1614
      %v1694 = vunpack.c.l.b16 %v1615
      %v1695 = vunpack.c.l.b16 %v1616
      %v1696 = vunpack.c.l.b16 %v1617
      %v1697 = vunpack.c.l.b16 %v1618
      %v1698 = vunpack.c.l.b16 %v1619
      %v1699 = vunpack.c.l.b16 %v1620
      %v1700 = vunpack.c.l.b16 %v1621
      %v1701 = vunpack.c.l.b16 %v1622
      %v1702 = vunpack.c.l.b16 %v1623
      %v1703 = vunpack.c.l.b16 %v1624
      %v1704 = vunpack.c.l.b16 %v1625
      %v1705 = vunpack.c.l.b16 %v1626
      %v1706 = vunpack.c.l.b16 %v1627
      %v1707 = vunpack.c.l.b16 %v1628
      %v1708 = vunpack.c.l.b16 %v1629
      %v1709 = vunpack.c.l.b16 %v1630
      %v1710 = vunpack.c.l.b16 %v1631
      %v1711 = vunpack.c.l.b16 %v1632
      %v1712 = vpack.c.b16 %v1677, %v1676
      %v1713 = vpack.c.b16 %v1679, %v1678
      %v1714 = vpack.c.b16 %v1681, %v1680
      %v1715 = vpack.c.b16 %v1683, %v1682
      %v1716 = vpack.c.b16 %v1685, %v1684
      %v1717 = vpack.c.b16 %v1687, %v1686
      %v1718 = vpack.c.b16 %v1689, %v1688
      %v1719 = vpack.c.b16 %v1691, %v1690
      %v1720 = vpack.c.b16 %v1693, %v1692
      %v1721 = vpack.c.b16 %v1695, %v1694
      %v1722 = vpack.c.b16 %v1697, %v1696
      %v1723 = vpack.c.b16 %v1699, %v1698
      %v1724 = vpack.c.b16 %v1701, %v1700
      %v1725 = vpack.c.b16 %v1703, %v1702
      %v1726 = vpack.c.b16 %v1705, %v1704
      %v1727 = vpack.c.b16 %v1707, %v1706
      %v1728 = vpack.c.b16 %v1709, %v1708
      %v1729 = vpack.c.b16 %v1711, %v1710
      %v1749 = vsel %vm1354, %v1137, 0
      %v1752 = vsel %vm1354, %v1140, 0
      %v1755 = vsel %vm1354, %v1143, 0
      %v1758 = vsel %vm1354, %v1146, 0
      %v1761 = vsel %vm1354, %v1149, 0
      %v1764 = vsel %vm1354, %v1152, 0
      %v1767 = vsel %vm1354, %v1155, 0
      %v1770 = vsel %vm1354, %v1158, 0
      %v1773 = vsel %vm1354, %v1161, 0
      %v1776 = vsel %vm1354, %v1164, 0
      %v1779 = vsel %vm1354, %v1167, 0
      %v1782 = vsel %vm1354, %v1170, 0
      %v1785 = vsel %vm1354, %v1173, 0
      %v1788 = vsel %vm1354, %v1176, 0
      %v1791 = vsel %vm1354, %v1257, 0
      %v1794 = vsel %vm1354, %v1131, 0
      %1796 = vmatprep.subr.bf16.mxu0 0
      %1797 = vmatpush1.bf16.msra.mxu0 %v1719
      %1798 = vmatprep.subr.bf16.mxu0 0
      %1799 = vmatpush1.bf16.msra.mxu0 %v1718
      %1800 = vmatprep.subr.bf16.mxu0 0
      %1801 = vmatpush1.bf16.msra.mxu0 %v1717
      %1802 = vmatprep.subr.bf16.mxu0 0
      %1803 = vmatpush1.bf16.msra.mxu0 %v1716
      %1804 = vmatprep.subr.bf16.mxu0 0
      %1805 = vmatpush1.bf16.msra.mxu0 %v1715
      %1806 = vmatprep.subr.bf16.mxu0 0
      %1807 = vmatpush1.bf16.msra.mxu0 %v1714
      %1808 = vmatprep.subr.bf16.mxu0 0
      %1809 = vmatpush1.bf16.msra.mxu0 %v1713
      %1810 = vmatprep.subr.bf16.mxu0 0
      %1811 = vmatpush1.bf16.msra.mxu0 %v1712
      %1812 = vmatprep.subr.bf16.mxu0 0
      %1813 = vmatpush2.bf16.msra.mxu0 %v1727
      %1814 = vmatprep.subr.bf16.mxu0 0
      %1815 = vmatpush2.bf16.msra.mxu0 %v1726
      %1816 = vmatprep.subr.bf16.mxu0 0
      %1817 = vmatpush2.bf16.msra.mxu0 %v1725
      %1818 = vmatprep.subr.bf16.mxu0 0
      %1819 = vmatpush2.bf16.msra.mxu0 %v1724
      %1820 = vmatprep.subr.bf16.mxu0 0
      %1821 = vmatpush2.bf16.msra.mxu0 %v1723
      %1822 = vmatprep.subr.bf16.mxu0 0
      %1823 = vmatpush2.bf16.msra.mxu0 %v1722
      %1824 = vmatprep.subr.bf16.mxu0 0
      %1825 = vmatpush2.bf16.msra.mxu0 %v1721
      %1826 = vmatprep.subr.bf16.mxu0 0
      %1827 = vmatpush2.bf16.msra.mxu0 %v1720
      %1828 = vmatprep.mubr.bf16.mxu0 %v1550
      %1829 = vmatmul.mubr.bf16.gmra.mxu0 %v1422
      %v1830 = vpop.f32.mrf.mxu0
      %v1831 = vadd.f32 %v1638, %v1830
      %v1832 = vpop.f32.mrf.mxu0
      %v1833 = vpop.f32.mrf.mxu0
      %v1834 = vadd.f32 %v1638, %v1833
      %v1835 = vpop.f32.mrf.mxu0
      %1836 = vmatprep.mubr.bf16.mxu0 %v1553
      %1837 = vmatmul.mubr.bf16.gmra.mxu0 %v1425
      %v1838 = vpop.f32.mrf.mxu0
      %v1839 = vadd.f32 %v1638, %v1838
      %v1840 = vpop.f32.mrf.mxu0
      %v1841 = vpop.f32.mrf.mxu0
      %v1842 = vadd.f32 %v1638, %v1841
      %v1843 = vpop.f32.mrf.mxu0
      %1844 = vmatprep.mubr.bf16.mxu0 %v1556
      %1845 = vmatmul.mubr.bf16.gmra.mxu0 %v1428
      %v1846 = vpop.f32.mrf.mxu0
      %v1847 = vadd.f32 %v1638, %v1846
      %v1848 = vpop.f32.mrf.mxu0
      %v1849 = vpop.f32.mrf.mxu0
      %v1850 = vadd.f32 %v1638, %v1849
      %v1851 = vpop.f32.mrf.mxu0
      %1852 = vmatprep.mubr.bf16.mxu0 %v1559
      %1853 = vmatmul.mubr.bf16.gmra.mxu0 %v1431
      %v1854 = vpop.f32.mrf.mxu0
      %v1855 = vadd.f32 %v1638, %v1854
      %v1856 = vpop.f32.mrf.mxu0
      %v1857 = vpop.f32.mrf.mxu0
      %v1858 = vadd.f32 %v1638, %v1857
      %v1859 = vpop.f32.mrf.mxu0
      %1860 = vmatprep.mubr.bf16.mxu0 %v1562
      %1861 = vmatmul.mubr.bf16.gmra.mxu0 %v1434
      %v1862 = vpop.f32.mrf.mxu0
      %v1863 = vadd.f32 %v1638, %v1862
      %v1864 = vpop.f32.mrf.mxu0
      %v1865 = vpop.f32.mrf.mxu0
      %v1866 = vadd.f32 %v1638, %v1865
      %v1867 = vpop.f32.mrf.mxu0
      %1868 = vmatprep.mubr.bf16.mxu0 %v1565
      %1869 = vmatmul.mubr.bf16.gmra.mxu0 %v1437
      %v1870 = vpop.f32.mrf.mxu0
      %v1871 = vadd.f32 %v1638, %v1870
      %v1872 = vpop.f32.mrf.mxu0
      %v1873 = vpop.f32.mrf.mxu0
      %v1874 = vadd.f32 %v1638, %v1873
      %v1875 = vpop.f32.mrf.mxu0
      %1876 = vmatprep.mubr.bf16.mxu0 %v1568
      %1877 = vmatmul.mubr.bf16.gmra.mxu0 %v1440
      %v1878 = vpop.f32.mrf.mxu0
      %v1879 = vadd.f32 %v1638, %v1878
      %v1880 = vpop.f32.mrf.mxu0
      %v1881 = vpop.f32.mrf.mxu0
      %v1882 = vadd.f32 %v1638, %v1881
      %v1883 = vpop.f32.mrf.mxu0
      %1884 = vmatprep.mubr.bf16.mxu0 %v1571
      %1885 = vmatmul.mubr.bf16.gmra.mxu0 %v1443
      %v1886 = vpop.f32.mrf.mxu0
      %v1887 = vadd.f32 %v1638, %v1886
      %v1888 = vpop.f32.mrf.mxu0
      %v1889 = vpop.f32.mrf.mxu0
      %v1890 = vadd.f32 %v1638, %v1889
      %v1891 = vpop.f32.mrf.mxu0
      %1892 = vmatprep.mubr.bf16.mxu0 %v1574
      %1893 = vmatmul.mubr.bf16.gmra.mxu0 %v1446
      %v1894 = vpop.f32.mrf.mxu0
      %v1895 = vadd.f32 %v1638, %v1894
      %v1896 = vpop.f32.mrf.mxu0
      %v1897 = vpop.f32.mrf.mxu0
      %v1898 = vadd.f32 %v1638, %v1897
      %v1899 = vpop.f32.mrf.mxu0
      %1900 = vmatprep.mubr.bf16.mxu0 %v1577
      %1901 = vmatmul.mubr.bf16.gmra.mxu0 %v1449
      %v1902 = vpop.f32.mrf.mxu0
      %v1903 = vadd.f32 %v1638, %v1902
      %v1904 = vpop.f32.mrf.mxu0
      %v1905 = vpop.f32.mrf.mxu0
      %v1906 = vadd.f32 %v1638, %v1905
      %v1907 = vpop.f32.mrf.mxu0
      %1908 = vmatprep.mubr.bf16.mxu0 %v1580
      %1909 = vmatmul.mubr.bf16.gmra.mxu0 %v1452
      %v1910 = vpop.f32.mrf.mxu0
      %v1911 = vadd.f32 %v1638, %v1910
      %v1912 = vpop.f32.mrf.mxu0
      %v1913 = vpop.f32.mrf.mxu0
      %v1914 = vadd.f32 %v1638, %v1913
      %v1915 = vpop.f32.mrf.mxu0
      %1916 = vmatprep.mubr.bf16.mxu0 %v1583
      %1917 = vmatmul.mubr.bf16.gmra.mxu0 %v1455
      %v1918 = vpop.f32.mrf.mxu0
      %v1919 = vadd.f32 %v1638, %v1918
      %v1920 = vpop.f32.mrf.mxu0
      %v1921 = vpop.f32.mrf.mxu0
      %v1922 = vadd.f32 %v1638, %v1921
      %v1923 = vpop.f32.mrf.mxu0
      %1924 = vmatprep.mubr.bf16.mxu0 %v1586
      %1925 = vmatmul.mubr.bf16.gmra.mxu0 %v1458
      %v1926 = vpop.f32.mrf.mxu0
      %v1927 = vadd.f32 %v1638, %v1926
      %v1928 = vpop.f32.mrf.mxu0
      %v1929 = vpop.f32.mrf.mxu0
      %v1930 = vadd.f32 %v1638, %v1929
      %v1931 = vpop.f32.mrf.mxu0
      %1932 = vmatprep.mubr.bf16.mxu0 %v1589
      %1933 = vmatmul.mubr.bf16.gmra.mxu0 %v1461
      %v1934 = vpop.f32.mrf.mxu0
      %v1935 = vadd.f32 %v1638, %v1934
      %v1936 = vpop.f32.mrf.mxu0
      %v1937 = vpop.f32.mrf.mxu0
      %v1938 = vadd.f32 %v1638, %v1937
      %v1939 = vpop.f32.mrf.mxu0
      %1940 = vmatprep.mubr.bf16.mxu0 %v1592
      %1941 = vmatmul.mubr.bf16.gmra.mxu0 %v1464
      %v1942 = vpop.f32.mrf.mxu0
      %v1943 = vadd.f32 %v1638, %v1942
      %v1944 = vpop.f32.mrf.mxu0
      %v1945 = vpop.f32.mrf.mxu0
      %v1946 = vadd.f32 %v1638, %v1945
      %v1947 = vpop.f32.mrf.mxu0
      %1948 = vmatprep.mubr.bf16.mxu0 %v1595
      %1949 = vmatmul.mubr.bf16.gmra.mxu0 %v1467
      %v1950 = vpop.f32.mrf.mxu0
      %v1951 = vadd.f32 %v1638, %v1950
      %v1952 = vpop.f32.mrf.mxu0
      %v1953 = vpop.f32.mrf.mxu0
      %v1954 = vadd.f32 %v1638, %v1953
      %v1955 = vpop.f32.mrf.mxu0
      %1956 = vdwg.mxu0
      %1957 = vmatprep.subr.bf16.mxu0 0
      %1958 = vmatpush1.bf16.msra.mxu0 0
      %1959 = vmatprep.subr.bf16.mxu0 0
      %1960 = vmatpush1.bf16.msra.mxu0 0
      %1961 = vmatprep.subr.bf16.mxu0 0
      %1962 = vmatpush1.bf16.msra.mxu0 0
      %1963 = vmatprep.subr.bf16.mxu0 0
      %1964 = vmatpush1.bf16.msra.mxu0 0
      %1965 = vmatprep.subr.bf16.mxu0 0
      %1966 = vmatpush1.bf16.msra.mxu0 0
      %1967 = vmatprep.subr.bf16.mxu0 0
      %1968 = vmatpush1.bf16.msra.mxu0 0
      %1969 = vmatprep.subr.bf16.mxu0 0
      %1970 = vmatpush1.bf16.msra.mxu0 %v1729
      %1971 = vmatprep.subr.bf16.mxu0 0
      %1972 = vmatpush1.bf16.msra.mxu0 %v1728
      %1973 = vmatprep.subr.bf16.mxu0 0
      %1974 = vmatpush2.bf16.msra.mxu0 0
      %1975 = vmatprep.subr.bf16.mxu0 0
      %1976 = vmatpush2.bf16.msra.mxu0 0
      %1977 = vmatprep.subr.bf16.mxu0 0
      %1978 = vmatpush2.bf16.msra.mxu0 0
      %1979 = vmatprep.subr.bf16.mxu0 0
      %1980 = vmatpush2.bf16.msra.mxu0 0
      %1981 = vmatprep.subr.bf16.mxu0 0
      %1982 = vmatpush2.bf16.msra.mxu0 0
      %1983 = vmatprep.subr.bf16.mxu0 0
      %1984 = vmatpush2.bf16.msra.mxu0 0
      %1985 = vmatprep.subr.bf16.mxu0 0
      %1986 = vmatpush2.bf16.msra.mxu0 0
      %1987 = vmatprep.subr.bf16.mxu0 0
      %1988 = vmatpush2.bf16.msra.mxu0 0
      %1989 = vmatprep.mubr.bf16.mxu0 0
      %1990 = vmatmul.mubr.bf16.gmra.mxu0 %v1749
      %v1991 = vpop.f32.mrf.mxu0
      %v1992 = vadd.f32 %v1831, %v1991
      %v1993 = vpop.f32.mrf.mxu0
      %v1994 = vpop.f32.mrf.mxu0
      %v1995 = vadd.f32 %v1834, %v1994
      %v1996 = vpop.f32.mrf.mxu0
      %1997 = vmatprep.mubr.bf16.mxu0 0
      %1998 = vmatmul.mubr.bf16.gmra.mxu0 %v1752
      %v1999 = vpop.f32.mrf.mxu0
      %v2000 = vadd.f32 %v1839, %v1999
      %v2001 = vpop.f32.mrf.mxu0
      %v2002 = vpop.f32.mrf.mxu0
      %v2003 = vadd.f32 %v1842, %v2002
      %v2004 = vpop.f32.mrf.mxu0
      %2005 = vmatprep.mubr.bf16.mxu0 0
      %2006 = vmatmul.mubr.bf16.gmra.mxu0 %v1755
      %v2007 = vpop.f32.mrf.mxu0
      %v2008 = vadd.f32 %v1847, %v2007
      %v2009 = vpop.f32.mrf.mxu0
      %v2010 = vpop.f32.mrf.mxu0
      %v2011 = vadd.f32 %v1850, %v2010
      %v2012 = vpop.f32.mrf.mxu0
      %2013 = vmatprep.mubr.bf16.mxu0 0
      %2014 = vmatmul.mubr.bf16.gmra.mxu0 %v1758
      %v2015 = vpop.f32.mrf.mxu0
      %v2016 = vadd.f32 %v1855, %v2015
      %v2017 = vpop.f32.mrf.mxu0
      %v2018 = vpop.f32.mrf.mxu0
      %v2019 = vadd.f32 %v1858, %v2018
      %v2020 = vpop.f32.mrf.mxu0
      %2021 = vmatprep.mubr.bf16.mxu0 0
      %2022 = vmatmul.mubr.bf16.gmra.mxu0 %v1761
      %v2023 = vpop.f32.mrf.mxu0
      %v2024 = vadd.f32 %v1863, %v2023
      %v2025 = vpop.f32.mrf.mxu0
      %v2026 = vpop.f32.mrf.mxu0
      %v2027 = vadd.f32 %v1866, %v2026
      %v2028 = vpop.f32.mrf.mxu0
      %2029 = vmatprep.mubr.bf16.mxu0 0
      %2030 = vmatmul.mubr.bf16.gmra.mxu0 %v1764
      %v2031 = vpop.f32.mrf.mxu0
      %v2032 = vadd.f32 %v1871, %v2031
      %v2033 = vpop.f32.mrf.mxu0
      %v2034 = vpop.f32.mrf.mxu0
      %v2035 = vadd.f32 %v1874, %v2034
      %v2036 = vpop.f32.mrf.mxu0
      %2037 = vmatprep.mubr.bf16.mxu0 0
      %2038 = vmatmul.mubr.bf16.gmra.mxu0 %v1767
      %v2039 = vpop.f32.mrf.mxu0
      %v2040 = vadd.f32 %v1879, %v2039
      %v2041 = vpop.f32.mrf.mxu0
      %v2042 = vpop.f32.mrf.mxu0
      %v2043 = vadd.f32 %v1882, %v2042
      %v2044 = vpop.f32.mrf.mxu0
      %2045 = vmatprep.mubr.bf16.mxu0 0
      %2046 = vmatmul.mubr.bf16.gmra.mxu0 %v1770
      %v2047 = vpop.f32.mrf.mxu0
      %v2048 = vadd.f32 %v1887, %v2047
      %v2049 = vpop.f32.mrf.mxu0
      %v2050 = vpop.f32.mrf.mxu0
      %v2051 = vadd.f32 %v1890, %v2050
      %v2052 = vpop.f32.mrf.mxu0
      %2053 = vmatprep.mubr.bf16.mxu0 0
      %2054 = vmatmul.mubr.bf16.gmra.mxu0 %v1773
      %v2055 = vpop.f32.mrf.mxu0
      %v2056 = vadd.f32 %v1895, %v2055
      %v2057 = vpop.f32.mrf.mxu0
      %v2058 = vpop.f32.mrf.mxu0
      %v2059 = vadd.f32 %v1898, %v2058
      %v2060 = vpop.f32.mrf.mxu0
      %2061 = vmatprep.mubr.bf16.mxu0 0
      %2062 = vmatmul.mubr.bf16.gmra.mxu0 %v1776
      %v2063 = vpop.f32.mrf.mxu0
      %v2064 = vadd.f32 %v1903, %v2063
      %v2065 = vpop.f32.mrf.mxu0
      %v2066 = vpop.f32.mrf.mxu0
      %v2067 = vadd.f32 %v1906, %v2066
      %v2068 = vpop.f32.mrf.mxu0
      %2069 = vmatprep.mubr.bf16.mxu0 0
      %2070 = vmatmul.mubr.bf16.gmra.mxu0 %v1779
      %v2071 = vpop.f32.mrf.mxu0
      %v2072 = vadd.f32 %v1911, %v2071
      %v2073 = vpop.f32.mrf.mxu0
      %v2074 = vpop.f32.mrf.mxu0
      %v2075 = vadd.f32 %v1914, %v2074
      %v2076 = vpop.f32.mrf.mxu0
      %2077 = vmatprep.mubr.bf16.mxu0 0
      %2078 = vmatmul.mubr.bf16.gmra.mxu0 %v1782
      %v2079 = vpop.f32.mrf.mxu0
      %v2080 = vadd.f32 %v1919, %v2079
      %v2081 = vpop.f32.mrf.mxu0
      %v2082 = vpop.f32.mrf.mxu0
      %v2083 = vadd.f32 %v1922, %v2082
      %v2084 = vpop.f32.mrf.mxu0
      %2085 = vmatprep.mubr.bf16.mxu0 0
      %2086 = vmatmul.mubr.bf16.gmra.mxu0 %v1785
      %v2087 = vpop.f32.mrf.mxu0
      %v2088 = vadd.f32 %v1927, %v2087
      %v2089 = vpop.f32.mrf.mxu0
      %v2090 = vpop.f32.mrf.mxu0
      %v2091 = vadd.f32 %v1930, %v2090
      %v2092 = vpop.f32.mrf.mxu0
      %2093 = vmatprep.mubr.bf16.mxu0 0
      %2094 = vmatmul.mubr.bf16.gmra.mxu0 %v1788
      %v2095 = vpop.f32.mrf.mxu0
      %v2096 = vadd.f32 %v1935, %v2095
      %v2097 = vpop.f32.mrf.mxu0
      %v2098 = vpop.f32.mrf.mxu0
      %v2099 = vadd.f32 %v1938, %v2098
      %v2100 = vpop.f32.mrf.mxu0
      %2101 = vmatprep.mubr.bf16.mxu0 0
      %2102 = vmatmul.mubr.bf16.gmra.mxu0 %v1791
      %v2103 = vpop.f32.mrf.mxu0
      %v2104 = vadd.f32 %v1943, %v2103
      %v2105 = vpop.f32.mrf.mxu0
      %v2106 = vpop.f32.mrf.mxu0
      %v2107 = vadd.f32 %v1946, %v2106
      %v2108 = vpop.f32.mrf.mxu0
      %2109 = vmatprep.mubr.bf16.mxu0 0
      %2110 = vmatmul.mubr.bf16.gmra.mxu0 %v1794
      %v2111 = vpop.f32.mrf.mxu0
      %v2112 = vadd.f32 %v1951, %v2111
      %v2113 = vpop.f32.mrf.mxu0
      %v2114 = vpop.f32.mrf.mxu0
      %v2115 = vadd.f32 %v1954, %v2114
      %v2116 = vpop.f32.mrf.mxu0
      %2117 = vdwg.mxu0
      %v2118 = vmax.f32 %v1992, 0.0
      %v2119 = vmax.f32 %v1995, 0.0
      %v2120 = vmax.f32 %v2000, 0.0
      %v2121 = vmax.f32 %v2003, 0.0
      %v2122 = vmax.f32 %v2008, 0.0
      %v2123 = vmax.f32 %v2011, 0.0
      %v2124 = vmax.f32 %v2016, 0.0
      %v2125 = vmax.f32 %v2019, 0.0
      %v2126 = vmax.f32 %v2024, 0.0
      %v2127 = vmax.f32 %v2027, 0.0
      %v2128 = vmax.f32 %v2032, 0.0
      %v2129 = vmax.f32 %v2035, 0.0
      %v2130 = vmax.f32 %v2040, 0.0
      %v2131 = vmax.f32 %v2043, 0.0
      %v2132 = vmax.f32 %v2048, 0.0
      %v2133 = vmax.f32 %v2051, 0.0
      %v2134 = vmax.f32 %v2056, 0.0
      %v2135 = vmax.f32 %v2059, 0.0
      %v2136 = vmax.f32 %v2064, 0.0
      %v2137 = vmax.f32 %v2067, 0.0
      %v2138 = vmax.f32 %v2072, 0.0
      %v2139 = vmax.f32 %v2075, 0.0
      %v2140 = vmax.f32 %v2080, 0.0
      %v2141 = vmax.f32 %v2083, 0.0
      %v2142 = vmax.f32 %v2088, 0.0
      %v2143 = vmax.f32 %v2091, 0.0
      %v2144 = vmax.f32 %v2096, 0.0
      %v2145 = vmax.f32 %v2099, 0.0
      %v2146 = vmax.f32 %v2104, 0.0
      %v2147 = vmax.f32 %v2107, 0.0
      %v2148 = vmax.f32 %v2112, 0.0
      %v2149 = vmax.f32 %v2115, 0.0
      %v2150 = vpack.c.bf16 %v2119, %v2118
      %v2151 = vpack.c.bf16 %v2121, %v2120
      %v2152 = vpack.c.bf16 %v2123, %v2122
      %v2153 = vpack.c.bf16 %v2125, %v2124
      %v2154 = vpack.c.bf16 %v2127, %v2126
      %v2155 = vpack.c.bf16 %v2129, %v2128
      %v2156 = vpack.c.bf16 %v2131, %v2130
      %v2157 = vpack.c.bf16 %v2133, %v2132
      %v2158 = vpack.c.bf16 %v2135, %v2134
      %v2159 = vpack.c.bf16 %v2137, %v2136
      %v2160 = vpack.c.bf16 %v2139, %v2138
      %v2161 = vpack.c.bf16 %v2141, %v2140
      %v2162 = vpack.c.bf16 %v2143, %v2142
      %v2163 = vpack.c.bf16 %v2145, %v2144
      %v2164 = vpack.c.bf16 %v2147, %v2146
      %v2165 = vpack.c.bf16 %v2149, %v2148
      %v2167 = vshrl.u32 %v2150, 16
      %v2169 = vrot.slane %v2167, 7
      %v2170 = vshll.u32 %v2150, 16
      %v2172 = vor.u32 %v2169, %v2170
      %v2174 = vshrl.u32 %v2151, 16
      %v2176 = vrot.slane %v2174, 7
      %v2177 = vshll.u32 %v2151, 16
      %v2179 = vor.u32 %v2176, %v2177
      %v2181 = vshrl.u32 %v2152, 16
      %v2183 = vrot.slane %v2181, 7
      %v2184 = vshll.u32 %v2152, 16
      %v2186 = vor.u32 %v2183, %v2184
      %v2188 = vshrl.u32 %v2153, 16
      %v2190 = vrot.slane %v2188, 7
      %v2191 = vshll.u32 %v2153, 16
      %v2193 = vor.u32 %v2190, %v2191
      %v2195 = vshrl.u32 %v2154, 16
      %v2197 = vrot.slane %v2195, 7
      %v2198 = vshll.u32 %v2154, 16
      %v2200 = vor.u32 %v2197, %v2198
      %v2202 = vshrl.u32 %v2155, 16
      %v2204 = vrot.slane %v2202, 7
      %v2205 = vshll.u32 %v2155, 16
      %v2207 = vor.u32 %v2204, %v2205
      %v2209 = vshrl.u32 %v2156, 16
      %v2211 = vrot.slane %v2209, 7
      %v2212 = vshll.u32 %v2156, 16
      %v2214 = vor.u32 %v2211, %v2212
      %v2216 = vshrl.u32 %v2157, 16
      %v2218 = vrot.slane %v2216, 7
      %v2219 = vshll.u32 %v2157, 16
      %v2221 = vor.u32 %v2218, %v2219
      %v2223 = vshrl.u32 %v2158, 16
      %v2225 = vrot.slane %v2223, 7
      %v2226 = vshll.u32 %v2158, 16
      %v2228 = vor.u32 %v2225, %v2226
      %v2230 = vshrl.u32 %v2159, 16
      %v2232 = vrot.slane %v2230, 7
      %v2233 = vshll.u32 %v2159, 16
      %v2235 = vor.u32 %v2232, %v2233
      %v2237 = vshrl.u32 %v2160, 16
      %v2239 = vrot.slane %v2237, 7
      %v2240 = vshll.u32 %v2160, 16
      %v2242 = vor.u32 %v2239, %v2240
      %v2244 = vshrl.u32 %v2161, 16
      %v2246 = vrot.slane %v2244, 7
      %v2247 = vshll.u32 %v2161, 16
      %v2249 = vor.u32 %v2246, %v2247
      %v2251 = vshrl.u32 %v2162, 16
      %v2253 = vrot.slane %v2251, 7
      %v2254 = vshll.u32 %v2162, 16
      %v2256 = vor.u32 %v2253, %v2254
      %v2258 = vshrl.u32 %v2163, 16
      %v2260 = vrot.slane %v2258, 7
      %v2261 = vshll.u32 %v2163, 16
      %v2263 = vor.u32 %v2260, %v2261
      %v2265 = vshrl.u32 %v2164, 16
      %v2267 = vrot.slane %v2265, 7
      %v2268 = vshll.u32 %v2164, 16
      %v2270 = vor.u32 %v2267, %v2268
      %v2272 = vshrl.u32 %v2165, 16
      %v2274 = vrot.slane %v2272, 7
      %v2275 = vshll.u32 %v2165, 16
      %v2277 = vor.u32 %v2274, %v2275
      %v2310 = vsel %vm836, 0, %v2172
      %v2311 = vsel %vm836, 0, %v2179
      %v2312 = vsel %vm836, 0, %v2186
      %v2313 = vsel %vm836, 0, %v2193
      %v2314 = vsel %vm836, 0, %v2200
      %v2315 = vsel %vm836, 0, %v2207
      %v2316 = vsel %vm836, 0, %v2214
      %v2317 = vsel %vm836, 0, %v2221
      %v2318 = vsel %vm836, 0, %v2228
      %v2319 = vsel %vm836, 0, %v2235
      %v2320 = vsel %vm836, 0, %v2242
      %v2321 = vsel %vm836, 0, %v2249
      %v2322 = vsel %vm836, 0, %v2256
      %v2323 = vsel %vm836, 0, %v2263
      %v2324 = vsel %vm836, 0, %v2270
      %v2325 = vsel %vm836, 0, %v2277
      %v2326 = vsel %vm836, %v2169, 0
      %v2327 = vsel %vm836, %v2176, 0
      %v2328 = vsel %vm836, %v2183, 0
      %v2329 = vsel %vm836, %v2190, 0
      %v2330 = vsel %vm836, %v2197, 0
      %v2331 = vsel %vm836, %v2204, 0
      %v2332 = vsel %vm836, %v2211, 0
      %v2333 = vsel %vm836, %v2218, 0
      %v2334 = vsel %vm836, %v2225, 0
      %v2335 = vsel %vm836, %v2232, 0
      %v2336 = vsel %vm836, %v2239, 0
      %v2337 = vsel %vm836, %v2246, 0
      %v2338 = vsel %vm836, %v2253, 0
      %v2339 = vsel %vm836, %v2260, 0
      %v2340 = vsel %vm836, %v2267, 0
      %v2341 = vsel %vm836, %v2274, 0
      %v2343 = vshrl.u32 %v2310, 16
      %v2345 = vshll.u32 %v2310, 16
      %v2347 = vrot.slane %v2345, 1
      %v2348 = vor.u32 %v2343, %v2347
      %v2350 = vshll.u32 %v2326, 16
      %v2352 = vrot.slane %v2350, 1
      %v2353 = vsel %vm871, %v2348, %v2352
      %v2355 = vshrl.u32 %v2311, 16
      %v2357 = vshll.u32 %v2311, 16
      %v2359 = vrot.slane %v2357, 1
      %v2360 = vor.u32 %v2355, %v2359
      %v2362 = vshll.u32 %v2327, 16
      %v2364 = vrot.slane %v2362, 1
      %v2365 = vsel %vm871, %v2360, %v2364
      %v2367 = vshrl.u32 %v2312, 16
      %v2369 = vshll.u32 %v2312, 16
      %v2371 = vrot.slane %v2369, 1
      %v2372 = vor.u32 %v2367, %v2371
      %v2374 = vshll.u32 %v2328, 16
      %v2376 = vrot.slane %v2374, 1
      %v2377 = vsel %vm871, %v2372, %v2376
      %v2379 = vshrl.u32 %v2313, 16
      %v2381 = vshll.u32 %v2313, 16
      %v2383 = vrot.slane %v2381, 1
      %v2384 = vor.u32 %v2379, %v2383
      %v2386 = vshll.u32 %v2329, 16
      %v2388 = vrot.slane %v2386, 1
      %v2389 = vsel %vm871, %v2384, %v2388
      %v2391 = vshrl.u32 %v2314, 16
      %v2393 = vshll.u32 %v2314, 16
      %v2395 = vrot.slane %v2393, 1
      %v2396 = vor.u32 %v2391, %v2395
      %v2398 = vshll.u32 %v2330, 16
      %v2400 = vrot.slane %v2398, 1
      %v2401 = vsel %vm871, %v2396, %v2400
      %v2403 = vshrl.u32 %v2315, 16
      %v2405 = vshll.u32 %v2315, 16
      %v2407 = vrot.slane %v2405, 1
      %v2408 = vor.u32 %v2403, %v2407
      %v2410 = vshll.u32 %v2331, 16
      %v2412 = vrot.slane %v2410, 1
      %v2413 = vsel %vm871, %v2408, %v2412
      %v2415 = vshrl.u32 %v2316, 16
      %v2417 = vshll.u32 %v2316, 16
      %v2419 = vrot.slane %v2417, 1
      %v2420 = vor.u32 %v2415, %v2419
      %v2422 = vshll.u32 %v2332, 16
      %v2424 = vrot.slane %v2422, 1
      %v2425 = vsel %vm871, %v2420, %v2424
      %v2427 = vshrl.u32 %v2317, 16
      %v2429 = vshll.u32 %v2317, 16
      %v2431 = vrot.slane %v2429, 1
      %v2432 = vor.u32 %v2427, %v2431
      %v2434 = vshll.u32 %v2333, 16
      %v2436 = vrot.slane %v2434, 1
      %v2437 = vsel %vm871, %v2432, %v2436
      %v2439 = vshrl.u32 %v2318, 16
      %v2441 = vshll.u32 %v2318, 16
      %v2443 = vrot.slane %v2441, 1
      %v2444 = vor.u32 %v2439, %v2443
      %v2446 = vshll.u32 %v2334, 16
      %v2448 = vrot.slane %v2446, 1
      %v2449 = vsel %vm871, %v2444, %v2448
      %v2451 = vshrl.u32 %v2319, 16
      %v2453 = vshll.u32 %v2319, 16
      %v2455 = vrot.slane %v2453, 1
      %v2456 = vor.u32 %v2451, %v2455
      %v2458 = vshll.u32 %v2335, 16
      %v2460 = vrot.slane %v2458, 1
      %v2461 = vsel %vm871, %v2456, %v2460
      %v2463 = vshrl.u32 %v2320, 16
      %v2465 = vshll.u32 %v2320, 16
      %v2467 = vrot.slane %v2465, 1
      %v2468 = vor.u32 %v2463, %v2467
      %v2470 = vshll.u32 %v2336, 16
      %v2472 = vrot.slane %v2470, 1
      %v2473 = vsel %vm871, %v2468, %v2472
      %v2475 = vshrl.u32 %v2321, 16
      %v2477 = vshll.u32 %v2321, 16
      %v2479 = vrot.slane %v2477, 1
      %v2480 = vor.u32 %v2475, %v2479
      %v2482 = vshll.u32 %v2337, 16
      %v2484 = vrot.slane %v2482, 1
      %v2485 = vsel %vm871, %v2480, %v2484
      %v2487 = vshrl.u32 %v2322, 16
      %v2489 = vshll.u32 %v2322, 16
      %v2491 = vrot.slane %v2489, 1
      %v2492 = vor.u32 %v2487, %v2491
      %v2494 = vshll.u32 %v2338, 16
      %v2496 = vrot.slane %v2494, 1
      %v2497 = vsel %vm871, %v2492, %v2496
      %v2499 = vshrl.u32 %v2323, 16
      %v2501 = vshll.u32 %v2323, 16
      %v2503 = vrot.slane %v2501, 1
      %v2504 = vor.u32 %v2499, %v2503
      %v2506 = vshll.u32 %v2339, 16
      %v2508 = vrot.slane %v2506, 1
      %v2509 = vsel %vm871, %v2504, %v2508
      %v2511 = vshrl.u32 %v2324, 16
      %v2513 = vshll.u32 %v2324, 16
      %v2515 = vrot.slane %v2513, 1
      %v2516 = vor.u32 %v2511, %v2515
      %v2518 = vshll.u32 %v2340, 16
      %v2520 = vrot.slane %v2518, 1
      %v2521 = vsel %vm871, %v2516, %v2520
      %2522 = vrot.lane.b32.xlu0 %v2353, 32
      %v2523 = vpop.permute.xlu0 %2522
      %2524 = vrot.lane.b32.xlu0 %v2365, 32
      %v2525 = vpop.permute.xlu0 %2524
      %2526 = vrot.lane.b32.xlu0 %v2377, 32
      %v2527 = vpop.permute.xlu0 %2526
      %2528 = vrot.lane.b32.xlu0 %v2389, 32
      %v2529 = vpop.permute.xlu0 %2528
      %2530 = vrot.lane.b32.xlu0 %v2401, 32
      %v2531 = vpop.permute.xlu0 %2530
      %2532 = vrot.lane.b32.xlu0 %v2413, 32
      %v2533 = vpop.permute.xlu0 %2532
      %2534 = vrot.lane.b32.xlu0 %v2425, 32
      %v2535 = vpop.permute.xlu0 %2534
      %2536 = vrot.lane.b32.xlu0 %v2437, 32
      %v2537 = vpop.permute.xlu0 %2536
      %2538 = vrot.lane.b32.xlu0 %v2449, 32
      %v2539 = vpop.permute.xlu0 %2538
      %2540 = vrot.lane.b32.xlu0 %v2461, 32
      %v2541 = vpop.permute.xlu0 %2540
      %2542 = vrot.lane.b32.xlu0 %v2473, 32
      %v2543 = vpop.permute.xlu0 %2542
      %2544 = vrot.lane.b32.xlu0 %v2485, 32
      %v2545 = vpop.permute.xlu0 %2544
      %2546 = vrot.lane.b32.xlu0 %v2497, 32
      %v2547 = vpop.permute.xlu0 %2546
      %2548 = vrot.lane.b32.xlu0 %v2509, 32
      %v2549 = vpop.permute.xlu0 %2548
      %2550 = vrot.lane.b32.xlu0 %v2521, 32
      %v2551 = vpop.permute.xlu0 %2550
      %v2582 = vrot.slane %v2310, 1
      %v2583 = vrot.slane %v2326, 1
      %v2584 = vsel %vm1128, %v2582, %v2583
      %v2585 = vrot.slane %v2311, 1
      %v2586 = vrot.slane %v2327, 1
      %v2587 = vsel %vm1128, %v2585, %v2586
      %v2588 = vrot.slane %v2312, 1
      %v2589 = vrot.slane %v2328, 1
      %v2590 = vsel %vm1128, %v2588, %v2589
      %v2591 = vrot.slane %v2313, 1
      %v2592 = vrot.slane %v2329, 1
      %v2593 = vsel %vm1128, %v2591, %v2592
      %v2594 = vrot.slane %v2314, 1
      %v2595 = vrot.slane %v2330, 1
      %v2596 = vsel %vm1128, %v2594, %v2595
      %v2597 = vrot.slane %v2315, 1
      %v2598 = vrot.slane %v2331, 1
      %v2599 = vsel %vm1128, %v2597, %v2598
      %v2600 = vrot.slane %v2316, 1
      %v2601 = vrot.slane %v2332, 1
      %v2602 = vsel %vm1128, %v2600, %v2601
      %v2603 = vrot.slane %v2317, 1
      %v2604 = vrot.slane %v2333, 1
      %v2605 = vsel %vm1128, %v2603, %v2604
      %v2606 = vrot.slane %v2318, 1
      %v2607 = vrot.slane %v2334, 1
      %v2608 = vsel %vm1128, %v2606, %v2607
      %v2609 = vrot.slane %v2319, 1
      %v2610 = vrot.slane %v2335, 1
      %v2611 = vsel %vm1128, %v2609, %v2610
      %v2612 = vrot.slane %v2320, 1
      %v2613 = vrot.slane %v2336, 1
      %v2614 = vsel %vm1128, %v2612, %v2613
      %v2615 = vrot.slane %v2321, 1
      %v2616 = vrot.slane %v2337, 1
      %v2617 = vsel %vm1128, %v2615, %v2616
      %v2618 = vrot.slane %v2322, 1
      %v2619 = vrot.slane %v2338, 1
      %v2620 = vsel %vm1128, %v2618, %v2619
      %v2621 = vrot.slane %v2323, 1
      %v2622 = vrot.slane %v2339, 1
      %v2623 = vsel %vm1128, %v2621, %v2622
      %v2624 = vrot.slane %v2324, 1
      %v2625 = vrot.slane %v2340, 1
      %v2626 = vsel %vm1128, %v2624, %v2625
      %2627 = vrot.lane.b32.xlu0 %v2584, 64
      %v2628 = vpop.permute.xlu0 %2627
      %2629 = vrot.lane.b32.xlu0 %v2587, 64
      %v2630 = vpop.permute.xlu0 %2629
      %2631 = vrot.lane.b32.xlu0 %v2590, 64
      %v2632 = vpop.permute.xlu0 %2631
      %2633 = vrot.lane.b32.xlu0 %v2593, 64
      %v2634 = vpop.permute.xlu0 %2633
      %2635 = vrot.lane.b32.xlu0 %v2596, 64
      %v2636 = vpop.permute.xlu0 %2635
      %2637 = vrot.lane.b32.xlu0 %v2599, 64
      %v2638 = vpop.permute.xlu0 %2637
      %2639 = vrot.lane.b32.xlu0 %v2602, 64
      %v2640 = vpop.permute.xlu0 %2639
      %2641 = vrot.lane.b32.xlu0 %v2605, 64
      %v2642 = vpop.permute.xlu0 %2641
      %2643 = vrot.lane.b32.xlu0 %v2608, 64
      %v2644 = vpop.permute.xlu0 %2643
      %2645 = vrot.lane.b32.xlu0 %v2611, 64
      %v2646 = vpop.permute.xlu0 %2645
      %2647 = vrot.lane.b32.xlu0 %v2614, 64
      %v2648 = vpop.permute.xlu0 %2647
      %2649 = vrot.lane.b32.xlu0 %v2617, 64
      %v2650 = vpop.permute.xlu0 %2649
      %2651 = vrot.lane.b32.xlu0 %v2620, 64
      %v2652 = vpop.permute.xlu0 %2651
      %2653 = vrot.lane.b32.xlu0 %v2623, 64
      %v2654 = vpop.permute.xlu0 %2653
      %2655 = vrot.lane.b32.xlu0 %v2626, 64
      %v2656 = vpop.permute.xlu0 %2655
      %2658 = vrot.lane.b32.xlu0 %v2310, 96
      %v2659 = vpop.permute.xlu0 %2658
      %2660 = vrot.lane.b32.xlu0 %v2311, 96
      %v2661 = vpop.permute.xlu0 %2660
      %2662 = vrot.lane.b32.xlu0 %v2312, 96
      %v2663 = vpop.permute.xlu0 %2662
      %2664 = vrot.lane.b32.xlu0 %v2313, 96
      %v2665 = vpop.permute.xlu0 %2664
      %2666 = vrot.lane.b32.xlu0 %v2314, 96
      %v2667 = vpop.permute.xlu0 %2666
      %2668 = vrot.lane.b32.xlu0 %v2315, 96
      %v2669 = vpop.permute.xlu0 %2668
      %2670 = vrot.lane.b32.xlu0 %v2316, 96
      %v2671 = vpop.permute.xlu0 %2670
      %2672 = vrot.lane.b32.xlu0 %v2317, 96
      %v2673 = vpop.permute.xlu0 %2672
      %2674 = vrot.lane.b32.xlu0 %v2318, 96
      %v2675 = vpop.permute.xlu0 %2674
      %2676 = vrot.lane.b32.xlu0 %v2319, 96
      %v2677 = vpop.permute.xlu0 %2676
      %2678 = vrot.lane.b32.xlu0 %v2320, 96
      %v2679 = vpop.permute.xlu0 %2678
      %2680 = vrot.lane.b32.xlu0 %v2321, 96
      %v2681 = vpop.permute.xlu0 %2680
      %2682 = vrot.lane.b32.xlu0 %v2322, 96
      %v2683 = vpop.permute.xlu0 %2682
      %2684 = vrot.lane.b32.xlu0 %v2323, 96
      %v2685 = vpop.permute.xlu0 %2684
      %2686 = vrot.lane.b32.xlu0 %v2324, 96
      %v2687 = vpop.permute.xlu0 %2686
      %2688 = vrot.lane.b32.xlu0 %v2325, 96
      %v2689 = vpop.permute.xlu0 %2688
      %v2691 = vshrl.u32 %v2325, 16
      %v2693 = vshll.u32 %v2325, 16
      %v2695 = vrot.slane %v2693, 1
      %v2696 = vor.u32 %v2691, %v2695
      %v2698 = vshll.u32 %v2341, 16
      %v2700 = vrot.slane %v2698, 1
      %v2701 = vsel %vm871, %v2696, %v2700
      %v2703 = vrot.slane %v2325, 1
      %v2704 = vrot.slane %v2341, 1
      %v2705 = vsel %vm1128, %v2703, %v2704
      %2706 = vrot.lane.b32.xlu0 %v2584, 32
      %v2707 = vpop.permute.xlu0 %2706
      %2708 = vrot.lane.b32.xlu0 %v2587, 32
      %v2709 = vpop.permute.xlu0 %2708
      %2710 = vrot.lane.b32.xlu0 %v2590, 32
      %v2711 = vpop.permute.xlu0 %2710
      %2712 = vrot.lane.b32.xlu0 %v2593, 32
      %v2713 = vpop.permute.xlu0 %2712
      %2714 = vrot.lane.b32.xlu0 %v2596, 32
      %v2715 = vpop.permute.xlu0 %2714
      %2716 = vrot.lane.b32.xlu0 %v2599, 32
      %v2717 = vpop.permute.xlu0 %2716
      %2718 = vrot.lane.b32.xlu0 %v2602, 32
      %v2719 = vpop.permute.xlu0 %2718
      %2720 = vrot.lane.b32.xlu0 %v2605, 32
      %v2721 = vpop.permute.xlu0 %2720
      %2722 = vrot.lane.b32.xlu0 %v2608, 32
      %v2723 = vpop.permute.xlu0 %2722
      %2724 = vrot.lane.b32.xlu0 %v2611, 32
      %v2725 = vpop.permute.xlu0 %2724
      %2726 = vrot.lane.b32.xlu0 %v2614, 32
      %v2727 = vpop.permute.xlu0 %2726
      %2728 = vrot.lane.b32.xlu0 %v2617, 32
      %v2729 = vpop.permute.xlu0 %2728
      %2730 = vrot.lane.b32.xlu0 %v2620, 32
      %v2731 = vpop.permute.xlu0 %2730
      %2732 = vrot.lane.b32.xlu0 %v2623, 32
      %v2733 = vpop.permute.xlu0 %2732
      %2734 = vrot.lane.b32.xlu0 %v2626, 32
      %v2735 = vpop.permute.xlu0 %2734
      %2736 = vrot.lane.b32.xlu0 %v2705, 32
      %v2737 = vpop.permute.xlu0 %2736
      %2738 = vrot.lane.b32.xlu0 %v2311, 64
      %v2739 = vpop.permute.xlu0 %2738
      %2740 = vrot.lane.b32.xlu0 %v2312, 64
      %v2741 = vpop.permute.xlu0 %2740
      %2742 = vrot.lane.b32.xlu0 %v2313, 64
      %v2743 = vpop.permute.xlu0 %2742
      %2744 = vrot.lane.b32.xlu0 %v2314, 64
      %v2745 = vpop.permute.xlu0 %2744
      %2746 = vrot.lane.b32.xlu0 %v2315, 64
      %v2747 = vpop.permute.xlu0 %2746
      %2748 = vrot.lane.b32.xlu0 %v2316, 64
      %v2749 = vpop.permute.xlu0 %2748
      %2750 = vrot.lane.b32.xlu0 %v2317, 64
      %v2751 = vpop.permute.xlu0 %2750
      %2752 = vrot.lane.b32.xlu0 %v2318, 64
      %v2753 = vpop.permute.xlu0 %2752
      %2754 = vrot.lane.b32.xlu0 %v2319, 64
      %v2755 = vpop.permute.xlu0 %2754
      %2756 = vrot.lane.b32.xlu0 %v2320, 64
      %v2757 = vpop.permute.xlu0 %2756
      %2758 = vrot.lane.b32.xlu0 %v2321, 64
      %v2759 = vpop.permute.xlu0 %2758
      %2760 = vrot.lane.b32.xlu0 %v2322, 64
      %v2761 = vpop.permute.xlu0 %2760
      %2762 = vrot.lane.b32.xlu0 %v2323, 64
      %v2763 = vpop.permute.xlu0 %2762
      %2764 = vrot.lane.b32.xlu0 %v2324, 64
      %v2765 = vpop.permute.xlu0 %2764
      %2766 = vrot.lane.b32.xlu0 %v2325, 64
      %v2767 = vpop.permute.xlu0 %2766
      %2768 = vrot.lane.b32.xlu0 %v2365, 96
      %v2769 = vpop.permute.xlu0 %2768
      %2770 = vrot.lane.b32.xlu0 %v2377, 96
      %v2771 = vpop.permute.xlu0 %2770
      %2772 = vrot.lane.b32.xlu0 %v2389, 96
      %v2773 = vpop.permute.xlu0 %2772
      %2774 = vrot.lane.b32.xlu0 %v2401, 96
      %v2775 = vpop.permute.xlu0 %2774
      %2776 = vrot.lane.b32.xlu0 %v2413, 96
      %v2777 = vpop.permute.xlu0 %2776
      %2778 = vrot.lane.b32.xlu0 %v2425, 96
      %v2779 = vpop.permute.xlu0 %2778
      %2780 = vrot.lane.b32.xlu0 %v2437, 96
      %v2781 = vpop.permute.xlu0 %2780
      %2782 = vrot.lane.b32.xlu0 %v2449, 96
      %v2783 = vpop.permute.xlu0 %2782
      %2784 = vrot.lane.b32.xlu0 %v2461, 96
      %v2785 = vpop.permute.xlu0 %2784
      %2786 = vrot.lane.b32.xlu0 %v2473, 96
      %v2787 = vpop.permute.xlu0 %2786
      %2788 = vrot.lane.b32.xlu0 %v2485, 96
      %v2789 = vpop.permute.xlu0 %2788
      %2790 = vrot.lane.b32.xlu0 %v2497, 96
      %v2791 = vpop.permute.xlu0 %2790
      %2792 = vrot.lane.b32.xlu0 %v2509, 96
      %v2793 = vpop.permute.xlu0 %2792
      %2794 = vrot.lane.b32.xlu0 %v2521, 96
      %v2795 = vpop.permute.xlu0 %2794
      %2796 = vrot.lane.b32.xlu0 %v2701, 96
      %v2797 = vpop.permute.xlu0 %2796
      %v2799 = vsel %vm1354, %v2310, %v2523
      %v2801 = vsel %vm1354, %v2311, %v2525
      %v2803 = vsel %vm1354, %v2312, %v2527
      %v2805 = vsel %vm1354, %v2313, %v2529
      %v2807 = vsel %vm1354, %v2314, %v2531
      %v2809 = vsel %vm1354, %v2315, %v2533
      %v2811 = vsel %vm1354, %v2316, %v2535
      %v2813 = vsel %vm1354, %v2317, %v2537
      %v2815 = vsel %vm1354, %v2318, %v2539
      %v2817 = vsel %vm1354, %v2319, %v2541
      %v2819 = vsel %vm1354, %v2320, %v2543
      %v2821 = vsel %vm1354, %v2321, %v2545
      %v2823 = vsel %vm1354, %v2322, %v2547
      %v2825 = vsel %vm1354, %v2323, %v2549
      %v2827 = vsel %vm1354, %v2324, %v2551
      %v2829 = vsel %vm1387, %v2799, %v2628
      %v2831 = vsel %vm1387, %v2801, %v2630
      %v2833 = vsel %vm1387, %v2803, %v2632
      %v2835 = vsel %vm1387, %v2805, %v2634
      %v2837 = vsel %vm1387, %v2807, %v2636
      %v2839 = vsel %vm1387, %v2809, %v2638
      %v2841 = vsel %vm1387, %v2811, %v2640
      %v2843 = vsel %vm1387, %v2813, %v2642
      %v2845 = vsel %vm1387, %v2815, %v2644
      %v2847 = vsel %vm1387, %v2817, %v2646
      %v2849 = vsel %vm1387, %v2819, %v2648
      %v2851 = vsel %vm1387, %v2821, %v2650
      %v2853 = vsel %vm1387, %v2823, %v2652
      %v2855 = vsel %vm1387, %v2825, %v2654
      %v2857 = vsel %vm1387, %v2827, %v2656
      %v2859 = vsel %vm1420, %v1389, %v2659
      %v2862 = vsel %vm1420, %v2829, %v2661
      %v2865 = vsel %vm1420, %v2831, %v2663
      %v2868 = vsel %vm1420, %v2833, %v2665
      %v2871 = vsel %vm1420, %v2835, %v2667
      %v2874 = vsel %vm1420, %v2837, %v2669
      %v2877 = vsel %vm1420, %v2839, %v2671
      %v2880 = vsel %vm1420, %v2841, %v2673
      %v2883 = vsel %vm1420, %v2843, %v2675
      %v2886 = vsel %vm1420, %v2845, %v2677
      %v2889 = vsel %vm1420, %v2847, %v2679
      %v2892 = vsel %vm1420, %v2849, %v2681
      %v2895 = vsel %vm1420, %v2851, %v2683
      %v2898 = vsel %vm1420, %v2853, %v2685
      %v2901 = vsel %vm1420, %v2855, %v2687
      %v2904 = vsel %vm1420, %v2857, %v2689
      %v2908 = vsel %vm1354, %v2353, %v2707
      %v2911 = vsel %vm1354, %v2365, %v2709
      %v2914 = vsel %vm1354, %v2377, %v2711
      %v2917 = vsel %vm1354, %v2389, %v2713
      %v2920 = vsel %vm1354, %v2401, %v2715
      %v2923 = vsel %vm1354, %v2413, %v2717
      %v2926 = vsel %vm1354, %v2425, %v2719
      %v2929 = vsel %vm1354, %v2437, %v2721
      %v2932 = vsel %vm1354, %v2449, %v2723
      %v2935 = vsel %vm1354, %v2461, %v2725
      %v2938 = vsel %vm1354, %v2473, %v2727
      %v2941 = vsel %vm1354, %v2485, %v2729
      %v2944 = vsel %vm1354, %v2497, %v2731
      %v2947 = vsel %vm1354, %v2509, %v2733
      %v2950 = vsel %vm1354, %v2521, %v2735
      %v2953 = vsel %vm1354, %v2701, %v2737
      %v2955 = vsel %vm1387, %v2908, %v2739
      %v2957 = vsel %vm1387, %v2911, %v2741
      %v2959 = vsel %vm1387, %v2914, %v2743
      %v2961 = vsel %vm1387, %v2917, %v2745
      %v2963 = vsel %vm1387, %v2920, %v2747
      %v2965 = vsel %vm1387, %v2923, %v2749
      %v2967 = vsel %vm1387, %v2926, %v2751
      %v2969 = vsel %vm1387, %v2929, %v2753
      %v2971 = vsel %vm1387, %v2932, %v2755
      %v2973 = vsel %vm1387, %v2935, %v2757
      %v2975 = vsel %vm1387, %v2938, %v2759
      %v2977 = vsel %vm1387, %v2941, %v2761
      %v2979 = vsel %vm1387, %v2944, %v2763
      %v2981 = vsel %vm1387, %v2947, %v2765
      %v2983 = vsel %vm1387, %v2950, %v2767
      %v2984 = vsel %vm1387, %v2953, %v1321
      %v2986 = vsel %vm1420, %v2955, %v2769
      %v2989 = vsel %vm1420, %v2957, %v2771
      %v2992 = vsel %vm1420, %v2959, %v2773
      %v2995 = vsel %vm1420, %v2961, %v2775
      %v2998 = vsel %vm1420, %v2963, %v2777
      %v3001 = vsel %vm1420, %v2965, %v2779
      %v3004 = vsel %vm1420, %v2967, %v2781
      %v3007 = vsel %vm1420, %v2969, %v2783
      %v3010 = vsel %vm1420, %v2971, %v2785
      %v3013 = vsel %vm1420, %v2973, %v2787
      %v3016 = vsel %vm1420, %v2975, %v2789
      %v3019 = vsel %vm1420, %v2977, %v2791
      %v3022 = vsel %vm1420, %v2979, %v2793
      %v3025 = vsel %vm1420, %v2981, %v2795
      %v3028 = vsel %vm1420, %v2983, %v2797
      %v3030 = vsel %vm1420, %v2984, %v1353
      %v3032 = vld [vmem:[%s5] sm:$0xf]
      %v3033 = vld [vmem:[%s5 + $0x4] sm:$0xf]
      %v3034 = vld [vmem:[%s5 + $0x8] sm:$0xf]
      %v3035 = vld [vmem:[%s5 + $0xc] sm:$0xf]
      %v3036 = vld [vmem:[%s5 + $0x10] sm:$0xf]
      %v3037 = vld [vmem:[%s5 + $0x14] sm:$0xf]
      %v3038 = vld [vmem:[%s5 + $0x18] sm:$0xf]
      %v3039 = vld [vmem:[%s5 + $0x1c] sm:$0xf]
      %v3040 = vld [vmem:[%s5 + $0x20] sm:$0xf]
      %v3041 = vld [vmem:[%s5 + $0x24] sm:$0xf]
      %v3042 = vld [vmem:[%s5 + $0x28] sm:$0xf]
      %v3043 = vld [vmem:[%s5 + $0x2c] sm:$0xf]
      %v3044 = vld [vmem:[%s5 + $0x30] sm:$0xf]
      %v3045 = vld [vmem:[%s5 + $0x34] sm:$0xf]
      %v3046 = vld [vmem:[%s5 + $0x38] sm:$0xf]
      %v3047 = vld [vmem:[%s5 + $0x3c] sm:$0xf]
      %v3048 = vld [vmem:[%s5 + $0x40] sm:$0xf]
      %v3049 = vld [vmem:[%s5 + $0x44] sm:$0xf]
      %v3050 = vld [vmem:[%s5 + $0x48] sm:$0xf]
      %v3051 = vld [vmem:[%s5 + $0x4c] sm:$0xf]
      %v3052 = vld [vmem:[%s5 + $0x50] sm:$0xf]
      %v3053 = vld [vmem:[%s5 + $0x54] sm:$0xf]
      %v3054 = vld [vmem:[%s5 + $0x58] sm:$0xf]
      %v3055 = vld [vmem:[%s5 + $0x5c] sm:$0xf]
      %v3056 = vld [vmem:[%s5 + $0x60] sm:$0xf]
      %v3057 = vld [vmem:[%s5 + $0x64] sm:$0xf]
      %v3058 = vld [vmem:[%s5 + $0x68] sm:$0xf]
      %v3059 = vld [vmem:[%s5 + $0x6c] sm:$0xf]
      %v3060 = vld [vmem:[%s5 + $0x70] sm:$0xf]
      %v3061 = vld [vmem:[%s5 + $0x74] sm:$0xf]
      %v3062 = vld [vmem:[%s5 + $0x78] sm:$0xf]
      %v3063 = vld [vmem:[%s5 + $0x7c] sm:$0xf]
      %v3064 = vld [vmem:[%s5 + $0x80] sm:$0xf]
      %v3065 = vld [vmem:[%s5 + $0x84] sm:$0xf]
      %v3066 = vld [vmem:[%s5 + $0x88] sm:$0xf]
      %v3067 = vld [vmem:[%s5 + $0x8c] sm:$0xf]
      %v3068 = vld [vmem:[%s6] sm:$0x1]
      %v3070 = vlaneseq
      %v3071 = vshrl.u32 %v3070, 7
      %v3072 = vsub.s32 0, %v3071
      %v3073 = vrot.slane %v3068, %v3072
      %v3111 = vunpack.c.l.b16 %v3032
      %v3112 = vunpack.c.l.b16 %v3033
      %v3113 = vunpack.c.l.b16 %v3034
      %v3114 = vunpack.c.l.b16 %v3035
      %v3115 = vunpack.c.l.b16 %v3036
      %v3116 = vunpack.c.l.b16 %v3037
      %v3117 = vunpack.c.l.b16 %v3038
      %v3118 = vunpack.c.l.b16 %v3039
      %v3119 = vunpack.c.l.b16 %v3040
      %v3120 = vunpack.c.l.b16 %v3041
      %v3121 = vunpack.c.l.b16 %v3042
      %v3122 = vunpack.c.l.b16 %v3043
      %v3123 = vunpack.c.l.b16 %v3044
      %v3124 = vunpack.c.l.b16 %v3045
      %v3125 = vunpack.c.l.b16 %v3046
      %v3126 = vunpack.c.l.b16 %v3047
      %v3127 = vunpack.c.l.b16 %v3048
      %v3128 = vunpack.c.l.b16 %v3049
      %v3129 = vunpack.c.l.b16 %v3050
      %v3130 = vunpack.c.l.b16 %v3051
      %v3131 = vunpack.c.l.b16 %v3052
      %v3132 = vunpack.c.l.b16 %v3053
      %v3133 = vunpack.c.l.b16 %v3054
      %v3134 = vunpack.c.l.b16 %v3055
      %v3135 = vunpack.c.l.b16 %v3056
      %v3136 = vunpack.c.l.b16 %v3057
      %v3137 = vunpack.c.l.b16 %v3058
      %v3138 = vunpack.c.l.b16 %v3059
      %v3139 = vunpack.c.l.b16 %v3060
      %v3140 = vunpack.c.l.b16 %v3061
      %v3141 = vunpack.c.l.b16 %v3062
      %v3142 = vunpack.c.l.b16 %v3063
      %v3143 = vunpack.c.l.b16 %v3064
      %v3144 = vunpack.c.l.b16 %v3065
      %v3145 = vunpack.c.l.b16 %v3066
      %v3146 = vunpack.c.l.b16 %v3067
      %v3147 = vpack.c.b16 %v3112, %v3111
      %v3148 = vpack.c.b16 %v3114, %v3113
      %v3149 = vpack.c.b16 %v3116, %v3115
      %v3150 = vpack.c.b16 %v3118, %v3117
      %v3151 = vpack.c.b16 %v3120, %v3119
      %v3152 = vpack.c.b16 %v3122, %v3121
      %v3153 = vpack.c.b16 %v3124, %v3123
      %v3154 = vpack.c.b16 %v3126, %v3125
      %v3155 = vpack.c.b16 %v3128, %v3127
      %v3156 = vpack.c.b16 %v3130, %v3129
      %v3157 = vpack.c.b16 %v3132, %v3131
      %v3158 = vpack.c.b16 %v3134, %v3133
      %v3159 = vpack.c.b16 %v3136, %v3135
      %v3160 = vpack.c.b16 %v3138, %v3137
      %v3161 = vpack.c.b16 %v3140, %v3139
      %v3162 = vpack.c.b16 %v3142, %v3141
      %v3163 = vpack.c.b16 %v3144, %v3143
      %v3164 = vpack.c.b16 %v3146, %v3145
      %v3184 = vsel %vm1354, %v2587, 0
      %v3187 = vsel %vm1354, %v2590, 0
      %v3190 = vsel %vm1354, %v2593, 0
      %v3193 = vsel %vm1354, %v2596, 0
      %v3196 = vsel %vm1354, %v2599, 0
      %v3199 = vsel %vm1354, %v2602, 0
      %v3202 = vsel %vm1354, %v2605, 0
      %v3205 = vsel %vm1354, %v2608, 0
      %v3208 = vsel %vm1354, %v2611, 0
      %v3211 = vsel %vm1354, %v2614, 0
      %v3214 = vsel %vm1354, %v2617, 0
      %v3217 = vsel %vm1354, %v2620, 0
      %v3220 = vsel %vm1354, %v2623, 0
      %v3223 = vsel %vm1354, %v2626, 0
      %v3226 = vsel %vm1354, %v2705, 0
      %3228 = vmatprep.subr.bf16.mxu0 0
      %3229 = vmatpush1.bf16.msra.mxu0 %v3154
      %3230 = vmatprep.subr.bf16.mxu0 0
      %3231 = vmatpush1.bf16.msra.mxu0 %v3153
      %3232 = vmatprep.subr.bf16.mxu0 0
      %3233 = vmatpush1.bf16.msra.mxu0 %v3152
      %3234 = vmatprep.subr.bf16.mxu0 0
      %3235 = vmatpush1.bf16.msra.mxu0 %v3151
      %3236 = vmatprep.subr.bf16.mxu0 0
      %3237 = vmatpush1.bf16.msra.mxu0 %v3150
      %3238 = vmatprep.subr.bf16.mxu0 0
      %3239 = vmatpush1.bf16.msra.mxu0 %v3149
      %3240 = vmatprep.subr.bf16.mxu0 0
      %3241 = vmatpush1.bf16.msra.mxu0 %v3148
      %3242 = vmatprep.subr.bf16.mxu0 0
      %3243 = vmatpush1.bf16.msra.mxu0 %v3147
      %3244 = vmatprep.subr.bf16.mxu0 0
      %3245 = vmatpush2.bf16.msra.mxu0 %v3162
      %3246 = vmatprep.subr.bf16.mxu0 0
      %3247 = vmatpush2.bf16.msra.mxu0 %v3161
      %3248 = vmatprep.subr.bf16.mxu0 0
      %3249 = vmatpush2.bf16.msra.mxu0 %v3160
      %3250 = vmatprep.subr.bf16.mxu0 0
      %3251 = vmatpush2.bf16.msra.mxu0 %v3159
      %3252 = vmatprep.subr.bf16.mxu0 0
      %3253 = vmatpush2.bf16.msra.mxu0 %v3158
      %3254 = vmatprep.subr.bf16.mxu0 0
      %3255 = vmatpush2.bf16.msra.mxu0 %v3157
      %3256 = vmatprep.subr.bf16.mxu0 0
      %3257 = vmatpush2.bf16.msra.mxu0 %v3156
      %3258 = vmatprep.subr.bf16.mxu0 0
      %3259 = vmatpush2.bf16.msra.mxu0 %v3155
      %3260 = vmatprep.mubr.bf16.mxu0 %v2986
      %3261 = vmatmul.mubr.bf16.gmra.mxu0 %v2859
      %v3262 = vpop.f32.mrf.mxu0
      %v3263 = vadd.f32 %v3073, %v3262
      %v3264 = vpop.f32.mrf.mxu0
      %v3265 = vpop.f32.mrf.mxu0
      %v3266 = vadd.f32 %v3073, %v3265
      %v3267 = vpop.f32.mrf.mxu0
      %3268 = vmatprep.mubr.bf16.mxu0 %v2989
      %3269 = vmatmul.mubr.bf16.gmra.mxu0 %v2862
      %v3270 = vpop.f32.mrf.mxu0
      %v3271 = vadd.f32 %v3073, %v3270
      %v3272 = vpop.f32.mrf.mxu0
      %v3273 = vpop.f32.mrf.mxu0
      %v3274 = vadd.f32 %v3073, %v3273
      %v3275 = vpop.f32.mrf.mxu0
      %3276 = vmatprep.mubr.bf16.mxu0 %v2992
      %3277 = vmatmul.mubr.bf16.gmra.mxu0 %v2865
      %v3278 = vpop.f32.mrf.mxu0
      %v3279 = vadd.f32 %v3073, %v3278
      %v3280 = vpop.f32.mrf.mxu0
      %v3281 = vpop.f32.mrf.mxu0
      %v3282 = vadd.f32 %v3073, %v3281
      %v3283 = vpop.f32.mrf.mxu0
      %3284 = vmatprep.mubr.bf16.mxu0 %v2995
      %3285 = vmatmul.mubr.bf16.gmra.mxu0 %v2868
      %v3286 = vpop.f32.mrf.mxu0
      %v3287 = vadd.f32 %v3073, %v3286
      %v3288 = vpop.f32.mrf.mxu0
      %v3289 = vpop.f32.mrf.mxu0
      %v3290 = vadd.f32 %v3073, %v3289
      %v3291 = vpop.f32.mrf.mxu0
      %3292 = vmatprep.mubr.bf16.mxu0 %v2998
      %3293 = vmatmul.mubr.bf16.gmra.mxu0 %v2871
      %v3294 = vpop.f32.mrf.mxu0
      %v3295 = vadd.f32 %v3073, %v3294
      %v3296 = vpop.f32.mrf.mxu0
      %v3297 = vpop.f32.mrf.mxu0
      %v3298 = vadd.f32 %v3073, %v3297
      %v3299 = vpop.f32.mrf.mxu0
      %3300 = vmatprep.mubr.bf16.mxu0 %v3001
      %3301 = vmatmul.mubr.bf16.gmra.mxu0 %v2874
      %v3302 = vpop.f32.mrf.mxu0
      %v3303 = vadd.f32 %v3073, %v3302
      %v3304 = vpop.f32.mrf.mxu0
      %v3305 = vpop.f32.mrf.mxu0
      %v3306 = vadd.f32 %v3073, %v3305
      %v3307 = vpop.f32.mrf.mxu0
      %3308 = vmatprep.mubr.bf16.mxu0 %v3004
      %3309 = vmatmul.mubr.bf16.gmra.mxu0 %v2877
      %v3310 = vpop.f32.mrf.mxu0
      %v3311 = vadd.f32 %v3073, %v3310
      %v3312 = vpop.f32.mrf.mxu0
      %v3313 = vpop.f32.mrf.mxu0
      %v3314 = vadd.f32 %v3073, %v3313
      %v3315 = vpop.f32.mrf.mxu0
      %3316 = vmatprep.mubr.bf16.mxu0 %v3007
      %3317 = vmatmul.mubr.bf16.gmra.mxu0 %v2880
      %v3318 = vpop.f32.mrf.mxu0
      %v3319 = vadd.f32 %v3073, %v3318
      %v3320 = vpop.f32.mrf.mxu0
      %v3321 = vpop.f32.mrf.mxu0
      %v3322 = vadd.f32 %v3073, %v3321
      %v3323 = vpop.f32.mrf.mxu0
      %3324 = vmatprep.mubr.bf16.mxu0 %v3010
      %3325 = vmatmul.mubr.bf16.gmra.mxu0 %v2883
      %v3326 = vpop.f32.mrf.mxu0
      %v3327 = vadd.f32 %v3073, %v3326
      %v3328 = vpop.f32.mrf.mxu0
      %v3329 = vpop.f32.mrf.mxu0
      %v3330 = vadd.f32 %v3073, %v3329
      %v3331 = vpop.f32.mrf.mxu0
      %3332 = vmatprep.mubr.bf16.mxu0 %v3013
      %3333 = vmatmul.mubr.bf16.gmra.mxu0 %v2886
      %v3334 = vpop.f32.mrf.mxu0
      %v3335 = vadd.f32 %v3073, %v3334
      %v3336 = vpop.f32.mrf.mxu0
      %v3337 = vpop.f32.mrf.mxu0
      %v3338 = vadd.f32 %v3073, %v3337
      %v3339 = vpop.f32.mrf.mxu0
      %3340 = vmatprep.mubr.bf16.mxu0 %v3016
      %3341 = vmatmul.mubr.bf16.gmra.mxu0 %v2889
      %v3342 = vpop.f32.mrf.mxu0
      %v3343 = vadd.f32 %v3073, %v3342
      %v3344 = vpop.f32.mrf.mxu0
      %v3345 = vpop.f32.mrf.mxu0
      %v3346 = vadd.f32 %v3073, %v3345
      %v3347 = vpop.f32.mrf.mxu0
      %3348 = vmatprep.mubr.bf16.mxu0 %v3019
      %3349 = vmatmul.mubr.bf16.gmra.mxu0 %v2892
      %v3350 = vpop.f32.mrf.mxu0
      %v3351 = vadd.f32 %v3073, %v3350
      %v3352 = vpop.f32.mrf.mxu0
      %v3353 = vpop.f32.mrf.mxu0
      %v3354 = vadd.f32 %v3073, %v3353
      %v3355 = vpop.f32.mrf.mxu0
      %3356 = vmatprep.mubr.bf16.mxu0 %v3022
      %3357 = vmatmul.mubr.bf16.gmra.mxu0 %v2895
      %v3358 = vpop.f32.mrf.mxu0
      %v3359 = vadd.f32 %v3073, %v3358
      %v3360 = vpop.f32.mrf.mxu0
      %v3361 = vpop.f32.mrf.mxu0
      %v3362 = vadd.f32 %v3073, %v3361
      %v3363 = vpop.f32.mrf.mxu0
      %3364 = vmatprep.mubr.bf16.mxu0 %v3025
      %3365 = vmatmul.mubr.bf16.gmra.mxu0 %v2898
      %v3366 = vpop.f32.mrf.mxu0
      %v3367 = vadd.f32 %v3073, %v3366
      %v3368 = vpop.f32.mrf.mxu0
      %v3369 = vpop.f32.mrf.mxu0
      %v3370 = vadd.f32 %v3073, %v3369
      %v3371 = vpop.f32.mrf.mxu0
      %3372 = vmatprep.mubr.bf16.mxu0 %v3028
      %3373 = vmatmul.mubr.bf16.gmra.mxu0 %v2901
      %v3374 = vpop.f32.mrf.mxu0
      %v3375 = vadd.f32 %v3073, %v3374
      %v3376 = vpop.f32.mrf.mxu0
      %v3377 = vpop.f32.mrf.mxu0
      %v3378 = vadd.f32 %v3073, %v3377
      %v3379 = vpop.f32.mrf.mxu0
      %3380 = vmatprep.mubr.bf16.mxu0 %v3030
      %3381 = vmatmul.mubr.bf16.gmra.mxu0 %v2904
      %v3382 = vpop.f32.mrf.mxu0
      %v3383 = vadd.f32 %v3073, %v3382
      %v3384 = vpop.f32.mrf.mxu0
      %v3385 = vpop.f32.mrf.mxu0
      %v3386 = vadd.f32 %v3073, %v3385
      %v3387 = vpop.f32.mrf.mxu0
      %3388 = vdwg.mxu0
      %3389 = vmatprep.subr.bf16.mxu0 0
      %3390 = vmatpush1.bf16.msra.mxu0 0
      %3391 = vmatprep.subr.bf16.mxu0 0
      %3392 = vmatpush1.bf16.msra.mxu0 0
      %3393 = vmatprep.subr.bf16.mxu0 0
      %3394 = vmatpush1.bf16.msra.mxu0 0
      %3395 = vmatprep.subr.bf16.mxu0 0
      %3396 = vmatpush1.bf16.msra.mxu0 0
      %3397 = vmatprep.subr.bf16.mxu0 0
      %3398 = vmatpush1.bf16.msra.mxu0 0
      %3399 = vmatprep.subr.bf16.mxu0 0
      %3400 = vmatpush1.bf16.msra.mxu0 0
      %3401 = vmatprep.subr.bf16.mxu0 0
      %3402 = vmatpush1.bf16.msra.mxu0 %v3164
      %3403 = vmatprep.subr.bf16.mxu0 0
      %3404 = vmatpush1.bf16.msra.mxu0 %v3163
      %3405 = vmatprep.subr.bf16.mxu0 0
      %3406 = vmatpush2.bf16.msra.mxu0 0
      %3407 = vmatprep.subr.bf16.mxu0 0
      %3408 = vmatpush2.bf16.msra.mxu0 0
      %3409 = vmatprep.subr.bf16.mxu0 0
      %3410 = vmatpush2.bf16.msra.mxu0 0
      %3411 = vmatprep.subr.bf16.mxu0 0
      %3412 = vmatpush2.bf16.msra.mxu0 0
      %3413 = vmatprep.subr.bf16.mxu0 0
      %3414 = vmatpush2.bf16.msra.mxu0 0
      %3415 = vmatprep.subr.bf16.mxu0 0
      %3416 = vmatpush2.bf16.msra.mxu0 0
      %3417 = vmatprep.subr.bf16.mxu0 0
      %3418 = vmatpush2.bf16.msra.mxu0 0
      %3419 = vmatprep.subr.bf16.mxu0 0
      %3420 = vmatpush2.bf16.msra.mxu0 0
      %3421 = vmatprep.mubr.bf16.mxu0 0
      %3422 = vmatmul.mubr.bf16.gmra.mxu0 %v3184
      %v3423 = vpop.f32.mrf.mxu0
      %v3424 = vadd.f32 %v3263, %v3423
      %v3425 = vpop.f32.mrf.mxu0
      %v3426 = vpop.f32.mrf.mxu0
      %v3427 = vadd.f32 %v3266, %v3426
      %v3428 = vpop.f32.mrf.mxu0
      %3429 = vmatprep.mubr.bf16.mxu0 0
      %3430 = vmatmul.mubr.bf16.gmra.mxu0 %v3187
      %v3431 = vpop.f32.mrf.mxu0
      %v3432 = vadd.f32 %v3271, %v3431
      %v3433 = vpop.f32.mrf.mxu0
      %v3434 = vpop.f32.mrf.mxu0
      %v3435 = vadd.f32 %v3274, %v3434
      %v3436 = vpop.f32.mrf.mxu0
      %3437 = vmatprep.mubr.bf16.mxu0 0
      %3438 = vmatmul.mubr.bf16.gmra.mxu0 %v3190
      %v3439 = vpop.f32.mrf.mxu0
      %v3440 = vadd.f32 %v3279, %v3439
      %v3441 = vpop.f32.mrf.mxu0
      %v3442 = vpop.f32.mrf.mxu0
      %v3443 = vadd.f32 %v3282, %v3442
      %v3444 = vpop.f32.mrf.mxu0
      %3445 = vmatprep.mubr.bf16.mxu0 0
      %3446 = vmatmul.mubr.bf16.gmra.mxu0 %v3193
      %v3447 = vpop.f32.mrf.mxu0
      %v3448 = vadd.f32 %v3287, %v3447
      %v3449 = vpop.f32.mrf.mxu0
      %v3450 = vpop.f32.mrf.mxu0
      %v3451 = vadd.f32 %v3290, %v3450
      %v3452 = vpop.f32.mrf.mxu0
      %3453 = vmatprep.mubr.bf16.mxu0 0
      %3454 = vmatmul.mubr.bf16.gmra.mxu0 %v3196
      %v3455 = vpop.f32.mrf.mxu0
      %v3456 = vadd.f32 %v3295, %v3455
      %v3457 = vpop.f32.mrf.mxu0
      %v3458 = vpop.f32.mrf.mxu0
      %v3459 = vadd.f32 %v3298, %v3458
      %v3460 = vpop.f32.mrf.mxu0
      %3461 = vmatprep.mubr.bf16.mxu0 0
      %3462 = vmatmul.mubr.bf16.gmra.mxu0 %v3199
      %v3463 = vpop.f32.mrf.mxu0
      %v3464 = vadd.f32 %v3303, %v3463
      %v3465 = vpop.f32.mrf.mxu0
      %v3466 = vpop.f32.mrf.mxu0
      %v3467 = vadd.f32 %v3306, %v3466
      %v3468 = vpop.f32.mrf.mxu0
      %3469 = vmatprep.mubr.bf16.mxu0 0
      %3470 = vmatmul.mubr.bf16.gmra.mxu0 %v3202
      %v3471 = vpop.f32.mrf.mxu0
      %v3472 = vadd.f32 %v3311, %v3471
      %v3473 = vpop.f32.mrf.mxu0
      %v3474 = vpop.f32.mrf.mxu0
      %v3475 = vadd.f32 %v3314, %v3474
      %v3476 = vpop.f32.mrf.mxu0
      %3477 = vmatprep.mubr.bf16.mxu0 0
      %3478 = vmatmul.mubr.bf16.gmra.mxu0 %v3205
      %v3479 = vpop.f32.mrf.mxu0
      %v3480 = vadd.f32 %v3319, %v3479
      %v3481 = vpop.f32.mrf.mxu0
      %v3482 = vpop.f32.mrf.mxu0
      %v3483 = vadd.f32 %v3322, %v3482
      %v3484 = vpop.f32.mrf.mxu0
      %3485 = vmatprep.mubr.bf16.mxu0 0
      %3486 = vmatmul.mubr.bf16.gmra.mxu0 %v3208
      %v3487 = vpop.f32.mrf.mxu0
      %v3488 = vadd.f32 %v3327, %v3487
      %v3489 = vpop.f32.mrf.mxu0
      %v3490 = vpop.f32.mrf.mxu0
      %v3491 = vadd.f32 %v3330, %v3490
      %v3492 = vpop.f32.mrf.mxu0
      %3493 = vmatprep.mubr.bf16.mxu0 0
      %3494 = vmatmul.mubr.bf16.gmra.mxu0 %v3211
      %v3495 = vpop.f32.mrf.mxu0
      %v3496 = vadd.f32 %v3335, %v3495
      %v3497 = vpop.f32.mrf.mxu0
      %v3498 = vpop.f32.mrf.mxu0
      %v3499 = vadd.f32 %v3338, %v3498
      %v3500 = vpop.f32.mrf.mxu0
      %3501 = vmatprep.mubr.bf16.mxu0 0
      %3502 = vmatmul.mubr.bf16.gmra.mxu0 %v3214
      %v3503 = vpop.f32.mrf.mxu0
      %v3504 = vadd.f32 %v3343, %v3503
      %v3505 = vpop.f32.mrf.mxu0
      %v3506 = vpop.f32.mrf.mxu0
      %v3507 = vadd.f32 %v3346, %v3506
      %v3508 = vpop.f32.mrf.mxu0
      %3509 = vmatprep.mubr.bf16.mxu0 0
      %3510 = vmatmul.mubr.bf16.gmra.mxu0 %v3217
      %v3511 = vpop.f32.mrf.mxu0
      %v3512 = vadd.f32 %v3351, %v3511
      %v3513 = vpop.f32.mrf.mxu0
      %v3514 = vpop.f32.mrf.mxu0
      %v3515 = vadd.f32 %v3354, %v3514
      %v3516 = vpop.f32.mrf.mxu0
      %3517 = vmatprep.mubr.bf16.mxu0 0
      %3518 = vmatmul.mubr.bf16.gmra.mxu0 %v3220
      %v3519 = vpop.f32.mrf.mxu0
      %v3520 = vadd.f32 %v3359, %v3519
      %v3521 = vpop.f32.mrf.mxu0
      %v3522 = vpop.f32.mrf.mxu0
      %v3523 = vadd.f32 %v3362, %v3522
      %v3524 = vpop.f32.mrf.mxu0
      %3525 = vmatprep.mubr.bf16.mxu0 0
      %3526 = vmatmul.mubr.bf16.gmra.mxu0 %v3223
      %v3527 = vpop.f32.mrf.mxu0
      %v3528 = vadd.f32 %v3367, %v3527
      %v3529 = vpop.f32.mrf.mxu0
      %v3530 = vpop.f32.mrf.mxu0
      %v3531 = vadd.f32 %v3370, %v3530
      %v3532 = vpop.f32.mrf.mxu0
      %3533 = vmatprep.mubr.bf16.mxu0 0
      %3534 = vmatmul.mubr.bf16.gmra.mxu0 %v3226
      %v3535 = vpop.f32.mrf.mxu0
      %v3536 = vadd.f32 %v3375, %v3535
      %v3537 = vpop.f32.mrf.mxu0
      %v3538 = vpop.f32.mrf.mxu0
      %v3539 = vadd.f32 %v3378, %v3538
      %v3540 = vpop.f32.mrf.mxu0
      %3541 = vmatprep.mubr.bf16.mxu0 0
      %3542 = vmatmul.mubr.bf16.gmra.mxu0 %v1794
      %v3543 = vpop.f32.mrf.mxu0
      %v3544 = vadd.f32 %v3383, %v3543
      %v3545 = vpop.f32.mrf.mxu0
      %v3546 = vpop.f32.mrf.mxu0
      %v3547 = vadd.f32 %v3386, %v3546
      %v3548 = vpop.f32.mrf.mxu0
      %3549 = vdwg.mxu0
      %v3550 = vmul.f32 %v3424, 0.75
      %v3551 = vmul.f32 %v3427, 0.75
      %v3552 = vmul.f32 %v3432, 0.75
      %v3553 = vmul.f32 %v3435, 0.75
      %v3554 = vmul.f32 %v3440, 0.75
      %v3555 = vmul.f32 %v3443, 0.75
      %v3556 = vmul.f32 %v3448, 0.75
      %v3557 = vmul.f32 %v3451, 0.75
      %v3558 = vmul.f32 %v3456, 0.75
      %v3559 = vmul.f32 %v3459, 0.75
      %v3560 = vmul.f32 %v3464, 0.75
      %v3561 = vmul.f32 %v3467, 0.75
      %v3562 = vmul.f32 %v3472, 0.75
      %v3563 = vmul.f32 %v3475, 0.75
      %v3564 = vmul.f32 %v3480, 0.75
      %v3565 = vmul.f32 %v3483, 0.75
      %v3566 = vmul.f32 %v3488, 0.75
      %v3567 = vmul.f32 %v3491, 0.75
      %v3568 = vmul.f32 %v3496, 0.75
      %v3569 = vmul.f32 %v3499, 0.75
      %v3570 = vmul.f32 %v3504, 0.75
      %v3571 = vmul.f32 %v3507, 0.75
      %v3572 = vmul.f32 %v3512, 0.75
      %v3573 = vmul.f32 %v3515, 0.75
      %v3574 = vmul.f32 %v3520, 0.75
      %v3575 = vmul.f32 %v3523, 0.75
      %v3576 = vmul.f32 %v3528, 0.75
      %v3577 = vmul.f32 %v3531, 0.75
      %v3578 = vmul.f32 %v3536, 0.75
      %v3579 = vmul.f32 %v3539, 0.75
      %v3580 = vmul.f32 %v3544, 0.75
      %v3581 = vmul.f32 %v3547, 0.75
      %3582 = vrot.lane.b32.xlu0 %v3424, 64
      %v3583 = vpop.permute.xlu0 %3582
      %3584 = vrot.lane.b32.xlu0 %v3427, 64
      %v3585 = vpop.permute.xlu0 %3584
      %3586 = vrot.lane.b32.xlu0 %v3432, 64
      %v3587 = vpop.permute.xlu0 %3586
      %3588 = vrot.lane.b32.xlu0 %v3435, 64
      %v3589 = vpop.permute.xlu0 %3588
      %3590 = vrot.lane.b32.xlu0 %v3440, 64
      %v3591 = vpop.permute.xlu0 %3590
      %3592 = vrot.lane.b32.xlu0 %v3443, 64
      %v3593 = vpop.permute.xlu0 %3592
      %3594 = vrot.lane.b32.xlu0 %v3448, 64
      %v3595 = vpop.permute.xlu0 %3594
      %3596 = vrot.lane.b32.xlu0 %v3451, 64
      %v3597 = vpop.permute.xlu0 %3596
      %3598 = vrot.lane.b32.xlu0 %v3456, 64
      %v3599 = vpop.permute.xlu0 %3598
      %3600 = vrot.lane.b32.xlu0 %v3459, 64
      %v3601 = vpop.permute.xlu0 %3600
      %3602 = vrot.lane.b32.xlu0 %v3464, 64
      %v3603 = vpop.permute.xlu0 %3602
      %3604 = vrot.lane.b32.xlu0 %v3467, 64
      %v3605 = vpop.permute.xlu0 %3604
      %3606 = vrot.lane.b32.xlu0 %v3472, 64
      %v3607 = vpop.permute.xlu0 %3606
      %3608 = vrot.lane.b32.xlu0 %v3475, 64
      %v3609 = vpop.permute.xlu0 %3608
      %3610 = vrot.lane.b32.xlu0 %v3480, 64
      %v3611 = vpop.permute.xlu0 %3610
      %3612 = vrot.lane.b32.xlu0 %v3483, 64
      %v3613 = vpop.permute.xlu0 %3612
      %3614 = vrot.lane.b32.xlu0 %v3488, 64
      %v3615 = vpop.permute.xlu0 %3614
      %3616 = vrot.lane.b32.xlu0 %v3491, 64
      %v3617 = vpop.permute.xlu0 %3616
      %3618 = vrot.lane.b32.xlu0 %v3496, 64
      %v3619 = vpop.permute.xlu0 %3618
      %3620 = vrot.lane.b32.xlu0 %v3499, 64
      %v3621 = vpop.permute.xlu0 %3620
      %3622 = vrot.lane.b32.xlu0 %v3504, 64
      %v3623 = vpop.permute.xlu0 %3622
      %3624 = vrot.lane.b32.xlu0 %v3507, 64
      %v3625 = vpop.permute.xlu0 %3624
      %3626 = vrot.lane.b32.xlu0 %v3512, 64
      %v3627 = vpop.permute.xlu0 %3626
      %3628 = vrot.lane.b32.xlu0 %v3515, 64
      %v3629 = vpop.permute.xlu0 %3628
      %3630 = vrot.lane.b32.xlu0 %v3520, 64
      %v3631 = vpop.permute.xlu0 %3630
      %3632 = vrot.lane.b32.xlu0 %v3523, 64
      %v3633 = vpop.permute.xlu0 %3632
      %3634 = vrot.lane.b32.xlu0 %v3528, 64
      %v3635 = vpop.permute.xlu0 %3634
      %3636 = vrot.lane.b32.xlu0 %v3531, 64
      %v3637 = vpop.permute.xlu0 %3636
      %3638 = vrot.lane.b32.xlu0 %v3536, 64
      %v3639 = vpop.permute.xlu0 %3638
      %3640 = vrot.lane.b32.xlu0 %v3539, 64
      %v3641 = vpop.permute.xlu0 %3640
      %3642 = vrot.lane.b32.xlu0 %v3544, 64
      %v3643 = vpop.permute.xlu0 %3642
      %3644 = vrot.lane.b32.xlu0 %v3547, 64
      %v3645 = vpop.permute.xlu0 %3644
      %v3646 = vmul.f32 %v3583, 0.25
      %v3647 = vmul.f32 %v3585, 0.25
      %v3648 = vmul.f32 %v3587, 0.25
      %v3649 = vmul.f32 %v3589, 0.25
      %v3650 = vmul.f32 %v3591, 0.25
      %v3651 = vmul.f32 %v3593, 0.25
      %v3652 = vmul.f32 %v3595, 0.25
      %v3653 = vmul.f32 %v3597, 0.25
      %v3654 = vmul.f32 %v3599, 0.25
      %v3655 = vmul.f32 %v3601, 0.25
      %v3656 = vmul.f32 %v3603, 0.25
      %v3657 = vmul.f32 %v3605, 0.25
      %v3658 = vmul.f32 %v3607, 0.25
      %v3659 = vmul.f32 %v3609, 0.25
      %v3660 = vmul.f32 %v3611, 0.25
      %v3661 = vmul.f32 %v3613, 0.25
      %v3662 = vmul.f32 %v3615, 0.25
      %v3663 = vmul.f32 %v3617, 0.25
      %v3664 = vmul.f32 %v3619, 0.25
      %v3665 = vmul.f32 %v3621, 0.25
      %v3666 = vmul.f32 %v3623, 0.25
      %v3667 = vmul.f32 %v3625, 0.25
      %v3668 = vmul.f32 %v3627, 0.25
      %v3669 = vmul.f32 %v3629, 0.25
      %v3670 = vmul.f32 %v3631, 0.25
      %v3671 = vmul.f32 %v3633, 0.25
      %v3672 = vmul.f32 %v3635, 0.25
      %v3673 = vmul.f32 %v3637, 0.25
      %v3674 = vmul.f32 %v3639, 0.25
      %v3675 = vmul.f32 %v3641, 0.25
      %v3676 = vmul.f32 %v3643, 0.25
      %v3677 = vmul.f32 %v3645, 0.25
      %v3678 = vadd.f32 %v3550, %v3646
      %v3679 = vadd.f32 %v3551, %v3647
      %v3680 = vadd.f32 %v3552, %v3648
      %v3681 = vadd.f32 %v3553, %v3649
      %v3682 = vadd.f32 %v3554, %v3650
      %v3683 = vadd.f32 %v3555, %v3651
      %v3684 = vadd.f32 %v3556, %v3652
      %v3685 = vadd.f32 %v3557, %v3653
      %v3686 = vadd.f32 %v3558, %v3654
      %v3687 = vadd.f32 %v3559, %v3655
      %v3688 = vadd.f32 %v3560, %v3656
      %v3689 = vadd.f32 %v3561, %v3657
      %v3690 = vadd.f32 %v3562, %v3658
      %v3691 = vadd.f32 %v3563, %v3659
      %v3692 = vadd.f32 %v3564, %v3660
      %v3693 = vadd.f32 %v3565, %v3661
      %v3694 = vadd.f32 %v3566, %v3662
      %v3695 = vadd.f32 %v3567, %v3663
      %v3696 = vadd.f32 %v3568, %v3664
      %v3697 = vadd.f32 %v3569, %v3665
      %v3698 = vadd.f32 %v3570, %v3666
      %v3699 = vadd.f32 %v3571, %v3667
      %v3700 = vadd.f32 %v3572, %v3668
      %v3701 = vadd.f32 %v3573, %v3669
      %v3702 = vadd.f32 %v3574, %v3670
      %v3703 = vadd.f32 %v3575, %v3671
      %v3704 = vadd.f32 %v3576, %v3672
      %v3705 = vadd.f32 %v3577, %v3673
      %v3706 = vadd.f32 %v3578, %v3674
      %v3707 = vadd.f32 %v3579, %v3675
      %v3708 = vadd.f32 %v3580, %v3676
      %v3709 = vadd.f32 %v3581, %v3677
      %3740 = vrot.lane.b32.xlu0 %v3424, 64
      %v3741 = vpop.permute.xlu0 %3740
      %3742 = vrot.lane.b32.xlu0 %v3427, 64
      %v3743 = vpop.permute.xlu0 %3742
      %3744 = vrot.lane.b32.xlu0 %v3432, 64
      %v3745 = vpop.permute.xlu0 %3744
      %3746 = vrot.lane.b32.xlu0 %v3435, 64
      %v3747 = vpop.permute.xlu0 %3746
      %3748 = vrot.lane.b32.xlu0 %v3440, 64
      %v3749 = vpop.permute.xlu0 %3748
      %3750 = vrot.lane.b32.xlu0 %v3443, 64
      %v3751 = vpop.permute.xlu0 %3750
      %3752 = vrot.lane.b32.xlu0 %v3448, 64
      %v3753 = vpop.permute.xlu0 %3752
      %3754 = vrot.lane.b32.xlu0 %v3451, 64
      %v3755 = vpop.permute.xlu0 %3754
      %3756 = vrot.lane.b32.xlu0 %v3456, 64
      %v3757 = vpop.permute.xlu0 %3756
      %3758 = vrot.lane.b32.xlu0 %v3459, 64
      %v3759 = vpop.permute.xlu0 %3758
      %3760 = vrot.lane.b32.xlu0 %v3464, 64
      %v3761 = vpop.permute.xlu0 %3760
      %3762 = vrot.lane.b32.xlu0 %v3467, 64
      %v3763 = vpop.permute.xlu0 %3762
      %3764 = vrot.lane.b32.xlu0 %v3472, 64
      %v3765 = vpop.permute.xlu0 %3764
      %3766 = vrot.lane.b32.xlu0 %v3475, 64
      %v3767 = vpop.permute.xlu0 %3766
      %3768 = vrot.lane.b32.xlu0 %v3480, 64
      %v3769 = vpop.permute.xlu0 %3768
      %3770 = vrot.lane.b32.xlu0 %v3483, 64
      %v3771 = vpop.permute.xlu0 %3770
      %3772 = vrot.lane.b32.xlu0 %v3488, 64
      %v3773 = vpop.permute.xlu0 %3772
      %3774 = vrot.lane.b32.xlu0 %v3491, 64
      %v3775 = vpop.permute.xlu0 %3774
      %3776 = vrot.lane.b32.xlu0 %v3496, 64
      %v3777 = vpop.permute.xlu0 %3776
      %3778 = vrot.lane.b32.xlu0 %v3499, 64
      %v3779 = vpop.permute.xlu0 %3778
      %3780 = vrot.lane.b32.xlu0 %v3504, 64
      %v3781 = vpop.permute.xlu0 %3780
      %3782 = vrot.lane.b32.xlu0 %v3507, 64
      %v3783 = vpop.permute.xlu0 %3782
      %3784 = vrot.lane.b32.xlu0 %v3512, 64
      %v3785 = vpop.permute.xlu0 %3784
      %3786 = vrot.lane.b32.xlu0 %v3515, 64
      %v3787 = vpop.permute.xlu0 %3786
      %3788 = vrot.lane.b32.xlu0 %v3520, 64
      %v3789 = vpop.permute.xlu0 %3788
      %3790 = vrot.lane.b32.xlu0 %v3523, 64
      %v3791 = vpop.permute.xlu0 %3790
      %3792 = vrot.lane.b32.xlu0 %v3528, 64
      %v3793 = vpop.permute.xlu0 %3792
      %3794 = vrot.lane.b32.xlu0 %v3531, 64
      %v3795 = vpop.permute.xlu0 %3794
      %3796 = vrot.lane.b32.xlu0 %v3536, 64
      %v3797 = vpop.permute.xlu0 %3796
      %3798 = vrot.lane.b32.xlu0 %v3539, 64
      %v3799 = vpop.permute.xlu0 %3798
      %v3830 = vmul.f32 %v3424, 0.25
      %v3831 = vmul.f32 %v3427, 0.25
      %v3832 = vmul.f32 %v3741, 0.25
      %v3833 = vmul.f32 %v3743, 0.25
      %v3834 = vmul.f32 %v3745, 0.25
      %v3835 = vmul.f32 %v3747, 0.25
      %v3836 = vmul.f32 %v3749, 0.25
      %v3837 = vmul.f32 %v3751, 0.25
      %v3838 = vmul.f32 %v3753, 0.25
      %v3839 = vmul.f32 %v3755, 0.25
      %v3840 = vmul.f32 %v3757, 0.25
      %v3841 = vmul.f32 %v3759, 0.25
      %v3842 = vmul.f32 %v3761, 0.25
      %v3843 = vmul.f32 %v3763, 0.25
      %v3844 = vmul.f32 %v3765, 0.25
      %v3845 = vmul.f32 %v3767, 0.25
      %v3846 = vmul.f32 %v3769, 0.25
      %v3847 = vmul.f32 %v3771, 0.25
      %v3848 = vmul.f32 %v3773, 0.25
      %v3849 = vmul.f32 %v3775, 0.25
      %v3850 = vmul.f32 %v3777, 0.25
      %v3851 = vmul.f32 %v3779, 0.25
      %v3852 = vmul.f32 %v3781, 0.25
      %v3853 = vmul.f32 %v3783, 0.25
      %v3854 = vmul.f32 %v3785, 0.25
      %v3855 = vmul.f32 %v3787, 0.25
      %v3856 = vmul.f32 %v3789, 0.25
      %v3857 = vmul.f32 %v3791, 0.25
      %v3858 = vmul.f32 %v3793, 0.25
      %v3859 = vmul.f32 %v3795, 0.25
      %v3860 = vmul.f32 %v3797, 0.25
      %v3861 = vmul.f32 %v3799, 0.25
      %v3862 = vadd.f32 %v3550, %v3830
      %v3863 = vadd.f32 %v3551, %v3831
      %v3864 = vadd.f32 %v3552, %v3832
      %v3865 = vadd.f32 %v3553, %v3833
      %v3866 = vadd.f32 %v3554, %v3834
      %v3867 = vadd.f32 %v3555, %v3835
      %v3868 = vadd.f32 %v3556, %v3836
      %v3869 = vadd.f32 %v3557, %v3837
      %v3870 = vadd.f32 %v3558, %v3838
      %v3871 = vadd.f32 %v3559, %v3839
      %v3872 = vadd.f32 %v3560, %v3840
      %v3873 = vadd.f32 %v3561, %v3841
      %v3874 = vadd.f32 %v3562, %v3842
      %v3875 = vadd.f32 %v3563, %v3843
      %v3876 = vadd.f32 %v3564, %v3844
      %v3877 = vadd.f32 %v3565, %v3845
      %v3878 = vadd.f32 %v3566, %v3846
      %v3879 = vadd.f32 %v3567, %v3847
      %v3880 = vadd.f32 %v3568, %v3848
      %v3881 = vadd.f32 %v3569, %v3849
      %v3882 = vadd.f32 %v3570, %v3850
      %v3883 = vadd.f32 %v3571, %v3851
      %v3884 = vadd.f32 %v3572, %v3852
      %v3885 = vadd.f32 %v3573, %v3853
      %v3886 = vadd.f32 %v3574, %v3854
      %v3887 = vadd.f32 %v3575, %v3855
      %v3888 = vadd.f32 %v3576, %v3856
      %v3889 = vadd.f32 %v3577, %v3857
      %v3890 = vadd.f32 %v3578, %v3858
      %v3891 = vadd.f32 %v3579, %v3859
      %v3892 = vadd.f32 %v3580, %v3860
      %v3893 = vadd.f32 %v3581, %v3861
      %3896 = vrot.lane.b32.xlu0 %v3544, 64
      %v3897 = vpop.permute.xlu0 %3896
      %3898 = vrot.lane.b32.xlu0 %v3547, 64
      %v3899 = vpop.permute.xlu0 %3898
      %v3902 = vmul.f32 %v3432, 0.25
      %v3903 = vmul.f32 %v3435, 0.25
      %v3904 = vmul.f32 %v3440, 0.25
      %v3905 = vmul.f32 %v3443, 0.25
      %v3906 = vmul.f32 %v3448, 0.25
      %v3907 = vmul.f32 %v3451, 0.25
      %v3908 = vmul.f32 %v3456, 0.25
      %v3909 = vmul.f32 %v3459, 0.25
      %v3910 = vmul.f32 %v3464, 0.25
      %v3911 = vmul.f32 %v3467, 0.25
      %v3912 = vmul.f32 %v3472, 0.25
      %v3913 = vmul.f32 %v3475, 0.25
      %v3914 = vmul.f32 %v3480, 0.25
      %v3915 = vmul.f32 %v3483, 0.25
      %v3916 = vmul.f32 %v3488, 0.25
      %v3917 = vmul.f32 %v3491, 0.25
      %v3918 = vmul.f32 %v3496, 0.25
      %v3919 = vmul.f32 %v3499, 0.25
      %v3920 = vmul.f32 %v3504, 0.25
      %v3921 = vmul.f32 %v3507, 0.25
      %v3922 = vmul.f32 %v3512, 0.25
      %v3923 = vmul.f32 %v3515, 0.25
      %v3924 = vmul.f32 %v3520, 0.25
      %v3925 = vmul.f32 %v3523, 0.25
      %v3926 = vmul.f32 %v3528, 0.25
      %v3927 = vmul.f32 %v3531, 0.25
      %v3928 = vmul.f32 %v3536, 0.25
      %v3929 = vmul.f32 %v3539, 0.25
      %v3930 = vmul.f32 %v3544, 0.25
      %v3931 = vmul.f32 %v3547, 0.25
      %v3932 = vmul.f32 %v3897, 0.25
      %v3933 = vmul.f32 %v3899, 0.25
      %3966 = vrot.lane.b32.xlu0 %v3902, 64
      %v3967 = vpop.permute.xlu0 %3966
      %3968 = vrot.lane.b32.xlu0 %v3903, 64
      %v3969 = vpop.permute.xlu0 %3968
      %3970 = vrot.lane.b32.xlu0 %v3904, 64
      %v3971 = vpop.permute.xlu0 %3970
      %3972 = vrot.lane.b32.xlu0 %v3905, 64
      %v3973 = vpop.permute.xlu0 %3972
      %3974 = vrot.lane.b32.xlu0 %v3906, 64
      %v3975 = vpop.permute.xlu0 %3974
      %3976 = vrot.lane.b32.xlu0 %v3907, 64
      %v3977 = vpop.permute.xlu0 %3976
      %3978 = vrot.lane.b32.xlu0 %v3908, 64
      %v3979 = vpop.permute.xlu0 %3978
      %3980 = vrot.lane.b32.xlu0 %v3909, 64
      %v3981 = vpop.permute.xlu0 %3980
      %3982 = vrot.lane.b32.xlu0 %v3910, 64
      %v3983 = vpop.permute.xlu0 %3982
      %3984 = vrot.lane.b32.xlu0 %v3911, 64
      %v3985 = vpop.permute.xlu0 %3984
      %3986 = vrot.lane.b32.xlu0 %v3912, 64
      %v3987 = vpop.permute.xlu0 %3986
      %3988 = vrot.lane.b32.xlu0 %v3913, 64
      %v3989 = vpop.permute.xlu0 %3988
      %3990 = vrot.lane.b32.xlu0 %v3914, 64
      %v3991 = vpop.permute.xlu0 %3990
      %3992 = vrot.lane.b32.xlu0 %v3915, 64
      %v3993 = vpop.permute.xlu0 %3992
      %3994 = vrot.lane.b32.xlu0 %v3916, 64
      %v3995 = vpop.permute.xlu0 %3994
      %3996 = vrot.lane.b32.xlu0 %v3917, 64
      %v3997 = vpop.permute.xlu0 %3996
      %3998 = vrot.lane.b32.xlu0 %v3918, 64
      %v3999 = vpop.permute.xlu0 %3998
      %4000 = vrot.lane.b32.xlu0 %v3919, 64
      %v4001 = vpop.permute.xlu0 %4000
      %4002 = vrot.lane.b32.xlu0 %v3920, 64
      %v4003 = vpop.permute.xlu0 %4002
      %4004 = vrot.lane.b32.xlu0 %v3921, 64
      %v4005 = vpop.permute.xlu0 %4004
      %4006 = vrot.lane.b32.xlu0 %v3922, 64
      %v4007 = vpop.permute.xlu0 %4006
      %4008 = vrot.lane.b32.xlu0 %v3923, 64
      %v4009 = vpop.permute.xlu0 %4008
      %4010 = vrot.lane.b32.xlu0 %v3924, 64
      %v4011 = vpop.permute.xlu0 %4010
      %4012 = vrot.lane.b32.xlu0 %v3925, 64
      %v4013 = vpop.permute.xlu0 %4012
      %4014 = vrot.lane.b32.xlu0 %v3926, 64
      %v4015 = vpop.permute.xlu0 %4014
      %4016 = vrot.lane.b32.xlu0 %v3927, 64
      %v4017 = vpop.permute.xlu0 %4016
      %4018 = vrot.lane.b32.xlu0 %v3928, 64
      %v4019 = vpop.permute.xlu0 %4018
      %4020 = vrot.lane.b32.xlu0 %v3929, 64
      %v4021 = vpop.permute.xlu0 %4020
      %4022 = vrot.lane.b32.xlu0 %v3930, 64
      %v4023 = vpop.permute.xlu0 %4022
      %4024 = vrot.lane.b32.xlu0 %v3931, 64
      %v4025 = vpop.permute.xlu0 %4024
      %4026 = vrot.lane.b32.xlu0 %v3932, 64
      %v4027 = vpop.permute.xlu0 %4026
      %4028 = vrot.lane.b32.xlu0 %v3933, 64
      %v4029 = vpop.permute.xlu0 %4028
      %v4062 = vadd.f32 %v3550, %v3967
      %v4063 = vadd.f32 %v3551, %v3969
      %v4064 = vadd.f32 %v3552, %v3971
      %v4065 = vadd.f32 %v3553, %v3973
      %v4066 = vadd.f32 %v3554, %v3975
      %v4067 = vadd.f32 %v3555, %v3977
      %v4068 = vadd.f32 %v3556, %v3979
      %v4069 = vadd.f32 %v3557, %v3981
      %v4070 = vadd.f32 %v3558, %v3983
      %v4071 = vadd.f32 %v3559, %v3985
      %v4072 = vadd.f32 %v3560, %v3987
      %v4073 = vadd.f32 %v3561, %v3989
      %v4074 = vadd.f32 %v3562, %v3991
      %v4075 = vadd.f32 %v3563, %v3993
      %v4076 = vadd.f32 %v3564, %v3995
      %v4077 = vadd.f32 %v3565, %v3997
      %v4078 = vadd.f32 %v3566, %v3999
      %v4079 = vadd.f32 %v3567, %v4001
      %v4080 = vadd.f32 %v3568, %v4003
      %v4081 = vadd.f32 %v3569, %v4005
      %v4082 = vadd.f32 %v3570, %v4007
      %v4083 = vadd.f32 %v3571, %v4009
      %v4084 = vadd.f32 %v3572, %v4011
      %v4085 = vadd.f32 %v3573, %v4013
      %v4086 = vadd.f32 %v3574, %v4015
      %v4087 = vadd.f32 %v3575, %v4017
      %v4088 = vadd.f32 %v3576, %v4019
      %v4089 = vadd.f32 %v3577, %v4021
      %v4090 = vadd.f32 %v3578, %v4023
      %v4091 = vadd.f32 %v3579, %v4025
      %v4092 = vadd.f32 %v3580, %v4027
      %v4093 = vadd.f32 %v3581, %v4029
      %4126 = vrot.lane.b32.xlu0 %v3678, 32
      %v4127 = vpop.permute.xlu0 %4126
      %4128 = vrot.lane.b32.xlu0 %v3679, 32
      %v4129 = vpop.permute.xlu0 %4128
      %4130 = vrot.lane.b32.xlu0 %v3680, 32
      %v4131 = vpop.permute.xlu0 %4130
      %4132 = vrot.lane.b32.xlu0 %v3681, 32
      %v4133 = vpop.permute.xlu0 %4132
      %4134 = vrot.lane.b32.xlu0 %v3682, 32
      %v4135 = vpop.permute.xlu0 %4134
      %4136 = vrot.lane.b32.xlu0 %v3683, 32
      %v4137 = vpop.permute.xlu0 %4136
      %4138 = vrot.lane.b32.xlu0 %v3684, 32
      %v4139 = vpop.permute.xlu0 %4138
      %4140 = vrot.lane.b32.xlu0 %v3685, 32
      %v4141 = vpop.permute.xlu0 %4140
      %4142 = vrot.lane.b32.xlu0 %v3686, 32
      %v4143 = vpop.permute.xlu0 %4142
      %4144 = vrot.lane.b32.xlu0 %v3687, 32
      %v4145 = vpop.permute.xlu0 %4144
      %4146 = vrot.lane.b32.xlu0 %v3688, 32
      %v4147 = vpop.permute.xlu0 %4146
      %4148 = vrot.lane.b32.xlu0 %v3689, 32
      %v4149 = vpop.permute.xlu0 %4148
      %4150 = vrot.lane.b32.xlu0 %v3690, 32
      %v4151 = vpop.permute.xlu0 %4150
      %4152 = vrot.lane.b32.xlu0 %v3691, 32
      %v4153 = vpop.permute.xlu0 %4152
      %4154 = vrot.lane.b32.xlu0 %v3692, 32
      %v4155 = vpop.permute.xlu0 %4154
      %4156 = vrot.lane.b32.xlu0 %v3693, 32
      %v4157 = vpop.permute.xlu0 %4156
      %4158 = vrot.lane.b32.xlu0 %v3694, 32
      %v4159 = vpop.permute.xlu0 %4158
      %4160 = vrot.lane.b32.xlu0 %v3695, 32
      %v4161 = vpop.permute.xlu0 %4160
      %4162 = vrot.lane.b32.xlu0 %v3696, 32
      %v4163 = vpop.permute.xlu0 %4162
      %4164 = vrot.lane.b32.xlu0 %v3697, 32
      %v4165 = vpop.permute.xlu0 %4164
      %4166 = vrot.lane.b32.xlu0 %v3698, 32
      %v4167 = vpop.permute.xlu0 %4166
      %4168 = vrot.lane.b32.xlu0 %v3699, 32
      %v4169 = vpop.permute.xlu0 %4168
      %4170 = vrot.lane.b32.xlu0 %v3700, 32
      %v4171 = vpop.permute.xlu0 %4170
      %4172 = vrot.lane.b32.xlu0 %v3701, 32
      %v4173 = vpop.permute.xlu0 %4172
      %4174 = vrot.lane.b32.xlu0 %v3702, 32
      %v4175 = vpop.permute.xlu0 %4174
      %4176 = vrot.lane.b32.xlu0 %v3703, 32
      %v4177 = vpop.permute.xlu0 %4176
      %4178 = vrot.lane.b32.xlu0 %v3704, 32
      %v4179 = vpop.permute.xlu0 %4178
      %4180 = vrot.lane.b32.xlu0 %v3705, 32
      %v4181 = vpop.permute.xlu0 %4180
      %4182 = vrot.lane.b32.xlu0 %v3706, 32
      %v4183 = vpop.permute.xlu0 %4182
      %4184 = vrot.lane.b32.xlu0 %v3707, 32
      %v4185 = vpop.permute.xlu0 %4184
      %4186 = vrot.lane.b32.xlu0 %v3708, 32
      %v4187 = vpop.permute.xlu0 %4186
      %4188 = vrot.lane.b32.xlu0 %v3709, 32
      %v4189 = vpop.permute.xlu0 %4188
      %4254 = vrot.lane.b32.xlu0 %v4062, 32
      %v4255 = vpop.permute.xlu0 %4254
      %4256 = vrot.lane.b32.xlu0 %v4063, 32
      %v4257 = vpop.permute.xlu0 %4256
      %4258 = vrot.lane.b32.xlu0 %v4064, 32
      %v4259 = vpop.permute.xlu0 %4258
      %4260 = vrot.lane.b32.xlu0 %v4065, 32
      %v4261 = vpop.permute.xlu0 %4260
      %4262 = vrot.lane.b32.xlu0 %v4066, 32
      %v4263 = vpop.permute.xlu0 %4262
      %4264 = vrot.lane.b32.xlu0 %v4067, 32
      %v4265 = vpop.permute.xlu0 %4264
      %4266 = vrot.lane.b32.xlu0 %v4068, 32
      %v4267 = vpop.permute.xlu0 %4266
      %4268 = vrot.lane.b32.xlu0 %v4069, 32
      %v4269 = vpop.permute.xlu0 %4268
      %4270 = vrot.lane.b32.xlu0 %v4070, 32
      %v4271 = vpop.permute.xlu0 %4270
      %4272 = vrot.lane.b32.xlu0 %v4071, 32
      %v4273 = vpop.permute.xlu0 %4272
      %4274 = vrot.lane.b32.xlu0 %v4072, 32
      %v4275 = vpop.permute.xlu0 %4274
      %4276 = vrot.lane.b32.xlu0 %v4073, 32
      %v4277 = vpop.permute.xlu0 %4276
      %4278 = vrot.lane.b32.xlu0 %v4074, 32
      %v4279 = vpop.permute.xlu0 %4278
      %4280 = vrot.lane.b32.xlu0 %v4075, 32
      %v4281 = vpop.permute.xlu0 %4280
      %4282 = vrot.lane.b32.xlu0 %v4076, 32
      %v4283 = vpop.permute.xlu0 %4282
      %4284 = vrot.lane.b32.xlu0 %v4077, 32
      %v4285 = vpop.permute.xlu0 %4284
      %4286 = vrot.lane.b32.xlu0 %v4078, 32
      %v4287 = vpop.permute.xlu0 %4286
      %4288 = vrot.lane.b32.xlu0 %v4079, 32
      %v4289 = vpop.permute.xlu0 %4288
      %4290 = vrot.lane.b32.xlu0 %v4080, 32
      %v4291 = vpop.permute.xlu0 %4290
      %4292 = vrot.lane.b32.xlu0 %v4081, 32
      %v4293 = vpop.permute.xlu0 %4292
      %4294 = vrot.lane.b32.xlu0 %v4082, 32
      %v4295 = vpop.permute.xlu0 %4294
      %4296 = vrot.lane.b32.xlu0 %v4083, 32
      %v4297 = vpop.permute.xlu0 %4296
      %4298 = vrot.lane.b32.xlu0 %v4084, 32
      %v4299 = vpop.permute.xlu0 %4298
      %4300 = vrot.lane.b32.xlu0 %v4085, 32
      %v4301 = vpop.permute.xlu0 %4300
      %4302 = vrot.lane.b32.xlu0 %v4086, 32
      %v4303 = vpop.permute.xlu0 %4302
      %4304 = vrot.lane.b32.xlu0 %v4087, 32
      %v4305 = vpop.permute.xlu0 %4304
      %4306 = vrot.lane.b32.xlu0 %v4088, 32
      %v4307 = vpop.permute.xlu0 %4306
      %4308 = vrot.lane.b32.xlu0 %v4089, 32
      %v4309 = vpop.permute.xlu0 %4308
      %4310 = vrot.lane.b32.xlu0 %v4090, 32
      %v4311 = vpop.permute.xlu0 %4310
      %4312 = vrot.lane.b32.xlu0 %v4091, 32
      %v4313 = vpop.permute.xlu0 %4312
      %4314 = vrot.lane.b32.xlu0 %v4092, 32
      %v4315 = vpop.permute.xlu0 %4314
      %4316 = vrot.lane.b32.xlu0 %v4093, 32
      %v4317 = vpop.permute.xlu0 %4316
      %v4350 = vsel %vm1354, %v3862, %v4127
      %v4351 = vsel %vm1354, %v3863, %v4129
      %v4352 = vsel %vm1354, %v3864, %v4131
      %v4353 = vsel %vm1354, %v3865, %v4133
      %v4354 = vsel %vm1354, %v3866, %v4135
      %v4355 = vsel %vm1354, %v3867, %v4137
      %v4356 = vsel %vm1354, %v3868, %v4139
      %v4357 = vsel %vm1354, %v3869, %v4141
      %v4358 = vsel %vm1354, %v3870, %v4143
      %v4359 = vsel %vm1354, %v3871, %v4145
      %v4360 = vsel %vm1354, %v3872, %v4147
      %v4361 = vsel %vm1354, %v3873, %v4149
      %v4362 = vsel %vm1354, %v3874, %v4151
      %v4363 = vsel %vm1354, %v3875, %v4153
      %v4364 = vsel %vm1354, %v3876, %v4155
      %v4365 = vsel %vm1354, %v3877, %v4157
      %v4366 = vsel %vm1354, %v3878, %v4159
      %v4367 = vsel %vm1354, %v3879, %v4161
      %v4368 = vsel %vm1354, %v3880, %v4163
      %v4369 = vsel %vm1354, %v3881, %v4165
      %v4370 = vsel %vm1354, %v3882, %v4167
      %v4371 = vsel %vm1354, %v3883, %v4169
      %v4372 = vsel %vm1354, %v3884, %v4171
      %v4373 = vsel %vm1354, %v3885, %v4173
      %v4374 = vsel %vm1354, %v3886, %v4175
      %v4375 = vsel %vm1354, %v3887, %v4177
      %v4376 = vsel %vm1354, %v3888, %v4179
      %v4377 = vsel %vm1354, %v3889, %v4181
      %v4378 = vsel %vm1354, %v3890, %v4183
      %v4379 = vsel %vm1354, %v3891, %v4185
      %v4380 = vsel %vm1354, %v3892, %v4187
      %v4381 = vsel %vm1354, %v3893, %v4189
      %v4382 = vsel %vm1387, %v4350, %v3678
      %v4383 = vsel %vm1387, %v4351, %v3679
      %v4384 = vsel %vm1387, %v4352, %v3680
      %v4385 = vsel %vm1387, %v4353, %v3681
      %v4386 = vsel %vm1387, %v4354, %v3682
      %v4387 = vsel %vm1387, %v4355, %v3683
      %v4388 = vsel %vm1387, %v4356, %v3684
      %v4389 = vsel %vm1387, %v4357, %v3685
      %v4390 = vsel %vm1387, %v4358, %v3686
      %v4391 = vsel %vm1387, %v4359, %v3687
      %v4392 = vsel %vm1387, %v4360, %v3688
      %v4393 = vsel %vm1387, %v4361, %v3689
      %v4394 = vsel %vm1387, %v4362, %v3690
      %v4395 = vsel %vm1387, %v4363, %v3691
      %v4396 = vsel %vm1387, %v4364, %v3692
      %v4397 = vsel %vm1387, %v4365, %v3693
      %v4398 = vsel %vm1387, %v4366, %v3694
      %v4399 = vsel %vm1387, %v4367, %v3695
      %v4400 = vsel %vm1387, %v4368, %v3696
      %v4401 = vsel %vm1387, %v4369, %v3697
      %v4402 = vsel %vm1387, %v4370, %v3698
      %v4403 = vsel %vm1387, %v4371, %v3699
      %v4404 = vsel %vm1387, %v4372, %v3700
      %v4405 = vsel %vm1387, %v4373, %v3701
      %v4406 = vsel %vm1387, %v4374, %v3702
      %v4407 = vsel %vm1387, %v4375, %v3703
      %v4408 = vsel %vm1387, %v4376, %v3704
      %v4409 = vsel %vm1387, %v4377, %v3705
      %v4410 = vsel %vm1387, %v4378, %v3706
      %v4411 = vsel %vm1387, %v4379, %v3707
      %v4412 = vsel %vm1387, %v4380, %v3708
      %v4413 = vsel %vm1387, %v4381, %v3709
      %v4414 = vsel %vm1420, %v4382, %v4255
      %v4415 = vsel %vm1420, %v4383, %v4257
      %v4416 = vsel %vm1420, %v4384, %v4259
      %v4417 = vsel %vm1420, %v4385, %v4261
      %v4418 = vsel %vm1420, %v4386, %v4263
      %v4419 = vsel %vm1420, %v4387, %v4265
      %v4420 = vsel %vm1420, %v4388, %v4267
      %v4421 = vsel %vm1420, %v4389, %v4269
      %v4422 = vsel %vm1420, %v4390, %v4271
      %v4423 = vsel %vm1420, %v4391, %v4273
      %v4424 = vsel %vm1420, %v4392, %v4275
      %v4425 = vsel %vm1420, %v4393, %v4277
      %v4426 = vsel %vm1420, %v4394, %v4279
      %v4427 = vsel %vm1420, %v4395, %v4281
      %v4428 = vsel %vm1420, %v4396, %v4283
      %v4429 = vsel %vm1420, %v4397, %v4285
      %v4430 = vsel %vm1420, %v4398, %v4287
      %v4431 = vsel %vm1420, %v4399, %v4289
      %v4432 = vsel %vm1420, %v4400, %v4291
      %v4433 = vsel %vm1420, %v4401, %v4293
      %v4434 = vsel %vm1420, %v4402, %v4295
      %v4435 = vsel %vm1420, %v4403, %v4297
      %v4436 = vsel %vm1420, %v4404, %v4299
      %v4437 = vsel %vm1420, %v4405, %v4301
      %v4438 = vsel %vm1420, %v4406, %v4303
      %v4439 = vsel %vm1420, %v4407, %v4305
      %v4440 = vsel %vm1420, %v4408, %v4307
      %v4441 = vsel %vm1420, %v4409, %v4309
      %v4442 = vsel %vm1420, %v4410, %v4311
      %v4443 = vsel %vm1420, %v4411, %v4313
      %v4444 = vsel %vm1420, %v4412, %v4315
      %v4445 = vsel %vm1420, %v4413, %v4317
      %4478 = vrot.lane.b32.xlu0 %v3862, 96
      %v4479 = vpop.permute.xlu0 %4478
      %4480 = vrot.lane.b32.xlu0 %v3863, 96
      %v4481 = vpop.permute.xlu0 %4480
      %4482 = vrot.lane.b32.xlu0 %v3864, 96
      %v4483 = vpop.permute.xlu0 %4482
      %4484 = vrot.lane.b32.xlu0 %v3865, 96
      %v4485 = vpop.permute.xlu0 %4484
      %4486 = vrot.lane.b32.xlu0 %v3866, 96
      %v4487 = vpop.permute.xlu0 %4486
      %4488 = vrot.lane.b32.xlu0 %v3867, 96
      %v4489 = vpop.permute.xlu0 %4488
      %4490 = vrot.lane.b32.xlu0 %v3868, 96
      %v4491 = vpop.permute.xlu0 %4490
      %4492 = vrot.lane.b32.xlu0 %v3869, 96
      %v4493 = vpop.permute.xlu0 %4492
      %4494 = vrot.lane.b32.xlu0 %v3870, 96
      %v4495 = vpop.permute.xlu0 %4494
      %4496 = vrot.lane.b32.xlu0 %v3871, 96
      %v4497 = vpop.permute.xlu0 %4496
      %4498 = vrot.lane.b32.xlu0 %v3872, 96
      %v4499 = vpop.permute.xlu0 %4498
      %4500 = vrot.lane.b32.xlu0 %v3873, 96
      %v4501 = vpop.permute.xlu0 %4500
      %4502 = vrot.lane.b32.xlu0 %v3874, 96
      %v4503 = vpop.permute.xlu0 %4502
      %4504 = vrot.lane.b32.xlu0 %v3875, 96
      %v4505 = vpop.permute.xlu0 %4504
      %4506 = vrot.lane.b32.xlu0 %v3876, 96
      %v4507 = vpop.permute.xlu0 %4506
      %4508 = vrot.lane.b32.xlu0 %v3877, 96
      %v4509 = vpop.permute.xlu0 %4508
      %4510 = vrot.lane.b32.xlu0 %v3878, 96
      %v4511 = vpop.permute.xlu0 %4510
      %4512 = vrot.lane.b32.xlu0 %v3879, 96
      %v4513 = vpop.permute.xlu0 %4512
      %4514 = vrot.lane.b32.xlu0 %v3880, 96
      %v4515 = vpop.permute.xlu0 %4514
      %4516 = vrot.lane.b32.xlu0 %v3881, 96
      %v4517 = vpop.permute.xlu0 %4516
      %4518 = vrot.lane.b32.xlu0 %v3882, 96
      %v4519 = vpop.permute.xlu0 %4518
      %4520 = vrot.lane.b32.xlu0 %v3883, 96
      %v4521 = vpop.permute.xlu0 %4520
      %4522 = vrot.lane.b32.xlu0 %v3884, 96
      %v4523 = vpop.permute.xlu0 %4522
      %4524 = vrot.lane.b32.xlu0 %v3885, 96
      %v4525 = vpop.permute.xlu0 %4524
      %4526 = vrot.lane.b32.xlu0 %v3886, 96
      %v4527 = vpop.permute.xlu0 %4526
      %4528 = vrot.lane.b32.xlu0 %v3887, 96
      %v4529 = vpop.permute.xlu0 %4528
      %4530 = vrot.lane.b32.xlu0 %v3888, 96
      %v4531 = vpop.permute.xlu0 %4530
      %4532 = vrot.lane.b32.xlu0 %v3889, 96
      %v4533 = vpop.permute.xlu0 %4532
      %4534 = vrot.lane.b32.xlu0 %v3890, 96
      %v4535 = vpop.permute.xlu0 %4534
      %4536 = vrot.lane.b32.xlu0 %v3891, 96
      %v4537 = vpop.permute.xlu0 %4536
      %4538 = vrot.lane.b32.xlu0 %v3892, 96
      %v4539 = vpop.permute.xlu0 %4538
      %4540 = vrot.lane.b32.xlu0 %v3893, 96
      %v4541 = vpop.permute.xlu0 %4540
      %4574 = vrot.lane.b32.xlu0 %v3678, 96
      %v4575 = vpop.permute.xlu0 %4574
      %4576 = vrot.lane.b32.xlu0 %v3679, 96
      %v4577 = vpop.permute.xlu0 %4576
      %4578 = vrot.lane.b32.xlu0 %v3680, 96
      %v4579 = vpop.permute.xlu0 %4578
      %4580 = vrot.lane.b32.xlu0 %v3681, 96
      %v4581 = vpop.permute.xlu0 %4580
      %4582 = vrot.lane.b32.xlu0 %v3682, 96
      %v4583 = vpop.permute.xlu0 %4582
      %4584 = vrot.lane.b32.xlu0 %v3683, 96
      %v4585 = vpop.permute.xlu0 %4584
      %4586 = vrot.lane.b32.xlu0 %v3684, 96
      %v4587 = vpop.permute.xlu0 %4586
      %4588 = vrot.lane.b32.xlu0 %v3685, 96
      %v4589 = vpop.permute.xlu0 %4588
      %4590 = vrot.lane.b32.xlu0 %v3686, 96
      %v4591 = vpop.permute.xlu0 %4590
      %4592 = vrot.lane.b32.xlu0 %v3687, 96
      %v4593 = vpop.permute.xlu0 %4592
      %4594 = vrot.lane.b32.xlu0 %v3688, 96
      %v4595 = vpop.permute.xlu0 %4594
      %4596 = vrot.lane.b32.xlu0 %v3689, 96
      %v4597 = vpop.permute.xlu0 %4596
      %4598 = vrot.lane.b32.xlu0 %v3690, 96
      %v4599 = vpop.permute.xlu0 %4598
      %4600 = vrot.lane.b32.xlu0 %v3691, 96
      %v4601 = vpop.permute.xlu0 %4600
      %4602 = vrot.lane.b32.xlu0 %v3692, 96
      %v4603 = vpop.permute.xlu0 %4602
      %4604 = vrot.lane.b32.xlu0 %v3693, 96
      %v4605 = vpop.permute.xlu0 %4604
      %4606 = vrot.lane.b32.xlu0 %v3694, 96
      %v4607 = vpop.permute.xlu0 %4606
      %4608 = vrot.lane.b32.xlu0 %v3695, 96
      %v4609 = vpop.permute.xlu0 %4608
      %4610 = vrot.lane.b32.xlu0 %v3696, 96
      %v4611 = vpop.permute.xlu0 %4610
      %4612 = vrot.lane.b32.xlu0 %v3697, 96
      %v4613 = vpop.permute.xlu0 %4612
      %4614 = vrot.lane.b32.xlu0 %v3698, 96
      %v4615 = vpop.permute.xlu0 %4614
      %4616 = vrot.lane.b32.xlu0 %v3699, 96
      %v4617 = vpop.permute.xlu0 %4616
      %4618 = vrot.lane.b32.xlu0 %v3700, 96
      %v4619 = vpop.permute.xlu0 %4618
      %4620 = vrot.lane.b32.xlu0 %v3701, 96
      %v4621 = vpop.permute.xlu0 %4620
      %4622 = vrot.lane.b32.xlu0 %v3702, 96
      %v4623 = vpop.permute.xlu0 %4622
      %4624 = vrot.lane.b32.xlu0 %v3703, 96
      %v4625 = vpop.permute.xlu0 %4624
      %4626 = vrot.lane.b32.xlu0 %v3704, 96
      %v4627 = vpop.permute.xlu0 %4626
      %4628 = vrot.lane.b32.xlu0 %v3705, 96
      %v4629 = vpop.permute.xlu0 %4628
      %4630 = vrot.lane.b32.xlu0 %v3706, 96
      %v4631 = vpop.permute.xlu0 %4630
      %4632 = vrot.lane.b32.xlu0 %v3707, 96
      %v4633 = vpop.permute.xlu0 %4632
      %4634 = vrot.lane.b32.xlu0 %v3708, 96
      %v4635 = vpop.permute.xlu0 %4634
      %4636 = vrot.lane.b32.xlu0 %v3709, 96
      %v4637 = vpop.permute.xlu0 %4636
      %v4670 = vsel %vm1354, %v4479, %v3678
      %v4671 = vsel %vm1354, %v4481, %v3679
      %v4672 = vsel %vm1354, %v4483, %v3680
      %v4673 = vsel %vm1354, %v4485, %v3681
      %v4674 = vsel %vm1354, %v4487, %v3682
      %v4675 = vsel %vm1354, %v4489, %v3683
      %v4676 = vsel %vm1354, %v4491, %v3684
      %v4677 = vsel %vm1354, %v4493, %v3685
      %v4678 = vsel %vm1354, %v4495, %v3686
      %v4679 = vsel %vm1354, %v4497, %v3687
      %v4680 = vsel %vm1354, %v4499, %v3688
      %v4681 = vsel %vm1354, %v4501, %v3689
      %v4682 = vsel %vm1354, %v4503, %v3690
      %v4683 = vsel %vm1354, %v4505, %v3691
      %v4684 = vsel %vm1354, %v4507, %v3692
      %v4685 = vsel %vm1354, %v4509, %v3693
      %v4686 = vsel %vm1354, %v4511, %v3694
      %v4687 = vsel %vm1354, %v4513, %v3695
      %v4688 = vsel %vm1354, %v4515, %v3696
      %v4689 = vsel %vm1354, %v4517, %v3697
      %v4690 = vsel %vm1354, %v4519, %v3698
      %v4691 = vsel %vm1354, %v4521, %v3699
      %v4692 = vsel %vm1354, %v4523, %v3700
      %v4693 = vsel %vm1354, %v4525, %v3701
      %v4694 = vsel %vm1354, %v4527, %v3702
      %v4695 = vsel %vm1354, %v4529, %v3703
      %v4696 = vsel %vm1354, %v4531, %v3704
      %v4697 = vsel %vm1354, %v4533, %v3705
      %v4698 = vsel %vm1354, %v4535, %v3706
      %v4699 = vsel %vm1354, %v4537, %v3707
      %v4700 = vsel %vm1354, %v4539, %v3708
      %v4701 = vsel %vm1354, %v4541, %v3709
      %v4702 = vsel %vm1387, %v4670, %v4575
      %v4703 = vsel %vm1387, %v4671, %v4577
      %v4704 = vsel %vm1387, %v4672, %v4579
      %v4705 = vsel %vm1387, %v4673, %v4581
      %v4706 = vsel %vm1387, %v4674, %v4583
      %v4707 = vsel %vm1387, %v4675, %v4585
      %v4708 = vsel %vm1387, %v4676, %v4587
      %v4709 = vsel %vm1387, %v4677, %v4589
      %v4710 = vsel %vm1387, %v4678, %v4591
      %v4711 = vsel %vm1387, %v4679, %v4593
      %v4712 = vsel %vm1387, %v4680, %v4595
      %v4713 = vsel %vm1387, %v4681, %v4597
      %v4714 = vsel %vm1387, %v4682, %v4599
      %v4715 = vsel %vm1387, %v4683, %v4601
      %v4716 = vsel %vm1387, %v4684, %v4603
      %v4717 = vsel %vm1387, %v4685, %v4605
      %v4718 = vsel %vm1387, %v4686, %v4607
      %v4719 = vsel %vm1387, %v4687, %v4609
      %v4720 = vsel %vm1387, %v4688, %v4611
      %v4721 = vsel %vm1387, %v4689, %v4613
      %v4722 = vsel %vm1387, %v4690, %v4615
      %v4723 = vsel %vm1387, %v4691, %v4617
      %v4724 = vsel %vm1387, %v4692, %v4619
      %v4725 = vsel %vm1387, %v4693, %v4621
      %v4726 = vsel %vm1387, %v4694, %v4623
      %v4727 = vsel %vm1387, %v4695, %v4625
      %v4728 = vsel %vm1387, %v4696, %v4627
      %v4729 = vsel %vm1387, %v4697, %v4629
      %v4730 = vsel %vm1387, %v4698, %v4631
      %v4731 = vsel %vm1387, %v4699, %v4633
      %v4732 = vsel %vm1387, %v4700, %v4635
      %v4733 = vsel %vm1387, %v4701, %v4637
      %v4734 = vsel %vm1420, %v4702, %v4062
      %v4735 = vsel %vm1420, %v4703, %v4063
      %v4736 = vsel %vm1420, %v4704, %v4064
      %v4737 = vsel %vm1420, %v4705, %v4065
      %v4738 = vsel %vm1420, %v4706, %v4066
      %v4739 = vsel %vm1420, %v4707, %v4067
      %v4740 = vsel %vm1420, %v4708, %v4068
      %v4741 = vsel %vm1420, %v4709, %v4069
      %v4742 = vsel %vm1420, %v4710, %v4070
      %v4743 = vsel %vm1420, %v4711, %v4071
      %v4744 = vsel %vm1420, %v4712, %v4072
      %v4745 = vsel %vm1420, %v4713, %v4073
      %v4746 = vsel %vm1420, %v4714, %v4074
      %v4747 = vsel %vm1420, %v4715, %v4075
      %v4748 = vsel %vm1420, %v4716, %v4076
      %v4749 = vsel %vm1420, %v4717, %v4077
      %v4750 = vsel %vm1420, %v4718, %v4078
      %v4751 = vsel %vm1420, %v4719, %v4079
      %v4752 = vsel %vm1420, %v4720, %v4080
      %v4753 = vsel %vm1420, %v4721, %v4081
      %v4754 = vsel %vm1420, %v4722, %v4082
      %v4755 = vsel %vm1420, %v4723, %v4083
      %v4756 = vsel %vm1420, %v4724, %v4084
      %v4757 = vsel %vm1420, %v4725, %v4085
      %v4758 = vsel %vm1420, %v4726, %v4086
      %v4759 = vsel %vm1420, %v4727, %v4087
      %v4760 = vsel %vm1420, %v4728, %v4088
      %v4761 = vsel %vm1420, %v4729, %v4089
      %v4762 = vsel %vm1420, %v4730, %v4090
      %v4763 = vsel %vm1420, %v4731, %v4091
      %v4764 = vsel %vm1420, %v4732, %v4092
      %v4765 = vsel %vm1420, %v4733, %v4093
      %vm4798 = vcmask 1040384
      %v4799 = vrot.slane %v4734, 7
      %v4800 = vrot.slane %v4735, 7
      %v4801 = vsel %vm4798, %v4799, %v4800
      %v4802 = vrot.slane %v4736, 7
      %v4803 = vrot.slane %v4737, 7
      %v4804 = vsel %vm4798, %v4802, %v4803
      %v4805 = vrot.slane %v4738, 7
      %v4806 = vrot.slane %v4739, 7
      %v4807 = vsel %vm4798, %v4805, %v4806
      %v4808 = vrot.slane %v4740, 7
      %v4809 = vrot.slane %v4741, 7
      %v4810 = vsel %vm4798, %v4808, %v4809
      %v4811 = vrot.slane %v4742, 7
      %v4812 = vrot.slane %v4743, 7
      %v4813 = vsel %vm4798, %v4811, %v4812
      %v4814 = vrot.slane %v4744, 7
      %v4815 = vrot.slane %v4745, 7
      %v4816 = vsel %vm4798, %v4814, %v4815
      %v4817 = vrot.slane %v4746, 7
      %v4818 = vrot.slane %v4747, 7
      %v4819 = vsel %vm4798, %v4817, %v4818
      %v4820 = vrot.slane %v4748, 7
      %v4821 = vrot.slane %v4749, 7
      %v4822 = vsel %vm4798, %v4820, %v4821
      %v4823 = vrot.slane %v4750, 7
      %v4824 = vrot.slane %v4751, 7
      %v4825 = vsel %vm4798, %v4823, %v4824
      %v4826 = vrot.slane %v4752, 7
      %v4827 = vrot.slane %v4753, 7
      %v4828 = vsel %vm4798, %v4826, %v4827
      %v4829 = vrot.slane %v4754, 7
      %v4830 = vrot.slane %v4755, 7
      %v4831 = vsel %vm4798, %v4829, %v4830
      %v4832 = vrot.slane %v4756, 7
      %v4833 = vrot.slane %v4757, 7
      %v4834 = vsel %vm4798, %v4832, %v4833
      %v4835 = vrot.slane %v4758, 7
      %v4836 = vrot.slane %v4759, 7
      %v4837 = vsel %vm4798, %v4835, %v4836
      %v4838 = vrot.slane %v4760, 7
      %v4839 = vrot.slane %v4761, 7
      %v4840 = vsel %vm4798, %v4838, %v4839
      %v4841 = vrot.slane %v4762, 7
      %v4842 = vrot.slane %v4763, 7
      %v4843 = vsel %vm4798, %v4841, %v4842
      %v4844 = vrot.slane %v4764, 7
      %v4845 = vrot.slane %v4765, 7
      %v4846 = vsel %vm4798, %v4844, %v4845
      %v4879 = vsel %vm4798, %v4414, %v4799
      %v4880 = vsel %vm4798, %v4416, %v4802
      %v4881 = vsel %vm4798, %v4418, %v4805
      %v4882 = vsel %vm4798, %v4420, %v4808
      %v4883 = vsel %vm4798, %v4422, %v4811
      %v4884 = vsel %vm4798, %v4424, %v4814
      %v4885 = vsel %vm4798, %v4426, %v4817
      %v4886 = vsel %vm4798, %v4428, %v4820
      %v4887 = vsel %vm4798, %v4430, %v4823
      %v4888 = vsel %vm4798, %v4432, %v4826
      %v4889 = vsel %vm4798, %v4434, %v4829
      %v4890 = vsel %vm4798, %v4436, %v4832
      %v4891 = vsel %vm4798, %v4438, %v4835
      %v4892 = vsel %vm4798, %v4440, %v4838
      %v4893 = vsel %vm4798, %v4442, %v4841
      %v4894 = vsel %vm4798, %v4444, %v4844
      %vm4927 = vcmask 1046528
      %v4928 = vrot.slane %v4414, 1
      %v4929 = vrot.slane %v4415, 1
      %v4930 = vsel %vm4927, %v4928, %v4929
      %v4931 = vrot.slane %v4416, 1
      %v4932 = vrot.slane %v4417, 1
      %v4933 = vsel %vm4927, %v4931, %v4932
      %v4934 = vrot.slane %v4418, 1
      %v4935 = vrot.slane %v4419, 1
      %v4936 = vsel %vm4927, %v4934, %v4935
      %v4937 = vrot.slane %v4420, 1
      %v4938 = vrot.slane %v4421, 1
      %v4939 = vsel %vm4927, %v4937, %v4938
      %v4940 = vrot.slane %v4422, 1
      %v4941 = vrot.slane %v4423, 1
      %v4942 = vsel %vm4927, %v4940, %v4941
      %v4943 = vrot.slane %v4424, 1
      %v4944 = vrot.slane %v4425, 1
      %v4945 = vsel %vm4927, %v4943, %v4944
      %v4946 = vrot.slane %v4426, 1
      %v4947 = vrot.slane %v4427, 1
      %v4948 = vsel %vm4927, %v4946, %v4947
      %v4949 = vrot.slane %v4428, 1
      %v4950 = vrot.slane %v4429, 1
      %v4951 = vsel %vm4927, %v4949, %v4950
      %v4952 = vrot.slane %v4430, 1
      %v4953 = vrot.slane %v4431, 1
      %v4954 = vsel %vm4927, %v4952, %v4953
      %v4955 = vrot.slane %v4432, 1
      %v4956 = vrot.slane %v4433, 1
      %v4957 = vsel %vm4927, %v4955, %v4956
      %v4958 = vrot.slane %v4434, 1
      %v4959 = vrot.slane %v4435, 1
      %v4960 = vsel %vm4927, %v4958, %v4959
      %v4961 = vrot.slane %v4436, 1
      %v4962 = vrot.slane %v4437, 1
      %v4963 = vsel %vm4927, %v4961, %v4962
      %v4964 = vrot.slane %v4438, 1
      %v4965 = vrot.slane %v4439, 1
      %v4966 = vsel %vm4927, %v4964, %v4965
      %v4967 = vrot.slane %v4440, 1
      %v4968 = vrot.slane %v4441, 1
      %v4969 = vsel %vm4927, %v4967, %v4968
      %v4970 = vrot.slane %v4442, 1
      %v4971 = vrot.slane %v4443, 1
      %v4972 = vsel %vm4927, %v4970, %v4971
      %v4973 = vrot.slane %v4444, 1
      %v4974 = vrot.slane %v4445, 1
      %v4975 = vsel %vm4927, %v4973, %v4974
      %v5008 = vsel %vm4927, %v4929, %v4735
      %v5009 = vsel %vm4927, %v4932, %v4737
      %v5010 = vsel %vm4927, %v4935, %v4739
      %v5011 = vsel %vm4927, %v4938, %v4741
      %v5012 = vsel %vm4927, %v4941, %v4743
      %v5013 = vsel %vm4927, %v4944, %v4745
      %v5014 = vsel %vm4927, %v4947, %v4747
      %v5015 = vsel %vm4927, %v4950, %v4749
      %v5016 = vsel %vm4927, %v4953, %v4751
      %v5017 = vsel %vm4927, %v4956, %v4753
      %v5018 = vsel %vm4927, %v4959, %v4755
      %v5019 = vsel %vm4927, %v4962, %v4757
      %v5020 = vsel %vm4927, %v4965, %v4759
      %v5021 = vsel %vm4927, %v4968, %v4761
      %v5022 = vsel %vm4927, %v4971, %v4763
      %v5023 = vsel %vm4927, %v4974, %v4765
      %v5024 = vmul.f32 %v4414, 0.75
      %v5025 = vmul.f32 %v4415, 0.75
      %v5026 = vmul.f32 %v4416, 0.75
      %v5027 = vmul.f32 %v4417, 0.75
      %v5028 = vmul.f32 %v4418, 0.75
      %v5029 = vmul.f32 %v4419, 0.75
      %v5030 = vmul.f32 %v4420, 0.75
      %v5031 = vmul.f32 %v4421, 0.75
      %v5032 = vmul.f32 %v4422, 0.75
      %v5033 = vmul.f32 %v4423, 0.75
      %v5034 = vmul.f32 %v4424, 0.75
      %v5035 = vmul.f32 %v4425, 0.75
      %v5036 = vmul.f32 %v4426, 0.75
      %v5037 = vmul.f32 %v4427, 0.75
      %v5038 = vmul.f32 %v4428, 0.75
      %v5039 = vmul.f32 %v4429, 0.75
      %v5040 = vmul.f32 %v4430, 0.75
      %v5041 = vmul.f32 %v4431, 0.75
      %v5042 = vmul.f32 %v4432, 0.75
      %v5043 = vmul.f32 %v4433, 0.75
      %v5044 = vmul.f32 %v4434, 0.75
      %v5045 = vmul.f32 %v4435, 0.75
      %v5046 = vmul.f32 %v4436, 0.75
      %v5047 = vmul.f32 %v4437, 0.75
      %v5048 = vmul.f32 %v4438, 0.75
      %v5049 = vmul.f32 %v4439, 0.75
      %v5050 = vmul.f32 %v4440, 0.75
      %v5051 = vmul.f32 %v4441, 0.75
      %v5052 = vmul.f32 %v4442, 0.75
      %v5053 = vmul.f32 %v4443, 0.75
      %v5054 = vmul.f32 %v4444, 0.75
      %v5055 = vmul.f32 %v4445, 0.75
      %v5056 = vmul.f32 %v4879, 0.25
      %v5057 = vmul.f32 %v4801, 0.25
      %v5058 = vmul.f32 %v4880, 0.25
      %v5059 = vmul.f32 %v4804, 0.25
      %v5060 = vmul.f32 %v4881, 0.25
      %v5061 = vmul.f32 %v4807, 0.25
      %v5062 = vmul.f32 %v4882, 0.25
      %v5063 = vmul.f32 %v4810, 0.25
      %v5064 = vmul.f32 %v4883, 0.25
      %v5065 = vmul.f32 %v4813, 0.25
      %v5066 = vmul.f32 %v4884, 0.25
      %v5067 = vmul.f32 %v4816, 0.25
      %v5068 = vmul.f32 %v4885, 0.25
      %v5069 = vmul.f32 %v4819, 0.25
      %v5070 = vmul.f32 %v4886, 0.25
      %v5071 = vmul.f32 %v4822, 0.25
      %v5072 = vmul.f32 %v4887, 0.25
      %v5073 = vmul.f32 %v4825, 0.25
      %v5074 = vmul.f32 %v4888, 0.25
      %v5075 = vmul.f32 %v4828, 0.25
      %v5076 = vmul.f32 %v4889, 0.25
      %v5077 = vmul.f32 %v4831, 0.25
      %v5078 = vmul.f32 %v4890, 0.25
      %v5079 = vmul.f32 %v4834, 0.25
      %v5080 = vmul.f32 %v4891, 0.25
      %v5081 = vmul.f32 %v4837, 0.25
      %v5082 = vmul.f32 %v4892, 0.25
      %v5083 = vmul.f32 %v4840, 0.25
      %v5084 = vmul.f32 %v4893, 0.25
      %v5085 = vmul.f32 %v4843, 0.25
      %v5086 = vmul.f32 %v4894, 0.25
      %v5087 = vmul.f32 %v4846, 0.25
      %v5088 = vadd.f32 %v5024, %v5056
      %v5089 = vadd.f32 %v5025, %v5057
      %v5090 = vadd.f32 %v5026, %v5058
      %v5091 = vadd.f32 %v5027, %v5059
      %v5092 = vadd.f32 %v5028, %v5060
      %v5093 = vadd.f32 %v5029, %v5061
      %v5094 = vadd.f32 %v5030, %v5062
      %v5095 = vadd.f32 %v5031, %v5063
      %v5096 = vadd.f32 %v5032, %v5064
      %v5097 = vadd.f32 %v5033, %v5065
      %v5098 = vadd.f32 %v5034, %v5066
      %v5099 = vadd.f32 %v5035, %v5067
      %v5100 = vadd.f32 %v5036, %v5068
      %v5101 = vadd.f32 %v5037, %v5069
      %v5102 = vadd.f32 %v5038, %v5070
      %v5103 = vadd.f32 %v5039, %v5071
      %v5104 = vadd.f32 %v5040, %v5072
      %v5105 = vadd.f32 %v5041, %v5073
      %v5106 = vadd.f32 %v5042, %v5074
      %v5107 = vadd.f32 %v5043, %v5075
      %v5108 = vadd.f32 %v5044, %v5076
      %v5109 = vadd.f32 %v5045, %v5077
      %v5110 = vadd.f32 %v5046, %v5078
      %v5111 = vadd.f32 %v5047, %v5079
      %v5112 = vadd.f32 %v5048, %v5080
      %v5113 = vadd.f32 %v5049, %v5081
      %v5114 = vadd.f32 %v5050, %v5082
      %v5115 = vadd.f32 %v5051, %v5083
      %v5116 = vadd.f32 %v5052, %v5084
      %v5117 = vadd.f32 %v5053, %v5085
      %v5118 = vadd.f32 %v5054, %v5086
      %v5119 = vadd.f32 %v5055, %v5087
      %v5120 = vmul.f32 %v4734, 0.25
      %v5121 = vmul.f32 %v4735, 0.25
      %v5122 = vmul.f32 %v4736, 0.25
      %v5123 = vmul.f32 %v4737, 0.25
      %v5124 = vmul.f32 %v4738, 0.25
      %v5125 = vmul.f32 %v4739, 0.25
      %v5126 = vmul.f32 %v4740, 0.25
      %v5127 = vmul.f32 %v4741, 0.25
      %v5128 = vmul.f32 %v4742, 0.25
      %v5129 = vmul.f32 %v4743, 0.25
      %v5130 = vmul.f32 %v4744, 0.25
      %v5131 = vmul.f32 %v4745, 0.25
      %v5132 = vmul.f32 %v4746, 0.25
      %v5133 = vmul.f32 %v4747, 0.25
      %v5134 = vmul.f32 %v4748, 0.25
      %v5135 = vmul.f32 %v4749, 0.25
      %v5136 = vmul.f32 %v4750, 0.25
      %v5137 = vmul.f32 %v4751, 0.25
      %v5138 = vmul.f32 %v4752, 0.25
      %v5139 = vmul.f32 %v4753, 0.25
      %v5140 = vmul.f32 %v4754, 0.25
      %v5141 = vmul.f32 %v4755, 0.25
      %v5142 = vmul.f32 %v4756, 0.25
      %v5143 = vmul.f32 %v4757, 0.25
      %v5144 = vmul.f32 %v4758, 0.25
      %v5145 = vmul.f32 %v4759, 0.25
      %v5146 = vmul.f32 %v4760, 0.25
      %v5147 = vmul.f32 %v4761, 0.25
      %v5148 = vmul.f32 %v4762, 0.25
      %v5149 = vmul.f32 %v4763, 0.25
      %v5150 = vmul.f32 %v4764, 0.25
      %v5151 = vmul.f32 %v4765, 0.25
      %v5152 = vadd.f32 %v5024, %v5120
      %v5153 = vadd.f32 %v5025, %v5121
      %v5154 = vadd.f32 %v5026, %v5122
      %v5155 = vadd.f32 %v5027, %v5123
      %v5156 = vadd.f32 %v5028, %v5124
      %v5157 = vadd.f32 %v5029, %v5125
      %v5158 = vadd.f32 %v5030, %v5126
      %v5159 = vadd.f32 %v5031, %v5127
      %v5160 = vadd.f32 %v5032, %v5128
      %v5161 = vadd.f32 %v5033, %v5129
      %v5162 = vadd.f32 %v5034, %v5130
      %v5163 = vadd.f32 %v5035, %v5131
      %v5164 = vadd.f32 %v5036, %v5132
      %v5165 = vadd.f32 %v5037, %v5133
      %v5166 = vadd.f32 %v5038, %v5134
      %v5167 = vadd.f32 %v5039, %v5135
      %v5168 = vadd.f32 %v5040, %v5136
      %v5169 = vadd.f32 %v5041, %v5137
      %v5170 = vadd.f32 %v5042, %v5138
      %v5171 = vadd.f32 %v5043, %v5139
      %v5172 = vadd.f32 %v5044, %v5140
      %v5173 = vadd.f32 %v5045, %v5141
      %v5174 = vadd.f32 %v5046, %v5142
      %v5175 = vadd.f32 %v5047, %v5143
      %v5176 = vadd.f32 %v5048, %v5144
      %v5177 = vadd.f32 %v5049, %v5145
      %v5178 = vadd.f32 %v5050, %v5146
      %v5179 = vadd.f32 %v5051, %v5147
      %v5180 = vadd.f32 %v5052, %v5148
      %v5181 = vadd.f32 %v5053, %v5149
      %v5182 = vadd.f32 %v5054, %v5150
      %v5183 = vadd.f32 %v5055, %v5151
      %v5184 = vmul.f32 %v4414, 0.25
      %v5185 = vmul.f32 %v4415, 0.25
      %v5186 = vmul.f32 %v4416, 0.25
      %v5187 = vmul.f32 %v4417, 0.25
      %v5188 = vmul.f32 %v4418, 0.25
      %v5189 = vmul.f32 %v4419, 0.25
      %v5190 = vmul.f32 %v4420, 0.25
      %v5191 = vmul.f32 %v4421, 0.25
      %v5192 = vmul.f32 %v4422, 0.25
      %v5193 = vmul.f32 %v4423, 0.25
      %v5194 = vmul.f32 %v4424, 0.25
      %v5195 = vmul.f32 %v4425, 0.25
      %v5196 = vmul.f32 %v4426, 0.25
      %v5197 = vmul.f32 %v4427, 0.25
      %v5198 = vmul.f32 %v4428, 0.25
      %v5199 = vmul.f32 %v4429, 0.25
      %v5200 = vmul.f32 %v4430, 0.25
      %v5201 = vmul.f32 %v4431, 0.25
      %v5202 = vmul.f32 %v4432, 0.25
      %v5203 = vmul.f32 %v4433, 0.25
      %v5204 = vmul.f32 %v4434, 0.25
      %v5205 = vmul.f32 %v4435, 0.25
      %v5206 = vmul.f32 %v4436, 0.25
      %v5207 = vmul.f32 %v4437, 0.25
      %v5208 = vmul.f32 %v4438, 0.25
      %v5209 = vmul.f32 %v4439, 0.25
      %v5210 = vmul.f32 %v4440, 0.25
      %v5211 = vmul.f32 %v4441, 0.25
      %v5212 = vmul.f32 %v4442, 0.25
      %v5213 = vmul.f32 %v4443, 0.25
      %v5214 = vmul.f32 %v4444, 0.25
      %v5215 = vmul.f32 %v4445, 0.25
      %v5216 = vmul.f32 %v4734, 0.75
      %v5217 = vmul.f32 %v4735, 0.75
      %v5218 = vmul.f32 %v4736, 0.75
      %v5219 = vmul.f32 %v4737, 0.75
      %v5220 = vmul.f32 %v4738, 0.75
      %v5221 = vmul.f32 %v4739, 0.75
      %v5222 = vmul.f32 %v4740, 0.75
      %v5223 = vmul.f32 %v4741, 0.75
      %v5224 = vmul.f32 %v4742, 0.75
      %v5225 = vmul.f32 %v4743, 0.75
      %v5226 = vmul.f32 %v4744, 0.75
      %v5227 = vmul.f32 %v4745, 0.75
      %v5228 = vmul.f32 %v4746, 0.75
      %v5229 = vmul.f32 %v4747, 0.75
      %v5230 = vmul.f32 %v4748, 0.75
      %v5231 = vmul.f32 %v4749, 0.75
      %v5232 = vmul.f32 %v4750, 0.75
      %v5233 = vmul.f32 %v4751, 0.75
      %v5234 = vmul.f32 %v4752, 0.75
      %v5235 = vmul.f32 %v4753, 0.75
      %v5236 = vmul.f32 %v4754, 0.75
      %v5237 = vmul.f32 %v4755, 0.75
      %v5238 = vmul.f32 %v4756, 0.75
      %v5239 = vmul.f32 %v4757, 0.75
      %v5240 = vmul.f32 %v4758, 0.75
      %v5241 = vmul.f32 %v4759, 0.75
      %v5242 = vmul.f32 %v4760, 0.75
      %v5243 = vmul.f32 %v4761, 0.75
      %v5244 = vmul.f32 %v4762, 0.75
      %v5245 = vmul.f32 %v4763, 0.75
      %v5246 = vmul.f32 %v4764, 0.75
      %v5247 = vmul.f32 %v4765, 0.75
      %v5248 = vadd.f32 %v5184, %v5216
      %v5249 = vadd.f32 %v5185, %v5217
      %v5250 = vadd.f32 %v5186, %v5218
      %v5251 = vadd.f32 %v5187, %v5219
      %v5252 = vadd.f32 %v5188, %v5220
      %v5253 = vadd.f32 %v5189, %v5221
      %v5254 = vadd.f32 %v5190, %v5222
      %v5255 = vadd.f32 %v5191, %v5223
      %v5256 = vadd.f32 %v5192, %v5224
      %v5257 = vadd.f32 %v5193, %v5225
      %v5258 = vadd.f32 %v5194, %v5226
      %v5259 = vadd.f32 %v5195, %v5227
      %v5260 = vadd.f32 %v5196, %v5228
      %v5261 = vadd.f32 %v5197, %v5229
      %v5262 = vadd.f32 %v5198, %v5230
      %v5263 = vadd.f32 %v5199, %v5231
      %v5264 = vadd.f32 %v5200, %v5232
      %v5265 = vadd.f32 %v5201, %v5233
      %v5266 = vadd.f32 %v5202, %v5234
      %v5267 = vadd.f32 %v5203, %v5235
      %v5268 = vadd.f32 %v5204, %v5236
      %v5269 = vadd.f32 %v5205, %v5237
      %v5270 = vadd.f32 %v5206, %v5238
      %v5271 = vadd.f32 %v5207, %v5239
      %v5272 = vadd.f32 %v5208, %v5240
      %v5273 = vadd.f32 %v5209, %v5241
      %v5274 = vadd.f32 %v5210, %v5242
      %v5275 = vadd.f32 %v5211, %v5243
      %v5276 = vadd.f32 %v5212, %v5244
      %v5277 = vadd.f32 %v5213, %v5245
      %v5278 = vadd.f32 %v5214, %v5246
      %v5279 = vadd.f32 %v5215, %v5247
      %v5280 = vmul.f32 %v4930, 0.25
      %v5281 = vmul.f32 %v5008, 0.25
      %v5282 = vmul.f32 %v4933, 0.25
      %v5283 = vmul.f32 %v5009, 0.25
      %v5284 = vmul.f32 %v4936, 0.25
      %v5285 = vmul.f32 %v5010, 0.25
      %v5286 = vmul.f32 %v4939, 0.25
      %v5287 = vmul.f32 %v5011, 0.25
      %v5288 = vmul.f32 %v4942, 0.25
      %v5289 = vmul.f32 %v5012, 0.25
      %v5290 = vmul.f32 %v4945, 0.25
      %v5291 = vmul.f32 %v5013, 0.25
      %v5292 = vmul.f32 %v4948, 0.25
      %v5293 = vmul.f32 %v5014, 0.25
      %v5294 = vmul.f32 %v4951, 0.25
      %v5295 = vmul.f32 %v5015, 0.25
      %v5296 = vmul.f32 %v4954, 0.25
      %v5297 = vmul.f32 %v5016, 0.25
      %v5298 = vmul.f32 %v4957, 0.25
      %v5299 = vmul.f32 %v5017, 0.25
      %v5300 = vmul.f32 %v4960, 0.25
      %v5301 = vmul.f32 %v5018, 0.25
      %v5302 = vmul.f32 %v4963, 0.25
      %v5303 = vmul.f32 %v5019, 0.25
      %v5304 = vmul.f32 %v4966, 0.25
      %v5305 = vmul.f32 %v5020, 0.25
      %v5306 = vmul.f32 %v4969, 0.25
      %v5307 = vmul.f32 %v5021, 0.25
      %v5308 = vmul.f32 %v4972, 0.25
      %v5309 = vmul.f32 %v5022, 0.25
      %v5310 = vmul.f32 %v4975, 0.25
      %v5311 = vmul.f32 %v5023, 0.25
      %v5312 = vadd.f32 %v5216, %v5280
      %v5313 = vadd.f32 %v5217, %v5281
      %v5314 = vadd.f32 %v5218, %v5282
      %v5315 = vadd.f32 %v5219, %v5283
      %v5316 = vadd.f32 %v5220, %v5284
      %v5317 = vadd.f32 %v5221, %v5285
      %v5318 = vadd.f32 %v5222, %v5286
      %v5319 = vadd.f32 %v5223, %v5287
      %v5320 = vadd.f32 %v5224, %v5288
      %v5321 = vadd.f32 %v5225, %v5289
      %v5322 = vadd.f32 %v5226, %v5290
      %v5323 = vadd.f32 %v5227, %v5291
      %v5324 = vadd.f32 %v5228, %v5292
      %v5325 = vadd.f32 %v5229, %v5293
      %v5326 = vadd.f32 %v5230, %v5294
      %v5327 = vadd.f32 %v5231, %v5295
      %v5328 = vadd.f32 %v5232, %v5296
      %v5329 = vadd.f32 %v5233, %v5297
      %v5330 = vadd.f32 %v5234, %v5298
      %v5331 = vadd.f32 %v5235, %v5299
      %v5332 = vadd.f32 %v5236, %v5300
      %v5333 = vadd.f32 %v5237, %v5301
      %v5334 = vadd.f32 %v5238, %v5302
      %v5335 = vadd.f32 %v5239, %v5303
      %v5336 = vadd.f32 %v5240, %v5304
      %v5337 = vadd.f32 %v5241, %v5305
      %v5338 = vadd.f32 %v5242, %v5306
      %v5339 = vadd.f32 %v5243, %v5307
      %v5340 = vadd.f32 %v5244, %v5308
      %v5341 = vadd.f32 %v5245, %v5309
      %v5342 = vadd.f32 %v5246, %v5310
      %v5343 = vadd.f32 %v5247, %v5311
      %5344 = vst [vmem:[%s278] sm:$0xff] %v5088
      %5345 = vst [vmem:[%s278 + $0x8] sm:$0xff] %v5152
      %5346 = vst [vmem:[%s278 + $0x10] sm:$0xff] %v5248
      %5347 = vst [vmem:[%s278 + $0x18] sm:$0xff] %v5312
      %5348 = vst [vmem:[%s278 + $0x20] sm:$0xff] %v5089
      %5349 = vst [vmem:[%s278 + $0x28] sm:$0xff] %v5153
      %5350 = vst [vmem:[%s278 + $0x30] sm:$0xff] %v5249
      %5351 = vst [vmem:[%s278 + $0x38] sm:$0xff] %v5313
      %5352 = vst [vmem:[%s278 + $0x40] sm:$0xff] %v5090
      %5353 = vst [vmem:[%s278 + $0x48] sm:$0xff] %v5154
      %5354 = vst [vmem:[%s278 + $0x50] sm:$0xff] %v5250
      %5355 = vst [vmem:[%s278 + $0x58] sm:$0xff] %v5314
      %5356 = vst [vmem:[%s278 + $0x60] sm:$0xff] %v5091
      %5357 = vst [vmem:[%s278 + $0x68] sm:$0xff] %v5155
      %5358 = vst [vmem:[%s278 + $0x70] sm:$0xff] %v5251
      %5359 = vst [vmem:[%s278 + $0x78] sm:$0xff] %v5315
      %5360 = vst [vmem:[%s278 + $0x80] sm:$0xff] %v5092
      %5361 = vst [vmem:[%s278 + $0x88] sm:$0xff] %v5156
      %5362 = vst [vmem:[%s278 + $0x90] sm:$0xff] %v5252
      %5363 = vst [vmem:[%s278 + $0x98] sm:$0xff] %v5316
      %5364 = vst [vmem:[%s278 + $0xa0] sm:$0xff] %v5093
      %5365 = vst [vmem:[%s278 + $0xa8] sm:$0xff] %v5157
      %5366 = vst [vmem:[%s278 + $0xb0] sm:$0xff] %v5253
      %5367 = vst [vmem:[%s278 + $0xb8] sm:$0xff] %v5317
      %5368 = vst [vmem:[%s278 + $0xc0] sm:$0xff] %v5094
      %5369 = vst [vmem:[%s278 + $0xc8] sm:$0xff] %v5158
      %5370 = vst [vmem:[%s278 + $0xd0] sm:$0xff] %v5254
      %5371 = vst [vmem:[%s278 + $0xd8] sm:$0xff] %v5318
      %5372 = vst [vmem:[%s278 + $0xe0] sm:$0xff] %v5095
      %5373 = vst [vmem:[%s278 + $0xe8] sm:$0xff] %v5159
      %5374 = vst [vmem:[%s278 + $0xf0] sm:$0xff] %v5255
      %5375 = vst [vmem:[%s278 + $0xf8] sm:$0xff] %v5319
      %5376 = vst [vmem:[%s278 + $0x100] sm:$0xff] %v5096
      %5377 = vst [vmem:[%s278 + $0x108] sm:$0xff] %v5160
      %5378 = vst [vmem:[%s278 + $0x110] sm:$0xff] %v5256
      %5379 = vst [vmem:[%s278 + $0x118] sm:$0xff] %v5320
      %5380 = vst [vmem:[%s278 + $0x120] sm:$0xff] %v5097
      %5381 = vst [vmem:[%s278 + $0x128] sm:$0xff] %v5161
      %5382 = vst [vmem:[%s278 + $0x130] sm:$0xff] %v5257
      %5383 = vst [vmem:[%s278 + $0x138] sm:$0xff] %v5321
      %5384 = vst [vmem:[%s278 + $0x140] sm:$0xff] %v5098
      %5385 = vst [vmem:[%s278 + $0x148] sm:$0xff] %v5162
      %5386 = vst [vmem:[%s278 + $0x150] sm:$0xff] %v5258
      %5387 = vst [vmem:[%s278 + $0x158] sm:$0xff] %v5322
      %5388 = vst [vmem:[%s278 + $0x160] sm:$0xff] %v5099
      %5389 = vst [vmem:[%s278 + $0x168] sm:$0xff] %v5163
      %5390 = vst [vmem:[%s278 + $0x170] sm:$0xff] %v5259
      %5391 = vst [vmem:[%s278 + $0x178] sm:$0xff] %v5323
      %5392 = vst [vmem:[%s278 + $0x180] sm:$0xff] %v5100
      %5393 = vst [vmem:[%s278 + $0x188] sm:$0xff] %v5164
      %5394 = vst [vmem:[%s278 + $0x190] sm:$0xff] %v5260
      %5395 = vst [vmem:[%s278 + $0x198] sm:$0xff] %v5324
      %5396 = vst [vmem:[%s278 + $0x1a0] sm:$0xff] %v5101
      %5397 = vst [vmem:[%s278 + $0x1a8] sm:$0xff] %v5165
      %5398 = vst [vmem:[%s278 + $0x1b0] sm:$0xff] %v5261
      %5399 = vst [vmem:[%s278 + $0x1b8] sm:$0xff] %v5325
      %5400 = vst [vmem:[%s278 + $0x1c0] sm:$0xff] %v5102
      %5401 = vst [vmem:[%s278 + $0x1c8] sm:$0xff] %v5166
      %5402 = vst [vmem:[%s278 + $0x1d0] sm:$0xff] %v5262
      %5403 = vst [vmem:[%s278 + $0x1d8] sm:$0xff] %v5326
      %5404 = vst [vmem:[%s278 + $0x1e0] sm:$0xff] %v5103
      %5405 = vst [vmem:[%s278 + $0x1e8] sm:$0xff] %v5167
      %5406 = vst [vmem:[%s278 + $0x1f0] sm:$0xff] %v5263
      %5407 = vst [vmem:[%s278 + $0x1f8] sm:$0xff] %v5327
      %5408 = vst [vmem:[%s278 + $0x200] sm:$0xff] %v5104
      %5409 = vst [vmem:[%s278 + $0x208] sm:$0xff] %v5168
      %5410 = vst [vmem:[%s278 + $0x210] sm:$0xff] %v5264
      %5411 = vst [vmem:[%s278 + $0x218] sm:$0xff] %v5328
      %5412 = vst [vmem:[%s278 + $0x220] sm:$0xff] %v5105
      %5413 = vst [vmem:[%s278 + $0x228] sm:$0xff] %v5169
      %5414 = vst [vmem:[%s278 + $0x230] sm:$0xff] %v5265
      %5415 = vst [vmem:[%s278 + $0x238] sm:$0xff] %v5329
      %5416 = vst [vmem:[%s278 + $0x240] sm:$0xff] %v5106
      %5417 = vst [vmem:[%s278 + $0x248] sm:$0xff] %v5170
      %5418 = vst [vmem:[%s278 + $0x250] sm:$0xff] %v5266
      %5419 = vst [vmem:[%s278 + $0x258] sm:$0xff] %v5330
      %5420 = vst [vmem:[%s278 + $0x260] sm:$0xff] %v5107
      %5421 = vst [vmem:[%s278 + $0x268] sm:$0xff] %v5171
      %5422 = vst [vmem:[%s278 + $0x270] sm:$0xff] %v5267
      %5423 = vst [vmem:[%s278 + $0x278] sm:$0xff] %v5331
      %5424 = vst [vmem:[%s278 + $0x280] sm:$0xff] %v5108
      %5425 = vst [vmem:[%s278 + $0x288] sm:$0xff] %v5172
      %5426 = vst [vmem:[%s278 + $0x290] sm:$0xff] %v5268
      %5427 = vst [vmem:[%s278 + $0x298] sm:$0xff] %v5332
      %5428 = vst [vmem:[%s278 + $0x2a0] sm:$0xff] %v5109
      %5429 = vst [vmem:[%s278 + $0x2a8] sm:$0xff] %v5173
      %5430 = vst [vmem:[%s278 + $0x2b0] sm:$0xff] %v5269
      %5431 = vst [vmem:[%s278 + $0x2b8] sm:$0xff] %v5333
      %5432 = vst [vmem:[%s278 + $0x2c0] sm:$0xff] %v5110
      %5433 = vst [vmem:[%s278 + $0x2c8] sm:$0xff] %v5174
      %5434 = vst [vmem:[%s278 + $0x2d0] sm:$0xff] %v5270
      %5435 = vst [vmem:[%s278 + $0x2d8] sm:$0xff] %v5334
      %5436 = vst [vmem:[%s278 + $0x2e0] sm:$0xff] %v5111
      %5437 = vst [vmem:[%s278 + $0x2e8] sm:$0xff] %v5175
      %5438 = vst [vmem:[%s278 + $0x2f0] sm:$0xff] %v5271
      %5439 = vst [vmem:[%s278 + $0x2f8] sm:$0xff] %v5335
      %5440 = vst [vmem:[%s278 + $0x300] sm:$0xff] %v5112
      %5441 = vst [vmem:[%s278 + $0x308] sm:$0xff] %v5176
      %5442 = vst [vmem:[%s278 + $0x310] sm:$0xff] %v5272
      %5443 = vst [vmem:[%s278 + $0x318] sm:$0xff] %v5336
      %5444 = vst [vmem:[%s278 + $0x320] sm:$0xff] %v5113
      %5445 = vst [vmem:[%s278 + $0x328] sm:$0xff] %v5177
      %5446 = vst [vmem:[%s278 + $0x330] sm:$0xff] %v5273
      %5447 = vst [vmem:[%s278 + $0x338] sm:$0xff] %v5337
      %5448 = vst [vmem:[%s278 + $0x340] sm:$0xff] %v5114
      %5449 = vst [vmem:[%s278 + $0x348] sm:$0xff] %v5178
      %5450 = vst [vmem:[%s278 + $0x350] sm:$0xff] %v5274
      %5451 = vst [vmem:[%s278 + $0x358] sm:$0xff] %v5338
      %5452 = vst [vmem:[%s278 + $0x360] sm:$0xff] %v5115
      %5453 = vst [vmem:[%s278 + $0x368] sm:$0xff] %v5179
      %5454 = vst [vmem:[%s278 + $0x370] sm:$0xff] %v5275
      %5455 = vst [vmem:[%s278 + $0x378] sm:$0xff] %v5339
      %5456 = vst [vmem:[%s278 + $0x380] sm:$0xff] %v5116
      %5457 = vst [vmem:[%s278 + $0x388] sm:$0xff] %v5180
      %5458 = vst [vmem:[%s278 + $0x390] sm:$0xff] %v5276
      %5459 = vst [vmem:[%s278 + $0x398] sm:$0xff] %v5340
      %5460 = vst [vmem:[%s278 + $0x3a0] sm:$0xff] %v5117
      %5461 = vst [vmem:[%s278 + $0x3a8] sm:$0xff] %v5181
      %5462 = vst [vmem:[%s278 + $0x3b0] sm:$0xff] %v5277
      %5463 = vst [vmem:[%s278 + $0x3b8] sm:$0xff] %v5341
      %5464 = vst [vmem:[%s278 + $0x3c0] sm:$0xff] %v5118
      %5465 = vst [vmem:[%s278 + $0x3c8] sm:$0xff] %v5182
      %5466 = vst [vmem:[%s278 + $0x3d0] sm:$0xff] %v5278
      %5467 = vst [vmem:[%s278 + $0x3d8] sm:$0xff] %v5342
      %5468 = vst [vmem:[%s278 + $0x3e0] sm:$0xff] %v5119
      %5469 = vst [vmem:[%s278 + $0x3e8] sm:$0xff] %v5183
      %5470 = vst [vmem:[%s278 + $0x3f0] sm:$0xff] %v5279
      %5471 = vst [vmem:[%s278 + $0x3f8] sm:$0xff] %v5343
      %p5472 = scmp.lt.s32.totalorder %s18, 1
      %s5473 = scalar_select %p5472, %s18, 1
      %s5474 = smul.addr %s5473, 128
      %s5475 = smul.addr %s5474, 8
      %s5476 = scalar_lea.vmem %s7, %s5475
      // Predicated region
      $region49: #{pvnet_head_forward.1} parent=47 // pred_check
        %p5477 = pneg %p188
      $region50: #{pvnet_head_forward.1} parent=47 // pred_check_branch
        %5479 = sbr.rel (%p5477) target = $region52
      $region51: #{pvnet_head_forward.1} parent=47 // pred_region
        _
      $region52: #{pvnet_head_forward.1} parent=47 // pred_fallthru
        _
    $region48: #{pvnet_head_forward.1} parent=5 // pred_fallthru
      _
    %p5480 = scmp.le.s32.totalorder 2, %s13
    // Predicated region
    $region53: #{pvnet_head_forward.1} parent=5 // pred_check
      %p5481 = pneg %p5480
    $region54: #{pvnet_head_forward.1} parent=5 // pred_check_branch
      %5483 = sbr.rel (%p5481) target = $region56
    $region55: #{pvnet_head_forward.1} parent=5 // pred_region
      %s5484 = ssub.s32 %s13, 2
      // Predicated region
      $region57: #{pvnet_head_forward.1} parent=55 // pred_check
        %p5485 = pneg %p194
      $region58: #{pvnet_head_forward.1} parent=55 // pred_check_branch
        %5487 = sbr.rel (%p5485) target = $region60
      $region59: #{pvnet_head_forward.1} parent=55 // pred_region
        %p5488 = scmp.lt.s32.totalorder %s19, 1
        %s5489 = scalar_select %p5488, %s19, 1
        %s5490 = smul.addr %s5489, 128
        %s5491 = smul.addr %s5490, 8
        %s5492 = scalar_lea.vmem %s7, %s5491
      $region60: #{pvnet_head_forward.1} parent=55 // pred_fallthru
        _
    $region56: #{pvnet_head_forward.1} parent=5 // pred_fallthru
      _
  $region6: #{pvnet_head_forward.1} parent=0 // loop_footer
    %s17 = sadd.s32 1, %s13
  $region7: #{pvnet_head_forward.1} parent=0 // loop_footer_branch
    %12 = sbr.rel target = $region3
  $region8: #{pvnet_head_forward.1} parent=0 // loop_exit
    _

</llo_original>
